<compile_context>
chip_gen: v5e
topology: v5e:2x2
jax: 0.10.0
libtpu: 0.0.40
codegen_flags: <defaults>
</compile_context>

<pallas_src>
import functools
from typing import NamedTuple, Tuple

import jax
import jax.numpy as jnp
from jax.experimental import pallas as pl
from jax.experimental.pallas import tpu as pltpu

K = 5             # module default k
KPAD = 128        # lane-dense padding of the per-row top-k outputs
PROJ_EPS = 1e-2   # Poincare-ball projection slack (DGM reference impl)
ACOSH_EPS = 1e-6
TEMP_INIT = 1.0   # nn.Parameter(torch.tensor(1.0)) -- deterministic init
_TM = 128         # row tile (try 256 on v6e: 128 MiB VMEM; keep 128 on v7x)

# int32-wrapped hash constants (values chosen so Python literals fit int32).
_HASH_ROW_C = -1640531527     # 0x9E3779B9
_HASH_COL_C = 0x7FEB352D
_FMIX_C1 = -2048144789        # 0x85EBCA6B
_FMIX_C2 = -1028477387        # 0xC2B2AE35


class SparseAdj(NamedTuple):
    """COO stand-in for torch_sparse.SparseTensor(row, col, sparse_sizes)."""
    row: jax.Array
    col: jax.Array
    sparse_sizes: Tuple[int, int]


def _edge_gumbel_topk_kernel(seed_ref, temp_ref, a_ref, b_ref,
                             vals_ref, idx_ref, *, k):
    """One (TM, N) row-slab: hyperbolic dists + gumbel softmax + fused top-k."""
    i = pl.program_id(0)
    tm = a_ref.shape[0]
    n = b_ref.shape[0]
    kpad = vals_ref.shape[1]

    # --- scaled pairwise distances in a single augmented MXU contraction:
    #     dot(A_i, B_j) = 2 * inv_i * inv_j * ||xp_i - xp_j||^2
    pq_s = jax.lax.dot_general(
        a_ref[...], b_ref[...],
        dimension_numbers=(((1,), (1,)), ((), ())),
        preferred_element_type=jnp.float32)                          # (tm, n)

    # --- squared Poincare distance, cancellation-free:
    #     arg = 1 + t,  t = 1e-6 + 2*pq*inv_r*inv_c
    #     acosh(1+t) = log1p(t + sqrt(t*(t+2)))
    t = ACOSH_EPS + jnp.maximum(pq_s, 0.0)
    acosh = jnp.log1p(t + jnp.sqrt(t * (t + 2.0)))
    dist = acosh * acosh

    # --- gumbel-perturbed logits (temperature clamped to [2, 5]).
    temp = jnp.clip(temp_ref[0], 2.0, 5.0)
    logits = dist * (-jnp.exp(temp))

    # --- in-kernel counter-based uniform noise (no N^2 HBM read, no HW PRNG):
    #     h = fmix32(row*C1 + col*C2 + seed)  (int32, wrapping arithmetic)
    col_ids = jax.lax.broadcasted_iota(jnp.int32, (tm, n), 1)
    row_ids = jax.lax.broadcasted_iota(jnp.int32, (tm, n), 0) + i * tm
    h = row_ids * _HASH_ROW_C + col_ids * _HASH_COL_C + seed_ref[0]
    h = h ^ jax.lax.shift_right_logical(h, 16)
    h = h * _FMIX_C1
    h = h ^ jax.lax.shift_right_logical(h, 13)
    h = h * _FMIX_C2
    h = h ^ jax.lax.shift_right_logical(h, 16)
    u24 = jax.lax.shift_right_logical(h, 8)                          # [0, 2^24)
    u = (u24.astype(jnp.float32) + 0.5) * (1.0 / (1 << 24))          # (0, 1)
    gumbel = -jnp.log(-jnp.log(u))

    z = (logits + gumbel) * (1.0 / temp)                             # (tm, n)

    # --- row softmax statistics (softmax is monotone per row, so only the max
    #     and the sum are needed; dense y_soft is never materialized).
    zmax = jnp.max(z, axis=1, keepdims=True)                         # (tm, 1)
    row_sum = jnp.sum(jnp.exp(z - zmax), axis=1, keepdims=True)      # (tm, 1)
    inv_sum = 1.0 / row_sum       # exact divide over (tm,1): cheap, torch-parity

    # --- fused top-k: k passes of row-max / first-occurrence argmin / mask.
    out_cols = jax.lax.broadcasted_iota(jnp.int32, (tm, kpad), 1)
    work = z
    vals_out = jnp.zeros((tm, kpad), jnp.float32)
    idx_out = jnp.zeros((tm, kpad), jnp.int32)
    m = zmax                                   # j == 0 reuses the softmax max
    for j in range(k):
        if j > 0:
            m = jnp.max(work, axis=1, keepdims=True)                 # (tm, 1)
        hit = work == m
        # first (lowest-index) occurrence of the max, like torch.topk
        idx_i = jnp.min(jnp.where(hit, col_ids, n), axis=1, keepdims=True)
        val_j = jnp.exp(m - zmax) * inv_sum                          # (tm, 1)
        vals_out = jnp.where(out_cols == j, val_j, vals_out)
        idx_out = jnp.where(out_cols == j, idx_i, idx_out)
        if j + 1 < k:
            # masks every exact tie of the max (ties ~never happen with
            # continuous Gumbel noise); avoids a second compare+select pass.
            work = jnp.where(hit, -jnp.inf, work)

    vals_ref[...] = vals_out
    idx_ref[...] = idx_out


def gumbel_topk_edges(x, seed_arr, temperature, k=K):
    """Returns (top-k softmax values, top-k indices), each of shape (N, k)."""
    N, D = x.shape
    assert k <= KPAD
    xf = x.astype(jnp.float32)

    # --- Poincare projection + augmentation, hoisted out of the kernel (O(N*D),
    #     done once instead of once per grid step).
    nrm2 = jnp.sum(xf * xf, axis=-1, keepdims=True)
    nrm = jnp.maximum(jnp.sqrt(nrm2) - 1.0, 0.0) + 1.0               # relu(|x|-1)+1
    xp = xf / (nrm * (1.0 + PROJ_EPS))
    n2 = jnp.sum(xp * xp, axis=-1, keepdims=True)                    # (N, 1)
    inv = 1.0 / (1.0 - n2)                                           # (N, 1), > 0
    ones = jnp.ones((N, 1), jnp.float32)
    # dot(A_i, B_j) == 2*inv_i*inv_j*||xp_i - xp_j||^2  (D -> D+2 contraction).
    a_aug = jnp.concatenate([-2.0 * xp, n2, ones], axis=1) * (2.0 * inv)  # (N, D+2)
    b_aug = jnp.concatenate([xp, ones, n2], axis=1) * inv                 # (N, D+2)

    tm = min(_TM, N)
    # TODO(synk): pad N to a multiple of the row tile for general N.
    assert N % tm == 0, "N must be a multiple of the row tile"
    temp_arr = jnp.asarray([temperature], dtype=jnp.float32)

    # TODO(synk): for N >~ 8K on v7x (64 MiB VMEM) add a second 'arbitrary' grid
    # axis over column chunks with an online-softmax + running top-k merge.
    kernel = functools.partial(_edge_gumbel_topk_kernel, k=k)
    vals, idx = pl.pallas_call(
        kernel,
        grid=(N // tm,),
        out_shape=(
            jax.ShapeDtypeStruct((N, KPAD), jnp.float32),
            jax.ShapeDtypeStruct((N, KPAD), jnp.int32),
        ),
        in_specs=[
            pl.BlockSpec(memory_space=pltpu.MemorySpace.SMEM),   # seed (1,) i32
            pl.BlockSpec(memory_space=pltpu.MemorySpace.SMEM),   # temperature (1,) f32
            pl.BlockSpec((tm, D + 2), lambda i: (i, 0)),         # augmented row slab
            pl.BlockSpec((N, D + 2), lambda i: (0, 0)),          # augmented cols (resident)
        ],
        out_specs=(
            pl.BlockSpec((tm, KPAD), lambda i: (i, 0)),
            pl.BlockSpec((tm, KPAD), lambda i: (i, 0)),
        ),
        compiler_params=pltpu.CompilerParams(
            dimension_semantics=("parallel",),
            vmem_limit_bytes=48 * 1024 * 1024),
    )(seed_arr, temp_arr, a_aug, b_aug)

    return vals[:, :k], idx[:, :k]


def edge_sampling_gumbel_forward(x, key, temperature=TEMP_INIT, k=K):
    """Mirrors EdgeSamplingGumbel.forward: returns (x, edge_index, edge_weights, adj)."""
    N, D = x.shape
    seed_arr = jax.random.randint(key, (1,), 0, jnp.iinfo(jnp.int32).max,
                                  dtype=jnp.int32)

    vals, topk_idx = gumbel_topk_edges(x, seed_arr, temperature, k=k)

    rows = jnp.repeat(jnp.arange(N, dtype=jnp.int32), k)          # (N*k,)
    cols = topk_idx.reshape(-1).astype(jnp.int32)                 # (N*k,)
    edge_index = jnp.stack([rows, cols], axis=0)                  # (2, N*k)
    edge_weights = vals.reshape(-1)                               # (N*k,)

    # Every row index 0..N-1 appears in `rows`, so num_nodes == N statically.
    # TODO(synk): torch_sparse.SparseTensor has no JAX/Pallas equivalent; return
    # a COO adjacency (row, col, sparse_sizes) instead of a dense N x N matrix.
    adj = SparseAdj(row=rows, col=cols, sparse_sizes=(N, N))

    return x, edge_index, edge_weights, adj


if __name__ == "__main__":
    key = jax.random.PRNGKey(0)
    kx, knoise = jax.random.split(key)

    N, D = 256, 16                                # small node-feature matrix
    x = jax.random.normal(kx, (N, D), dtype=jnp.float32)

    x_out, edge_index, edge_weights, adj = edge_sampling_gumbel_forward(x, knoise)
    jax.block_until_ready((x_out, edge_index, edge_weights, adj.row, adj.col))

    # light sanity checks (softmax values may legitimately underflow to 0 when
    # distances are large, so we only require [0, 1] membership + finiteness).
    assert x_out.shape == (N, D)
    assert edge_index.shape == (2, N * K)
    assert edge_weights.shape == (N * K,)
    assert adj.sparse_sizes == (N, N)
    assert adj.row.shape == (N * K,) and adj.col.shape == (N * K,)
    assert bool(jnp.all(jnp.isfinite(edge_weights)))
    assert bool(jnp.all(edge_weights >= 0.0))
    assert bool(jnp.all(edge_weights <= 1.0 + 1e-5))
    ew = edge_weights.reshape(N, K)
    assert bool(jnp.all(ew[:, 0] > 0.0))                  # top-1 per row is positive
    assert bool(jnp.all(ew[:, :-1] + 1e-6 >= ew[:, 1:]))  # sorted descending per row
    cols = edge_index[1]
    assert bool(jnp.all((cols >= 0) & (cols < N)))
    assert bool(jnp.all((adj.col >= 0) & (adj.col < N)))

    print("KERNEL_OK")
</pallas_src>

<mosaic_0001>
module attributes {stable_mosaic.version = 11 : i64} {
  func.func @_edge_gumbel_topk_kernel(%arg0: i32, %arg1: memref<1xi32, #tpu.memory_space<smem>>, %arg2: memref<1xf32, #tpu.memory_space<smem>>, %arg3: memref<128x18xf32, #tpu.memory_space<vmem>>, %arg4: memref<256x18xf32, #tpu.memory_space<vmem>>, %arg5: memref<128x128xf32, #tpu.memory_space<vmem>>, %arg6: memref<128x128xi32, #tpu.memory_space<vmem>>) attributes {dimension_semantics = [#tpu.dimension_semantics<parallel>], iteration_bounds = array<i64: 2>, scalar_prefetch = 0 : i64, scratch_operands = 0 : i64, tpu.core_type = #tpu.core_type<tc>, window_params = [{transform_indices = @transform_0, window_bounds = array<i64: 1>}, {transform_indices = @transform_1, window_bounds = array<i64: 1>}, {transform_indices = @transform_2, window_bounds = array<i64: 128, 18>}, {pipeline_mode = #tpu.pipeline_mode<synchronous>, transform_indices = @transform_3, window_bounds = array<i64: 256, 18>}, {transform_indices = @transform_4, window_bounds = array<i64: 128, 128>}, {transform_indices = @transform_5, window_bounds = array<i64: 128, 128>}]} {
    %c0 = arith.constant 0 : index
    %c0_0 = arith.constant 0 : index
    %0 = vector.load %arg3[%c0, %c0_0] : memref<128x18xf32, #tpu.memory_space<vmem>>, vector<128x18xf32>
    %c0_1 = arith.constant 0 : index
    %c0_2 = arith.constant 0 : index
    %1 = vector.load %arg4[%c0_1, %c0_2] : memref<256x18xf32, #tpu.memory_space<vmem>>, vector<256x18xf32>
    %cst = arith.constant dense<0.000000e+00> : vector<128x256xf32>
    %2 = tpu.matmul %0, %1, %cst {dimension_numbers = #tpu.dot_dimension_numbers<[1], [1], [0], [0], [0, 0, 1, 0], [], []>} : vector<128x18xf32>, vector<256x18xf32>, vector<128x256xf32> -> vector<128x256xf32>
    %cst_3 = arith.constant 0.000000e+00 : f32
    %3 = vector.broadcast %cst_3 : f32 to vector<128x256xf32>
    %4 = arith.maximumf %2, %3 : vector<128x256xf32>
    %cst_4 = arith.constant 9.99999997E-7 : f32
    %5 = vector.broadcast %cst_4 : f32 to vector<128x256xf32>
    %6 = arith.addf %5, %4 : vector<128x256xf32>
    %cst_5 = arith.constant 2.000000e+00 : f32
    %7 = vector.broadcast %cst_5 : f32 to vector<128x256xf32>
    %8 = arith.addf %6, %7 : vector<128x256xf32>
    %9 = arith.mulf %6, %8 : vector<128x256xf32>
    %10 = math.sqrt %9 : vector<128x256xf32>
    %11 = arith.addf %6, %10 : vector<128x256xf32>
    %12 = math.log1p %11 : vector<128x256xf32>
    %13 = arith.mulf %12, %12 : vector<128x256xf32>
    %c0_6 = arith.constant 0 : index
    %14 = memref.load %arg2[%c0_6] : memref<1xf32, #tpu.memory_space<smem>>
    %cst_7 = arith.constant 2.000000e+00 : f32
    %cst_8 = arith.constant 5.000000e+00 : f32
    %15 = arith.maximumf %cst_7, %14 : f32
    %16 = arith.minimumf %cst_8, %15 : f32
    %17 = math.exp %16 : f32
    %cst_9 = arith.constant 0.000000e+00 : f32
    %18 = arith.subf %cst_9, %17 : f32
    %19 = vector.broadcast %18 : f32 to vector<128x256xf32>
    %20 = arith.mulf %13, %19 : vector<128x256xf32>
    %21 = tpu.iota {dimensions = array<i32: 1>} : vector<128x256xi32>
    %22 = tpu.iota {dimensions = array<i32: 0>} : vector<128x256xi32>
    %c128_i32 = arith.constant 128 : i32
    %23 = arith.muli %arg0, %c128_i32 : i32
    %24 = vector.broadcast %23 : i32 to vector<128x256xi32>
    %25 = arith.addi %22, %24 : vector<128x256xi32>
    %c-1640531527_i32 = arith.constant -1640531527 : i32
    %26 = vector.broadcast %c-1640531527_i32 : i32 to vector<128x256xi32>
    %27 = arith.muli %25, %26 : vector<128x256xi32>
    %c2146121005_i32 = arith.constant 2146121005 : i32
    %28 = vector.broadcast %c2146121005_i32 : i32 to vector<128x256xi32>
    %29 = arith.muli %21, %28 : vector<128x256xi32>
    %30 = arith.addi %27, %29 : vector<128x256xi32>
    %c0_10 = arith.constant 0 : index
    %31 = memref.load %arg1[%c0_10] : memref<1xi32, #tpu.memory_space<smem>>
    %32 = vector.broadcast %31 : i32 to vector<128x256xi32>
    %33 = arith.addi %30, %32 : vector<128x256xi32>
    %c16_i32 = arith.constant 16 : i32
    %34 = vector.broadcast %c16_i32 : i32 to vector<128x256xi32>
    %35 = arith.shrui %33, %34 : vector<128x256xi32>
    %36 = arith.xori %33, %35 : vector<128x256xi32>
    %c-2048144789_i32 = arith.constant -2048144789 : i32
    %37 = vector.broadcast %c-2048144789_i32 : i32 to vector<128x256xi32>
    %38 = arith.muli %36, %37 : vector<128x256xi32>
    %c13_i32 = arith.constant 13 : i32
    %39 = vector.broadcast %c13_i32 : i32 to vector<128x256xi32>
    %40 = arith.shrui %38, %39 : vector<128x256xi32>
    %41 = arith.xori %38, %40 : vector<128x256xi32>
    %c-1028477387_i32 = arith.constant -1028477387 : i32
    %42 = vector.broadcast %c-1028477387_i32 : i32 to vector<128x256xi32>
    %43 = arith.muli %41, %42 : vector<128x256xi32>
    %c16_i32_11 = arith.constant 16 : i32
    %44 = vector.broadcast %c16_i32_11 : i32 to vector<128x256xi32>
    %45 = arith.shrui %43, %44 : vector<128x256xi32>
    %46 = arith.xori %43, %45 : vector<128x256xi32>
    %c8_i32 = arith.constant 8 : i32
    %47 = vector.broadcast %c8_i32 : i32 to vector<128x256xi32>
    %48 = arith.shrui %46, %47 : vector<128x256xi32>
    %49 = arith.sitofp %48 : vector<128x256xi32> to vector<128x256xf32>
    %cst_12 = arith.constant 5.000000e-01 : f32
    %50 = vector.broadcast %cst_12 : f32 to vector<128x256xf32>
    %51 = arith.addf %49, %50 : vector<128x256xf32>
    %cst_13 = arith.constant 5.96046448E-8 : f32
    %52 = vector.broadcast %cst_13 : f32 to vector<128x256xf32>
    %53 = arith.mulf %51, %52 : vector<128x256xf32>
    %54 = math.log %53 : vector<128x256xf32>
    %cst_14 = arith.constant 0.000000e+00 : f32
    %55 = vector.broadcast %cst_14 : f32 to vector<128x256xf32>
    %56 = arith.subf %55, %54 : vector<128x256xf32>
    %57 = math.log %56 : vector<128x256xf32>
    %cst_15 = arith.constant 0.000000e+00 : f32
    %58 = vector.broadcast %cst_15 : f32 to vector<128x256xf32>
    %59 = arith.subf %58, %57 : vector<128x256xf32>
    %60 = arith.addf %20, %59 : vector<128x256xf32>
    %cst_16 = arith.constant 1.000000e+00 : f32
    %61 = arith.divf %cst_16, %16 : f32
    %62 = vector.broadcast %61 : f32 to vector<128x256xf32>
    %63 = arith.mulf %60, %62 : vector<128x256xf32>
    %cst_17 = arith.constant dense<0xFF800000> : vector<128xf32>
    %64 = vector.multi_reduction <maximumf>, %63, %cst_17 [1] : vector<128x256xf32> to vector<128xf32>
    %65 = vector.shape_cast %64 : vector<128xf32> to vector<128x1xf32>
    %66 = vector.broadcast %65 : vector<128x1xf32> to vector<128x256xf32>
    %67 = arith.subf %63, %66 : vector<128x256xf32>
    %68 = math.exp %67 : vector<128x256xf32>
    %cst_18 = arith.constant dense<0.000000e+00> : vector<128xf32>
    %69 = vector.multi_reduction <add>, %68, %cst_18 [1] : vector<128x256xf32> to vector<128xf32>
    %70 = vector.shape_cast %69 : vector<128xf32> to vector<128x1xf32>
    %cst_19 = arith.constant 1.000000e+00 : f32
    %71 = vector.broadcast %cst_19 : f32 to vector<128x1xf32>
    %72 = arith.divf %71, %70 : vector<128x1xf32>
    %73 = tpu.iota {dimensions = array<i32: 1>} : vector<128x128xi32>
    %cst_20 = arith.constant 0.000000e+00 : f32
    %74 = vector.broadcast %cst_20 : f32 to vector<128x128xf32>
    %c0_i32 = arith.constant 0 : i32
    %75 = vector.broadcast %c0_i32 : i32 to vector<128x128xi32>
    %76 = vector.broadcast %65 : vector<128x1xf32> to vector<128x256xf32>
    %77 = arith.cmpf oeq, %63, %76 : vector<128x256xf32>
    %c256_i32 = arith.constant 256 : i32
    %78 = vector.broadcast %c256_i32 : i32 to vector<128x256xi32>
    %79 = arith.select %77, %21, %78 : vector<128x256xi1>, vector<128x256xi32>
    %cst_21 = arith.constant dense<2147483647> : vector<128xi32>
    %80 = vector.multi_reduction <minsi>, %79, %cst_21 [1] : vector<128x256xi32> to vector<128xi32>
    %81 = vector.shape_cast %80 : vector<128xi32> to vector<128x1xi32>
    %82 = arith.subf %65, %65 : vector<128x1xf32>
    %83 = math.exp %82 : vector<128x1xf32>
    %84 = arith.mulf %83, %72 : vector<128x1xf32>
    %c0_i32_22 = arith.constant 0 : i32
    %85 = vector.broadcast %c0_i32_22 : i32 to vector<128x128xi32>
    %86 = arith.cmpi eq, %73, %85 : vector<128x128xi32>
    %87 = vector.shape_cast %84 : vector<128x1xf32> to vector<128x1xf32>
    %88 = vector.broadcast %87 : vector<128x1xf32> to vector<128x128xf32>
    %89 = arith.select %86, %88, %74 : vector<128x128xi1>, vector<128x128xf32>
    %c0_i32_23 = arith.constant 0 : i32
    %90 = vector.broadcast %c0_i32_23 : i32 to vector<128x128xi32>
    %91 = arith.cmpi eq, %73, %90 : vector<128x128xi32>
    %92 = vector.shape_cast %81 : vector<128x1xi32> to vector<128x1xi32>
    %93 = vector.broadcast %92 : vector<128x1xi32> to vector<128x128xi32>
    %94 = arith.select %91, %93, %75 : vector<128x128xi1>, vector<128x128xi32>
    %cst_24 = arith.constant 0xFF800000 : f32
    %95 = vector.broadcast %cst_24 : f32 to vector<128x256xf32>
    %96 = arith.select %77, %95, %63 : vector<128x256xi1>, vector<128x256xf32>
    %cst_25 = arith.constant dense<0xFF800000> : vector<128xf32>
    %97 = vector.multi_reduction <maximumf>, %96, %cst_25 [1] : vector<128x256xf32> to vector<128xf32>
    %98 = vector.shape_cast %97 : vector<128xf32> to vector<128x1xf32>
    %99 = vector.broadcast %98 : vector<128x1xf32> to vector<128x256xf32>
    %100 = arith.cmpf oeq, %96, %99 : vector<128x256xf32>
    %c256_i32_26 = arith.constant 256 : i32
    %101 = vector.broadcast %c256_i32_26 : i32 to vector<128x256xi32>
    %102 = arith.select %100, %21, %101 : vector<128x256xi1>, vector<128x256xi32>
    %cst_27 = arith.constant dense<2147483647> : vector<128xi32>
    %103 = vector.multi_reduction <minsi>, %102, %cst_27 [1] : vector<128x256xi32> to vector<128xi32>
    %104 = vector.shape_cast %103 : vector<128xi32> to vector<128x1xi32>
    %105 = arith.subf %98, %65 : vector<128x1xf32>
    %106 = math.exp %105 : vector<128x1xf32>
    %107 = arith.mulf %106, %72 : vector<128x1xf32>
    %c1_i32 = arith.constant 1 : i32
    %108 = vector.broadcast %c1_i32 : i32 to vector<128x128xi32>
    %109 = arith.cmpi eq, %73, %108 : vector<128x128xi32>
    %110 = vector.shape_cast %107 : vector<128x1xf32> to vector<128x1xf32>
    %111 = vector.broadcast %110 : vector<128x1xf32> to vector<128x128xf32>
    %112 = arith.select %109, %111, %89 : vector<128x128xi1>, vector<128x128xf32>
    %c1_i32_28 = arith.constant 1 : i32
    %113 = vector.broadcast %c1_i32_28 : i32 to vector<128x128xi32>
    %114 = arith.cmpi eq, %73, %113 : vector<128x128xi32>
    %115 = vector.shape_cast %104 : vector<128x1xi32> to vector<128x1xi32>
    %116 = vector.broadcast %115 : vector<128x1xi32> to vector<128x128xi32>
    %117 = arith.select %114, %116, %94 : vector<128x128xi1>, vector<128x128xi32>
    %cst_29 = arith.constant 0xFF800000 : f32
    %118 = vector.broadcast %cst_29 : f32 to vector<128x256xf32>
    %119 = arith.select %100, %118, %96 : vector<128x256xi1>, vector<128x256xf32>
    %cst_30 = arith.constant dense<0xFF800000> : vector<128xf32>
    %120 = vector.multi_reduction <maximumf>, %119, %cst_30 [1] : vector<128x256xf32> to vector<128xf32>
    %121 = vector.shape_cast %120 : vector<128xf32> to vector<128x1xf32>
    %122 = vector.broadcast %121 : vector<128x1xf32> to vector<128x256xf32>
    %123 = arith.cmpf oeq, %119, %122 : vector<128x256xf32>
    %c256_i32_31 = arith.constant 256 : i32
    %124 = vector.broadcast %c256_i32_31 : i32 to vector<128x256xi32>
    %125 = arith.select %123, %21, %124 : vector<128x256xi1>, vector<128x256xi32>
    %cst_32 = arith.constant dense<2147483647> : vector<128xi32>
    %126 = vector.multi_reduction <minsi>, %125, %cst_32 [1] : vector<128x256xi32> to vector<128xi32>
    %127 = vector.shape_cast %126 : vector<128xi32> to vector<128x1xi32>
    %128 = arith.subf %121, %65 : vector<128x1xf32>
    %129 = math.exp %128 : vector<128x1xf32>
    %130 = arith.mulf %129, %72 : vector<128x1xf32>
    %c2_i32 = arith.constant 2 : i32
    %131 = vector.broadcast %c2_i32 : i32 to vector<128x128xi32>
    %132 = arith.cmpi eq, %73, %131 : vector<128x128xi32>
    %133 = vector.shape_cast %130 : vector<128x1xf32> to vector<128x1xf32>
    %134 = vector.broadcast %133 : vector<128x1xf32> to vector<128x128xf32>
    %135 = arith.select %132, %134, %112 : vector<128x128xi1>, vector<128x128xf32>
    %c2_i32_33 = arith.constant 2 : i32
    %136 = vector.broadcast %c2_i32_33 : i32 to vector<128x128xi32>
    %137 = arith.cmpi eq, %73, %136 : vector<128x128xi32>
    %138 = vector.shape_cast %127 : vector<128x1xi32> to vector<128x1xi32>
    %139 = vector.broadcast %138 : vector<128x1xi32> to vector<128x128xi32>
    %140 = arith.select %137, %139, %117 : vector<128x128xi1>, vector<128x128xi32>
    %cst_34 = arith.constant 0xFF800000 : f32
    %141 = vector.broadcast %cst_34 : f32 to vector<128x256xf32>
    %142 = arith.select %123, %141, %119 : vector<128x256xi1>, vector<128x256xf32>
    %cst_35 = arith.constant dense<0xFF800000> : vector<128xf32>
    %143 = vector.multi_reduction <maximumf>, %142, %cst_35 [1] : vector<128x256xf32> to vector<128xf32>
    %144 = vector.shape_cast %143 : vector<128xf32> to vector<128x1xf32>
    %145 = vector.broadcast %144 : vector<128x1xf32> to vector<128x256xf32>
    %146 = arith.cmpf oeq, %142, %145 : vector<128x256xf32>
    %c256_i32_36 = arith.constant 256 : i32
    %147 = vector.broadcast %c256_i32_36 : i32 to vector<128x256xi32>
    %148 = arith.select %146, %21, %147 : vector<128x256xi1>, vector<128x256xi32>
    %cst_37 = arith.constant dense<2147483647> : vector<128xi32>
    %149 = vector.multi_reduction <minsi>, %148, %cst_37 [1] : vector<128x256xi32> to vector<128xi32>
    %150 = vector.shape_cast %149 : vector<128xi32> to vector<128x1xi32>
    %151 = arith.subf %144, %65 : vector<128x1xf32>
    %152 = math.exp %151 : vector<128x1xf32>
    %153 = arith.mulf %152, %72 : vector<128x1xf32>
    %c3_i32 = arith.constant 3 : i32
    %154 = vector.broadcast %c3_i32 : i32 to vector<128x128xi32>
    %155 = arith.cmpi eq, %73, %154 : vector<128x128xi32>
    %156 = vector.shape_cast %153 : vector<128x1xf32> to vector<128x1xf32>
    %157 = vector.broadcast %156 : vector<128x1xf32> to vector<128x128xf32>
    %158 = arith.select %155, %157, %135 : vector<128x128xi1>, vector<128x128xf32>
    %c3_i32_38 = arith.constant 3 : i32
    %159 = vector.broadcast %c3_i32_38 : i32 to vector<128x128xi32>
    %160 = arith.cmpi eq, %73, %159 : vector<128x128xi32>
    %161 = vector.shape_cast %150 : vector<128x1xi32> to vector<128x1xi32>
    %162 = vector.broadcast %161 : vector<128x1xi32> to vector<128x128xi32>
    %163 = arith.select %160, %162, %140 : vector<128x128xi1>, vector<128x128xi32>
    %cst_39 = arith.constant 0xFF800000 : f32
    %164 = vector.broadcast %cst_39 : f32 to vector<128x256xf32>
    %165 = arith.select %146, %164, %142 : vector<128x256xi1>, vector<128x256xf32>
    %cst_40 = arith.constant dense<0xFF800000> : vector<128xf32>
    %166 = vector.multi_reduction <maximumf>, %165, %cst_40 [1] : vector<128x256xf32> to vector<128xf32>
    %167 = vector.shape_cast %166 : vector<128xf32> to vector<128x1xf32>
    %168 = vector.broadcast %167 : vector<128x1xf32> to vector<128x256xf32>
    %169 = arith.cmpf oeq, %165, %168 : vector<128x256xf32>
    %c256_i32_41 = arith.constant 256 : i32
    %170 = vector.broadcast %c256_i32_41 : i32 to vector<128x256xi32>
    %171 = arith.select %169, %21, %170 : vector<128x256xi1>, vector<128x256xi32>
    %cst_42 = arith.constant dense<2147483647> : vector<128xi32>
    %172 = vector.multi_reduction <minsi>, %171, %cst_42 [1] : vector<128x256xi32> to vector<128xi32>
    %173 = vector.shape_cast %172 : vector<128xi32> to vector<128x1xi32>
    %174 = arith.subf %167, %65 : vector<128x1xf32>
    %175 = math.exp %174 : vector<128x1xf32>
    %176 = arith.mulf %175, %72 : vector<128x1xf32>
    %c4_i32 = arith.constant 4 : i32
    %177 = vector.broadcast %c4_i32 : i32 to vector<128x128xi32>
    %178 = arith.cmpi eq, %73, %177 : vector<128x128xi32>
    %179 = vector.shape_cast %176 : vector<128x1xf32> to vector<128x1xf32>
    %180 = vector.broadcast %179 : vector<128x1xf32> to vector<128x128xf32>
    %181 = arith.select %178, %180, %158 : vector<128x128xi1>, vector<128x128xf32>
    %c4_i32_43 = arith.constant 4 : i32
    %182 = vector.broadcast %c4_i32_43 : i32 to vector<128x128xi32>
    %183 = arith.cmpi eq, %73, %182 : vector<128x128xi32>
    %184 = vector.shape_cast %173 : vector<128x1xi32> to vector<128x1xi32>
    %185 = vector.broadcast %184 : vector<128x1xi32> to vector<128x128xi32>
    %186 = arith.select %183, %185, %163 : vector<128x128xi1>, vector<128x128xi32>
    %c0_44 = arith.constant 0 : index
    %c0_45 = arith.constant 0 : index
    %187 = vector.load %arg5[%c0_44, %c0_45] : memref<128x128xf32, #tpu.memory_space<vmem>>, vector<128x128xf32>
    tpu.vector_store %arg5[%c0_44, %c0_45], %181 {strides = array<i32>} : memref<128x128xf32, #tpu.memory_space<vmem>>, vector<128x128xf32>,
    %c0_46 = arith.constant 0 : index
    %c0_47 = arith.constant 0 : index
    %188 = vector.load %arg6[%c0_46, %c0_47] : memref<128x128xi32, #tpu.memory_space<vmem>>, vector<128x128xi32>
    tpu.vector_store %arg6[%c0_46, %c0_47], %186 {strides = array<i32>} : memref<128x128xi32, #tpu.memory_space<vmem>>, vector<128x128xi32>,
    return
  }
  func.func @transform_0(%arg0: i32) -> i32 {
    %c0_i32 = arith.constant 0 : i32
    %c0_i32_0 = arith.constant 0 : i32
    return %c0_i32 : i32
  }
  func.func @transform_1(%arg0: i32) -> i32 {
    %c0_i32 = arith.constant 0 : i32
    %c0_i32_0 = arith.constant 0 : i32
    return %c0_i32 : i32
  }
  func.func @transform_2(%arg0: i32) -> (i32, i32) {
    %c0_i32 = arith.constant 0 : i32
    %c0_i32_0 = arith.constant 0 : i32
    return %arg0, %c0_i32 : i32, i32
  }
  func.func @transform_3(%arg0: i32) -> (i32, i32) {
    %c0_i32 = arith.constant 0 : i32
    %c0_i32_0 = arith.constant 0 : i32
    %c0_i32_1 = arith.constant 0 : i32
    return %c0_i32, %c0_i32_0 : i32, i32
  }
  func.func @transform_4(%arg0: i32) -> (i32, i32) {
    %c0_i32 = arith.constant 0 : i32
    %c0_i32_0 = arith.constant 0 : i32
    return %arg0, %c0_i32 : i32, i32
  }
  func.func @transform_5(%arg0: i32) -> (i32, i32) {
    %c0_i32 = arith.constant 0 : i32
    %c0_i32_0 = arith.constant 0 : i32
    return %arg0, %c0_i32 : i32, i32
  }
}

</mosaic_0001>

<llo_original>
// kernel: tpu_custom_call.1
$region0: #{tpu_custom_call.1}
  #allocation0 [shape = 'u32[]', space=smem, size = 0x4, offset = 0x4, fixed_abs, tag = 'smem constant byte address 0x4 - core index']
  #allocation1 [shape = 'u32[72,128]{1,0:T(1,128)}', space=vmem, size = 0x9000, scoped, tag = 'internal scratch']
  #allocation2 [shape = 's32[1]{0:T(128)S(6)}', space=smem, size = 0x200, scoped, tag = 'scoped memory for tpu_custom_call.1']
  #allocation3 [shape = 'f32[1]{0:T(128)S(6)}', space=smem, size = 0x200, scoped, tag = 'scoped memory for tpu_custom_call.1']
  %s0 = inlined_call_operand.<no memory space> [shape: s32[1], index: 0, kind: input, shape index: {}]
  %s1 = inlined_call_operand.<no memory space> [shape: f32[1], index: 1, kind: input, shape index: {}]
  %s2 = inlined_call_operand.vmem [shape: f32[256,18], index: 2, kind: input, shape index: {}]
  %s3 = inlined_call_operand.vmem [shape: f32[256,18], index: 3, kind: input, shape index: {}]
  %s4 = inlined_call_operand.hbm [shape: f32[256,128], index: 4, kind: output, shape index: {0}]
  %s5 = inlined_call_operand.hbm [shape: s32[256,128], index: 5, kind: output, shape index: {1}]
  %6 = xla_tuple %s4, %s5
  %s7 = sld [smem:[#allocation0]]
  $region57: #{tpu_custom_call.1} parent=0
    _
  %s9 = ssub.s32 1, %s7
  %s10 = scalar_select 0, %s9, %s7
  %11 = sst [smem:[#allocation2]] %s0
  %12 = sst [smem:[#allocation3]] %s1
  $region1: #{tpu_custom_call.1} parent=0
    #allocation4 [shape = 'u8[131072]{0}', space=vmem, size = 0x20000, scoped, tag = 'output window, operand 0']
    #allocation5 [shape = 's32[2]{0}', space=sflag, size = 0x8, scoped, tag = 'scoped memory for tpu_custom_call.1']
    #allocation6 [shape = 'u8[131072]{0}', space=vmem, size = 0x20000, scoped, tag = 'output window, operand 1']
    #allocation7 [shape = 's32[2]{0}', space=sflag, size = 0x8, scoped, tag = 'scoped memory for tpu_custom_call.1']
    %13 = vsyncpa [#allocation5], 0
    %s14 = scalar_lea.sflag [#allocation5], 1
    %15 = vsyncpa %s14, 0
    %16 = vsyncpa [#allocation7], 0
    %s17 = scalar_lea.sflag [#allocation7], 1
    %18 = vsyncpa %s17, 0
    loop: start=0, step=1, limit=4
    $region2: #{tpu_custom_call.1} parent=1 // loop_pre_header
      _
    $region3: #{tpu_custom_call.1} parent=1 // loop_header
      %s20 = sphi 0, %s24
      %p21 = scmp.ge.s32.totalorder %s20, 4
      %s28 = sphi 0, %s28
      %s30 = sphi 0, %s28
      %s31 = sphi 0, %s30
      %s45 = sphi 0, %s31
      %s49 = sphi 0, %s49
      %s51 = sphi 0, %s49
      %s52 = sphi 0, %s51
      %s66 = sphi 0, %s52
      %s72 = sphi 0, %s74
      %s75 = sphi 0, %s72
      %s76 = sphi 0, %s75
      %s92 = sphi 0, %s76
      %s96 = sphi 0, %s96
      %s98 = sphi 0, %s96
      %s99 = sphi 0, %s98
      %s113 = sphi 0, %s99
      %s119 = sphi 0, %s121
      %s122 = sphi 0, %s119
      %s123 = sphi 0, %s122
      %s139 = sphi 0, %s123
      %s145 = sphi 0, %s147
      %s148 = sphi 0, %s145
      %s149 = sphi 0, %s148
      %s165 = sphi 0, %s149
    $region4: #{tpu_custom_call.1} parent=1 // loop_header_branch
      %23 = sbr.rel (%p21) target = $region8
    $region5: #{tpu_custom_call.1} parent=1 // loop_body
      %s25 = ssub.s32 %s20, 1
      %s26 = ssub.s32 %s20, 2
      %s27 = sadd.s32 %s20, 1
      %s29 = sadd.s32 %s28, 1
      %p32 = scmp.eq.s32.totalorder %s20, 1
      %p33 = scmp.ne.s32.totalorder %s28, %s30
      %p34 = scmp.eq.s32.totalorder %s20, 0
      %p35 = por %p33, %p34
      %p36 = scmp.ne.s32.totalorder %s28, %s30
      %p37 = scmp.eq.s32.totalorder %s25, 1
      %p38 = por %p36, %p37
      %p39 = scmp.ne.s32.totalorder %s30, %s31
      %p40 = scmp.eq.s32.totalorder %s25, 0
      %p41 = por %p39, %p40
      %p42 = scmp.ne.s32.totalorder %s30, %s31
      %p43 = scmp.eq.s32.totalorder %s26, 1
      %p44 = por %p42, %p43
      %p46 = scmp.ne.s32.totalorder %s31, %s45
      %p47 = scmp.eq.s32.totalorder %s26, 0
      %p48 = por %p46, %p47
      %s50 = sadd.s32 %s49, 1
      %p53 = scmp.eq.s32.totalorder %s20, 1
      %p54 = scmp.ne.s32.totalorder %s49, %s51
      %p55 = scmp.eq.s32.totalorder %s20, 0
      %p56 = por %p54, %p55
      %p57 = scmp.ne.s32.totalorder %s49, %s51
      %p58 = scmp.eq.s32.totalorder %s25, 1
      %p59 = por %p57, %p58
      %p60 = scmp.ne.s32.totalorder %s51, %s52
      %p61 = scmp.eq.s32.totalorder %s25, 0
      %p62 = por %p60, %p61
      %p63 = scmp.ne.s32.totalorder %s51, %s52
      %p64 = scmp.eq.s32.totalorder %s26, 1
      %p65 = por %p63, %p64
      %p67 = scmp.ne.s32.totalorder %s52, %s66
      %p68 = scmp.eq.s32.totalorder %s26, 0
      %p69 = por %p67, %p68
      %s70 = ssub.s32 %s20, %s27
      %p71 = scmp.eq.s32.totalorder %s70, 0
      %s73 = sadd.s32 %s72, 1
      %s74 = scalar_select %p71, %s72, %s73
      %p77 = pneg %p71
      %p78 = scmp.eq.s32.totalorder %s20, 1
      %p79 = por %p77, %p78
      %p80 = scmp.ne.s32.totalorder %s72, %s75
      %p81 = scmp.eq.s32.totalorder %s20, 0
      %p82 = por %p80, %p81
      %p83 = scmp.ne.s32.totalorder %s72, %s75
      %p84 = scmp.eq.s32.totalorder %s25, 1
      %p85 = por %p83, %p84
      %p86 = scmp.ne.s32.totalorder %s75, %s76
      %p87 = scmp.eq.s32.totalorder %s25, 0
      %p88 = por %p86, %p87
      %p89 = scmp.ne.s32.totalorder %s75, %s76
      %p90 = scmp.eq.s32.totalorder %s26, 1
      %p91 = por %p89, %p90
      %p93 = scmp.ne.s32.totalorder %s76, %s92
      %p94 = scmp.eq.s32.totalorder %s26, 0
      %p95 = por %p93, %p94
      %s97 = sadd.s32 %s96, 1
      %p100 = scmp.eq.s32.totalorder %s20, 1
      %p101 = scmp.ne.s32.totalorder %s96, %s98
      %p102 = scmp.eq.s32.totalorder %s20, 0
      %p103 = por %p101, %p102
      %p104 = scmp.ne.s32.totalorder %s96, %s98
      %p105 = scmp.eq.s32.totalorder %s25, 1
      %p106 = por %p104, %p105
      %p107 = scmp.ne.s32.totalorder %s98, %s99
      %p108 = scmp.eq.s32.totalorder %s25, 0
      %p109 = por %p107, %p108
      %p110 = scmp.ne.s32.totalorder %s98, %s99
      %p111 = scmp.eq.s32.totalorder %s26, 1
      %p112 = por %p110, %p111
      %p114 = scmp.ne.s32.totalorder %s99, %s113
      %p115 = scmp.eq.s32.totalorder %s26, 0
      %p116 = por %p114, %p115
      %s117 = ssub.s32 %s20, %s27
      %p118 = scmp.eq.s32.totalorder %s117, 0
      %s120 = sadd.s32 %s119, 1
      %s121 = scalar_select %p118, %s119, %s120
      %p124 = pneg %p118
      %p125 = scmp.eq.s32.totalorder %s20, 1
      %p126 = por %p124, %p125
      %p127 = scmp.ne.s32.totalorder %s119, %s122
      %p128 = scmp.eq.s32.totalorder %s20, 0
      %p129 = por %p127, %p128
      %p130 = scmp.ne.s32.totalorder %s119, %s122
      %p131 = scmp.eq.s32.totalorder %s25, 1
      %p132 = por %p130, %p131
      %p133 = scmp.ne.s32.totalorder %s122, %s123
      %p134 = scmp.eq.s32.totalorder %s25, 0
      %p135 = por %p133, %p134
      %p136 = scmp.ne.s32.totalorder %s122, %s123
      %p137 = scmp.eq.s32.totalorder %s26, 1
      %p138 = por %p136, %p137
      %p140 = scmp.ne.s32.totalorder %s123, %s139
      %p141 = scmp.eq.s32.totalorder %s26, 0
      %p142 = por %p140, %p141
      %s143 = ssub.s32 %s20, %s27
      %p144 = scmp.eq.s32.totalorder %s143, 0
      %s146 = sadd.s32 %s145, 1
      %s147 = scalar_select %p144, %s145, %s146
      %p150 = pneg %p144
      %p151 = scmp.eq.s32.totalorder %s20, 1
      %p152 = por %p150, %p151
      %p153 = scmp.ne.s32.totalorder %s145, %s148
      %p154 = scmp.eq.s32.totalorder %s20, 0
      %p155 = por %p153, %p154
      %p156 = scmp.ne.s32.totalorder %s145, %s148
      %p157 = scmp.eq.s32.totalorder %s25, 1
      %p158 = por %p156, %p157
      %p159 = scmp.ne.s32.totalorder %s148, %s149
      %p160 = scmp.eq.s32.totalorder %s25, 0
      %p161 = por %p159, %p160
      %p162 = scmp.ne.s32.totalorder %s148, %s149
      %p163 = scmp.eq.s32.totalorder %s26, 1
      %p164 = por %p162, %p163
      %p166 = scmp.ne.s32.totalorder %s149, %s165
      %p167 = scmp.eq.s32.totalorder %s26, 0
      %p168 = por %p166, %p167
      %p169 = scmp.le.s32.totalorder 1, %s20
      %p170 = scmp.lt.s32.totalorder %s20, 3
      %p171 = pnand %p169, %p170
      %p172 = pneg %p171
      // Predicated region
      $region9: #{tpu_custom_call.1} parent=5 // pred_check
        _
      $region10: #{tpu_custom_call.1} parent=5 // pred_check_branch
        %174 = sbr.rel (%p171) target = $region12
      $region11: #{tpu_custom_call.1} parent=5 // pred_region
        %s175 = ssub.s32 %s20, 1
        // Predicated region
        $region13: #{tpu_custom_call.1} parent=11 // pred_check
          %p176 = pneg %p41
        $region14: #{tpu_custom_call.1} parent=11 // pred_check_branch
          %178 = sbr.rel (%p176) target = $region16
        $region15: #{tpu_custom_call.1} parent=11 // pred_region
          _
        $region16: #{tpu_custom_call.1} parent=11 // pred_fallthru
          _
        // Predicated region
        $region17: #{tpu_custom_call.1} parent=11 // pred_check
          %p179 = pneg %p62
        $region18: #{tpu_custom_call.1} parent=11 // pred_check_branch
          %181 = sbr.rel (%p179) target = $region20
        $region19: #{tpu_custom_call.1} parent=11 // pred_region
          _
        $region20: #{tpu_custom_call.1} parent=11 // pred_fallthru
          _
        // Predicated region
        $region21: #{tpu_custom_call.1} parent=11 // pred_check
          %p182 = pneg %p109
        $region22: #{tpu_custom_call.1} parent=11 // pred_check_branch
          %184 = sbr.rel (%p182) target = $region24
        $region23: #{tpu_custom_call.1} parent=11 // pred_region
          _
        $region24: #{tpu_custom_call.1} parent=11 // pred_fallthru
          _
      $region12: #{tpu_custom_call.1} parent=5 // pred_fallthru
        _
      %p185 = scmp.lt.s32.totalorder %s20, 2
      // Predicated region
      $region25: #{tpu_custom_call.1} parent=5 // pred_check
        %p186 = pneg %p185
      $region26: #{tpu_custom_call.1} parent=5 // pred_check_branch
        %188 = sbr.rel (%p186) target = $region28
      $region27: #{tpu_custom_call.1} parent=5 // pred_region
        // Predicated region
        $region29: #{tpu_custom_call.1} parent=27 // pred_check
          %p189 = pneg %p82
        $region30: #{tpu_custom_call.1} parent=27 // pred_check_branch
          %191 = sbr.rel (%p189) target = $region32
        $region31: #{tpu_custom_call.1} parent=27 // pred_region
          %s192 = smul.u32 16, %s20
          %p193 = scmp.lt.s32.totalorder %s192, 31
          %s194 = scalar_select %p193, %s192, 31
          %s195 = smul.addr %s194, 8
          %s196 = scalar_lea.vmem %s2, %s195
          %s197 = smul.u32 16, %s20
        $region32: #{tpu_custom_call.1} parent=27 // pred_fallthru
          _
      $region28: #{tpu_custom_call.1} parent=5 // pred_fallthru
        _
      %p198 = scmp.le.s32.totalorder 1, %s20
      %p199 = scmp.lt.s32.totalorder %s20, 3
      %p200 = pnand %p198, %p199
      %p201 = pneg %p200
      // Predicated region
      $region33: #{tpu_custom_call.1} parent=5 // pred_check
        _
      $region34: #{tpu_custom_call.1} parent=5 // pred_check_branch
        %203 = sbr.rel (%p200) target = $region36
      $region35: #{tpu_custom_call.1} parent=5 // pred_region
        %s204 = ssub.s32 %s20, 1
        %p205 = pneg %p41
        %p206 = pneg %p38
        %p207 = pneg %p62
        %p208 = pneg %p59
        %s209 = smul.u32 16, %s25
        %p210 = scmp.lt.s32.totalorder %s209, 31
        %s211 = scalar_select %p210, %s209, 31
        %s212 = smul.addr %s211, 8
        %s213 = scalar_lea.vmem %s2, %s212
        %p214 = pneg %p88
        %p215 = pneg %p85
        %p216 = pneg %p109
        %p217 = pneg %p106
        %p218 = pneg %p135
        %p219 = pneg %p132
        %s220 = sand.u32 %s122, 1
        %s221 = scalar_lea.sflag [#allocation5], %s220
        %s222 = sand.u32 %s122, 1
        %s223 = smul.addr %s222, 128
        %s224 = scalar_lea.vmem [#allocation4], %s223
        %p225 = pneg %p161
        %p226 = pneg %p158
        %s227 = sand.u32 %s148, 1
        %s228 = scalar_lea.sflag [#allocation7], %s227
        %s229 = sand.u32 %s148, 1
        %s230 = smul.addr %s229, 128
        %s231 = scalar_lea.vmem [#allocation6], %s230
        %s232 = smul.u32 16, %s25
        %p233 = scmp.lt.s32.totalorder %s232, 31
        %s234 = scalar_select %p233, %s232, 31
        %s235 = smul.addr %s234, 8
        %s236 = scalar_lea.vmem %s2, %s235
        %s237 = smul.u32 16, %s25
        %s238 = smul.u32 16, %s25
        %s239 = smul.u32 16, %s25
        %v240 = vld [vmem:[%s236] sm:$0xff]
        %v241 = vld [vmem:[%s236 + $0x8] sm:$0xff]
        %v242 = vld [vmem:[%s236 + $0x10] sm:$0xff]
        %v243 = vld [vmem:[%s236 + $0x18] sm:$0xff]
        %v244 = vld [vmem:[%s236 + $0x20] sm:$0xff]
        %v245 = vld [vmem:[%s236 + $0x28] sm:$0xff]
        %v246 = vld [vmem:[%s236 + $0x30] sm:$0xff]
        %v247 = vld [vmem:[%s236 + $0x38] sm:$0xff]
        %v248 = vld [vmem:[%s236 + $0x40] sm:$0xff]
        %v249 = vld [vmem:[%s236 + $0x48] sm:$0xff]
        %v250 = vld [vmem:[%s236 + $0x50] sm:$0xff]
        %v251 = vld [vmem:[%s236 + $0x58] sm:$0xff]
        %v252 = vld [vmem:[%s236 + $0x60] sm:$0xff]
        %v253 = vld [vmem:[%s236 + $0x68] sm:$0xff]
        %v254 = vld [vmem:[%s236 + $0x70] sm:$0xff]
        %v255 = vld [vmem:[%s236 + $0x78] sm:$0xff]
        %v256 = vld [vmem:[%s3] sm:$0xff]
        %v257 = vld [vmem:[%s3 + $0x8] sm:$0xff]
        %v258 = vld [vmem:[%s3 + $0x10] sm:$0xff]
        %v259 = vld [vmem:[%s3 + $0x18] sm:$0xff]
        %v260 = vld [vmem:[%s3 + $0x20] sm:$0xff]
        %v261 = vld [vmem:[%s3 + $0x28] sm:$0xff]
        %v262 = vld [vmem:[%s3 + $0x30] sm:$0xff]
        %v263 = vld [vmem:[%s3 + $0x38] sm:$0xff]
        %v264 = vld [vmem:[%s3 + $0x40] sm:$0xff]
        %v265 = vld [vmem:[%s3 + $0x48] sm:$0xff]
        %v266 = vld [vmem:[%s3 + $0x50] sm:$0xff]
        %v267 = vld [vmem:[%s3 + $0x58] sm:$0xff]
        %v268 = vld [vmem:[%s3 + $0x60] sm:$0xff]
        %v269 = vld [vmem:[%s3 + $0x68] sm:$0xff]
        %v270 = vld [vmem:[%s3 + $0x70] sm:$0xff]
        %v271 = vld [vmem:[%s3 + $0x78] sm:$0xff]
        %v272 = vld [vmem:[%s3 + $0x80] sm:$0xff]
        %v273 = vld [vmem:[%s3 + $0x88] sm:$0xff]
        %v274 = vld [vmem:[%s3 + $0x90] sm:$0xff]
        %v275 = vld [vmem:[%s3 + $0x98] sm:$0xff]
        %v276 = vld [vmem:[%s3 + $0xa0] sm:$0xff]
        %v277 = vld [vmem:[%s3 + $0xa8] sm:$0xff]
        %v278 = vld [vmem:[%s3 + $0xb0] sm:$0xff]
        %v279 = vld [vmem:[%s3 + $0xb8] sm:$0xff]
        %v280 = vld [vmem:[%s3 + $0xc0] sm:$0xff]
        %v281 = vld [vmem:[%s3 + $0xc8] sm:$0xff]
        %v282 = vld [vmem:[%s3 + $0xd0] sm:$0xff]
        %v283 = vld [vmem:[%s3 + $0xd8] sm:$0xff]
        %v284 = vld [vmem:[%s3 + $0xe0] sm:$0xff]
        %v285 = vld [vmem:[%s3 + $0xe8] sm:$0xff]
        %v286 = vld [vmem:[%s3 + $0xf0] sm:$0xff]
        %v287 = vld [vmem:[%s3 + $0xf8] sm:$0xff]
        %vm288 = vcmask 146432
        %v290 = vsel %vm288, %v240, 0
        %v293 = vsel %vm288, %v241, 0
        %v296 = vsel %vm288, %v242, 0
        %v299 = vsel %vm288, %v243, 0
        %v302 = vsel %vm288, %v244, 0
        %v305 = vsel %vm288, %v245, 0
        %v308 = vsel %vm288, %v246, 0
        %v311 = vsel %vm288, %v247, 0
        %v314 = vsel %vm288, %v248, 0
        %v317 = vsel %vm288, %v249, 0
        %v320 = vsel %vm288, %v250, 0
        %v323 = vsel %vm288, %v251, 0
        %v326 = vsel %vm288, %v252, 0
        %v329 = vsel %vm288, %v253, 0
        %v332 = vsel %vm288, %v254, 0
        %v335 = vsel %vm288, %v255, 0
        %v338 = vsel %vm288, %v256, 0
        %v341 = vsel %vm288, %v257, 0
        %v344 = vsel %vm288, %v258, 0
        %v347 = vsel %vm288, %v259, 0
        %v350 = vsel %vm288, %v260, 0
        %v353 = vsel %vm288, %v261, 0
        %v356 = vsel %vm288, %v262, 0
        %v359 = vsel %vm288, %v263, 0
        %v362 = vsel %vm288, %v264, 0
        %v365 = vsel %vm288, %v265, 0
        %v368 = vsel %vm288, %v266, 0
        %v371 = vsel %vm288, %v267, 0
        %v374 = vsel %vm288, %v268, 0
        %v377 = vsel %vm288, %v269, 0
        %v380 = vsel %vm288, %v270, 0
        %v383 = vsel %vm288, %v271, 0
        %v386 = vsel %vm288, %v272, 0
        %v389 = vsel %vm288, %v273, 0
        %v392 = vsel %vm288, %v274, 0
        %v395 = vsel %vm288, %v275, 0
        %v398 = vsel %vm288, %v276, 0
        %v401 = vsel %vm288, %v277, 0
        %v404 = vsel %vm288, %v278, 0
        %v407 = vsel %vm288, %v279, 0
        %v410 = vsel %vm288, %v280, 0
        %v413 = vsel %vm288, %v281, 0
        %v416 = vsel %vm288, %v282, 0
        %v419 = vsel %vm288, %v283, 0
        %v422 = vsel %vm288, %v284, 0
        %v425 = vsel %vm288, %v285, 0
        %v428 = vsel %vm288, %v286, 0
        %v431 = vsel %vm288, %v287, 0
        %433 = vmatpush.xpose.msra.mxu0 %v383
        %434 = vmatpush.xpose.msra.mxu0 %v380
        %435 = vmatpush.xpose.msra.mxu0 %v377
        %436 = vmatpush.xpose.msra.mxu0 %v374
        %437 = vmatpush.xpose.msra.mxu0 %v371
        %438 = vmatpush.xpose.msra.mxu0 %v368
        %439 = vmatpush.xpose.msra.mxu0 %v365
        %440 = vmatpush.xpose.msra.mxu0 %v362
        %441 = vmatpush.xpose.msra.mxu0 %v359
        %442 = vmatpush.xpose.msra.mxu0 %v356
        %443 = vmatpush.xpose.msra.mxu0 %v353
        %444 = vmatpush.xpose.msra.mxu0 %v350
        %445 = vmatpush.xpose.msra.mxu0 %v347
        %446 = vmatpush.xpose.msra.mxu0 %v344
        %447 = vmatpush.xpose.msra.mxu0 %v341
        %448 = vmatpush.xpose.msra.mxu0 %v338
        %449 = vmatmul.f32.gmra.mxu0 %v290
        %v450 = vpop.f32.mrf.mxu0
        %v451 = vadd.f32 0.0, %v450
        %452 = vmatmul.f32.gmra.mxu0 %v293
        %v453 = vpop.f32.mrf.mxu0
        %v454 = vadd.f32 0.0, %v453
        %455 = vmatmul.f32.gmra.mxu0 %v296
        %v456 = vpop.f32.mrf.mxu0
        %v457 = vadd.f32 0.0, %v456
        %458 = vmatmul.f32.gmra.mxu0 %v299
        %v459 = vpop.f32.mrf.mxu0
        %v460 = vadd.f32 0.0, %v459
        %461 = vmatmul.f32.gmra.mxu0 %v302
        %v462 = vpop.f32.mrf.mxu0
        %v463 = vadd.f32 0.0, %v462
        %464 = vmatmul.f32.gmra.mxu0 %v305
        %v465 = vpop.f32.mrf.mxu0
        %v466 = vadd.f32 0.0, %v465
        %467 = vmatmul.f32.gmra.mxu0 %v308
        %v468 = vpop.f32.mrf.mxu0
        %v469 = vadd.f32 0.0, %v468
        %470 = vmatmul.f32.gmra.mxu0 %v311
        %v471 = vpop.f32.mrf.mxu0
        %v472 = vadd.f32 0.0, %v471
        %473 = vmatmul.f32.gmra.mxu0 %v314
        %v474 = vpop.f32.mrf.mxu0
        %v475 = vadd.f32 0.0, %v474
        %476 = vmatmul.f32.gmra.mxu0 %v317
        %v477 = vpop.f32.mrf.mxu0
        %v478 = vadd.f32 0.0, %v477
        %479 = vmatmul.f32.gmra.mxu0 %v320
        %v480 = vpop.f32.mrf.mxu0
        %v481 = vadd.f32 0.0, %v480
        %482 = vmatmul.f32.gmra.mxu0 %v323
        %v483 = vpop.f32.mrf.mxu0
        %v484 = vadd.f32 0.0, %v483
        %485 = vmatmul.f32.gmra.mxu0 %v326
        %v486 = vpop.f32.mrf.mxu0
        %v487 = vadd.f32 0.0, %v486
        %488 = vmatmul.f32.gmra.mxu0 %v329
        %v489 = vpop.f32.mrf.mxu0
        %v490 = vadd.f32 0.0, %v489
        %491 = vmatmul.f32.gmra.mxu0 %v332
        %v492 = vpop.f32.mrf.mxu0
        %v493 = vadd.f32 0.0, %v492
        %494 = vmatmul.f32.gmra.mxu0 %v335
        %v495 = vpop.f32.mrf.mxu0
        %v496 = vadd.f32 0.0, %v495
        %497 = vdwg.mxu0
        %498 = vmatpush.xpose.msra.mxu0 %v431
        %499 = vmatpush.xpose.msra.mxu0 %v428
        %500 = vmatpush.xpose.msra.mxu0 %v425
        %501 = vmatpush.xpose.msra.mxu0 %v422
        %502 = vmatpush.xpose.msra.mxu0 %v419
        %503 = vmatpush.xpose.msra.mxu0 %v416
        %504 = vmatpush.xpose.msra.mxu0 %v413
        %505 = vmatpush.xpose.msra.mxu0 %v410
        %506 = vmatpush.xpose.msra.mxu0 %v407
        %507 = vmatpush.xpose.msra.mxu0 %v404
        %508 = vmatpush.xpose.msra.mxu0 %v401
        %509 = vmatpush.xpose.msra.mxu0 %v398
        %510 = vmatpush.xpose.msra.mxu0 %v395
        %511 = vmatpush.xpose.msra.mxu0 %v392
        %512 = vmatpush.xpose.msra.mxu0 %v389
        %513 = vmatpush.xpose.msra.mxu0 %v386
        %514 = vmatmul.f32.gmra.mxu0 %v290
        %v515 = vpop.f32.mrf.mxu0
        %v516 = vadd.f32 0.0, %v515
        %517 = vmatmul.f32.gmra.mxu0 %v293
        %v518 = vpop.f32.mrf.mxu0
        %v519 = vadd.f32 0.0, %v518
        %520 = vmatmul.f32.gmra.mxu0 %v296
        %v521 = vpop.f32.mrf.mxu0
        %v522 = vadd.f32 0.0, %v521
        %523 = vmatmul.f32.gmra.mxu0 %v299
        %v524 = vpop.f32.mrf.mxu0
        %v525 = vadd.f32 0.0, %v524
        %526 = vmatmul.f32.gmra.mxu0 %v302
        %v527 = vpop.f32.mrf.mxu0
        %v528 = vadd.f32 0.0, %v527
        %529 = vmatmul.f32.gmra.mxu0 %v305
        %v530 = vpop.f32.mrf.mxu0
        %v531 = vadd.f32 0.0, %v530
        %532 = vmatmul.f32.gmra.mxu0 %v308
        %v533 = vpop.f32.mrf.mxu0
        %v534 = vadd.f32 0.0, %v533
        %535 = vmatmul.f32.gmra.mxu0 %v311
        %v536 = vpop.f32.mrf.mxu0
        %v537 = vadd.f32 0.0, %v536
        %538 = vmatmul.f32.gmra.mxu0 %v314
        %v539 = vpop.f32.mrf.mxu0
        %v540 = vadd.f32 0.0, %v539
        %541 = vmatmul.f32.gmra.mxu0 %v317
        %v542 = vpop.f32.mrf.mxu0
        %v543 = vadd.f32 0.0, %v542
        %544 = vmatmul.f32.gmra.mxu0 %v320
        %v545 = vpop.f32.mrf.mxu0
        %v546 = vadd.f32 0.0, %v545
        %547 = vmatmul.f32.gmra.mxu0 %v323
        %v548 = vpop.f32.mrf.mxu0
        %v549 = vadd.f32 0.0, %v548
        %550 = vmatmul.f32.gmra.mxu0 %v326
        %v551 = vpop.f32.mrf.mxu0
        %v552 = vadd.f32 0.0, %v551
        %553 = vmatmul.f32.gmra.mxu0 %v329
        %v554 = vpop.f32.mrf.mxu0
        %v555 = vadd.f32 0.0, %v554
        %556 = vmatmul.f32.gmra.mxu0 %v332
        %v557 = vpop.f32.mrf.mxu0
        %v558 = vadd.f32 0.0, %v557
        %559 = vmatmul.f32.gmra.mxu0 %v335
        %v560 = vpop.f32.mrf.mxu0
        %v561 = vadd.f32 0.0, %v560
        %562 = vdwg.mxu0
        %v563 = vmax.f32 %v451, 0.0
        %v564 = vmax.f32 %v516, 0.0
        %v565 = vmax.f32 %v454, 0.0
        %v566 = vmax.f32 %v519, 0.0
        %v567 = vmax.f32 %v457, 0.0
        %v568 = vmax.f32 %v522, 0.0
        %v569 = vmax.f32 %v460, 0.0
        %v570 = vmax.f32 %v525, 0.0
        %v571 = vmax.f32 %v463, 0.0
        %v572 = vmax.f32 %v528, 0.0
        %v573 = vmax.f32 %v466, 0.0
        %v574 = vmax.f32 %v531, 0.0
        %v575 = vmax.f32 %v469, 0.0
        %v576 = vmax.f32 %v534, 0.0
        %v577 = vmax.f32 %v472, 0.0
        %v578 = vmax.f32 %v537, 0.0
        %v579 = vmax.f32 %v475, 0.0
        %v580 = vmax.f32 %v540, 0.0
        %v581 = vmax.f32 %v478, 0.0
        %v582 = vmax.f32 %v543, 0.0
        %v583 = vmax.f32 %v481, 0.0
        %v584 = vmax.f32 %v546, 0.0
        %v585 = vmax.f32 %v484, 0.0
        %v586 = vmax.f32 %v549, 0.0
        %v587 = vmax.f32 %v487, 0.0
        %v588 = vmax.f32 %v552, 0.0
        %v589 = vmax.f32 %v490, 0.0
        %v590 = vmax.f32 %v555, 0.0
        %v591 = vmax.f32 %v493, 0.0
        %v592 = vmax.f32 %v558, 0.0
        %v593 = vmax.f32 %v496, 0.0
        %v594 = vmax.f32 %v561, 0.0
        %v595 = vadd.f32 %v563, 1e-06
        %v596 = vadd.f32 %v564, 1e-06
        %v597 = vadd.f32 %v565, 1e-06
        %v598 = vadd.f32 %v566, 1e-06
        %v599 = vadd.f32 %v567, 1e-06
        %v600 = vadd.f32 %v568, 1e-06
        %v601 = vadd.f32 %v569, 1e-06
        %v602 = vadd.f32 %v570, 1e-06
        %v603 = vadd.f32 %v571, 1e-06
        %v604 = vadd.f32 %v572, 1e-06
        %v605 = vadd.f32 %v573, 1e-06
        %v606 = vadd.f32 %v574, 1e-06
        %v607 = vadd.f32 %v575, 1e-06
        %v608 = vadd.f32 %v576, 1e-06
        %v609 = vadd.f32 %v577, 1e-06
        %v610 = vadd.f32 %v578, 1e-06
        %v611 = vadd.f32 %v579, 1e-06
        %v612 = vadd.f32 %v580, 1e-06
        %v613 = vadd.f32 %v581, 1e-06
        %v614 = vadd.f32 %v582, 1e-06
        %v615 = vadd.f32 %v583, 1e-06
        %v616 = vadd.f32 %v584, 1e-06
        %v617 = vadd.f32 %v585, 1e-06
        %v618 = vadd.f32 %v586, 1e-06
        %v619 = vadd.f32 %v587, 1e-06
        %v620 = vadd.f32 %v588, 1e-06
        %v621 = vadd.f32 %v589, 1e-06
        %v622 = vadd.f32 %v590, 1e-06
        %v623 = vadd.f32 %v591, 1e-06
        %v624 = vadd.f32 %v592, 1e-06
        %v625 = vadd.f32 %v593, 1e-06
        %v626 = vadd.f32 %v594, 1e-06
        %v627 = vadd.f32 %v595, 2.0
        %v628 = vadd.f32 %v596, 2.0
        %v629 = vadd.f32 %v597, 2.0
        %v630 = vadd.f32 %v598, 2.0
        %v631 = vadd.f32 %v599, 2.0
        %v632 = vadd.f32 %v600, 2.0
        %v633 = vadd.f32 %v601, 2.0
        %v634 = vadd.f32 %v602, 2.0
        %v635 = vadd.f32 %v603, 2.0
        %v636 = vadd.f32 %v604, 2.0
        %v637 = vadd.f32 %v605, 2.0
        %v638 = vadd.f32 %v606, 2.0
        %v639 = vadd.f32 %v607, 2.0
        %v640 = vadd.f32 %v608, 2.0
        %v641 = vadd.f32 %v609, 2.0
        %v642 = vadd.f32 %v610, 2.0
        %v643 = vadd.f32 %v611, 2.0
        %v644 = vadd.f32 %v612, 2.0
        %v645 = vadd.f32 %v613, 2.0
        %v646 = vadd.f32 %v614, 2.0
        %v647 = vadd.f32 %v615, 2.0
        %v648 = vadd.f32 %v616, 2.0
        %v649 = vadd.f32 %v617, 2.0
        %v650 = vadd.f32 %v618, 2.0
        %v651 = vadd.f32 %v619, 2.0
        %v652 = vadd.f32 %v620, 2.0
        %v653 = vadd.f32 %v621, 2.0
        %v654 = vadd.f32 %v622, 2.0
        %v655 = vadd.f32 %v623, 2.0
        %v656 = vadd.f32 %v624, 2.0
        %v657 = vadd.f32 %v625, 2.0
        %v658 = vadd.f32 %v626, 2.0
        %v659 = vmul.f32 %v595, %v627
        %v660 = vmul.f32 %v596, %v628
        %v661 = vmul.f32 %v597, %v629
        %v662 = vmul.f32 %v598, %v630
        %v663 = vmul.f32 %v599, %v631
        %v664 = vmul.f32 %v600, %v632
        %v665 = vmul.f32 %v601, %v633
        %v666 = vmul.f32 %v602, %v634
        %v667 = vmul.f32 %v603, %v635
        %v668 = vmul.f32 %v604, %v636
        %v669 = vmul.f32 %v605, %v637
        %v670 = vmul.f32 %v606, %v638
        %v671 = vmul.f32 %v607, %v639
        %v672 = vmul.f32 %v608, %v640
        %v673 = vmul.f32 %v609, %v641
        %v674 = vmul.f32 %v610, %v642
        %v675 = vmul.f32 %v611, %v643
        %v676 = vmul.f32 %v612, %v644
        %v677 = vmul.f32 %v613, %v645
        %v678 = vmul.f32 %v614, %v646
        %v679 = vmul.f32 %v615, %v647
        %v680 = vmul.f32 %v616, %v648
        %v681 = vmul.f32 %v617, %v649
        %v682 = vmul.f32 %v618, %v650
        %v683 = vmul.f32 %v619, %v651
        %v684 = vmul.f32 %v620, %v652
        %v685 = vmul.f32 %v621, %v653
        %v686 = vmul.f32 %v622, %v654
        %v687 = vmul.f32 %v623, %v655
        %v688 = vmul.f32 %v624, %v656
        %v689 = vmul.f32 %v625, %v657
        %v690 = vmul.f32 %v626, %v658
        %v691 = vrsqrt.pop %v659
        %v692 = vmul.f32 %v691, %v659
        %v693 = vmul.f32 %v692, %v691
        %v694 = vmul.f32 0.5, %v693
        %v695 = vsub.f32 1.5, %v694
        %v696 = vmul.f32 %v691, %v695
        %v697 = vmul.f32 %v659, %v696
        %vm698 = vcmp.eq.f32.partialorder %v659, inf
        %v699 = vsel %vm698, %v659, %v697
        %vm700 = vcmp.eq.f32.partialorder %v659, 0.0
        %v701 = vand.u32 %v659, 2147483648
        %v702 = vsel %vm700, %v701, %v699
        %v703 = vrsqrt.pop %v660
        %v704 = vmul.f32 %v703, %v660
        %v705 = vmul.f32 %v704, %v703
        %v706 = vmul.f32 0.5, %v705
        %v707 = vsub.f32 1.5, %v706
        %v708 = vmul.f32 %v703, %v707
        %v709 = vmul.f32 %v660, %v708
        %vm710 = vcmp.eq.f32.partialorder %v660, inf
        %v711 = vsel %vm710, %v660, %v709
        %vm712 = vcmp.eq.f32.partialorder %v660, 0.0
        %v713 = vand.u32 %v660, 2147483648
        %v714 = vsel %vm712, %v713, %v711
        %v715 = vrsqrt.pop %v661
        %v716 = vmul.f32 %v715, %v661
        %v717 = vmul.f32 %v716, %v715
        %v718 = vmul.f32 0.5, %v717
        %v719 = vsub.f32 1.5, %v718
        %v720 = vmul.f32 %v715, %v719
        %v721 = vmul.f32 %v661, %v720
        %vm722 = vcmp.eq.f32.partialorder %v661, inf
        %v723 = vsel %vm722, %v661, %v721
        %vm724 = vcmp.eq.f32.partialorder %v661, 0.0
        %v725 = vand.u32 %v661, 2147483648
        %v726 = vsel %vm724, %v725, %v723
        %v727 = vrsqrt.pop %v662
        %v728 = vmul.f32 %v727, %v662
        %v729 = vmul.f32 %v728, %v727
        %v730 = vmul.f32 0.5, %v729
        %v731 = vsub.f32 1.5, %v730
        %v732 = vmul.f32 %v727, %v731
        %v733 = vmul.f32 %v662, %v732
        %vm734 = vcmp.eq.f32.partialorder %v662, inf
        %v735 = vsel %vm734, %v662, %v733
        %vm736 = vcmp.eq.f32.partialorder %v662, 0.0
        %v737 = vand.u32 %v662, 2147483648
        %v738 = vsel %vm736, %v737, %v735
        %v739 = vrsqrt.pop %v663
        %v740 = vmul.f32 %v739, %v663
        %v741 = vmul.f32 %v740, %v739
        %v742 = vmul.f32 0.5, %v741
        %v743 = vsub.f32 1.5, %v742
        %v744 = vmul.f32 %v739, %v743
        %v745 = vmul.f32 %v663, %v744
        %vm746 = vcmp.eq.f32.partialorder %v663, inf
        %v747 = vsel %vm746, %v663, %v745
        %vm748 = vcmp.eq.f32.partialorder %v663, 0.0
        %v749 = vand.u32 %v663, 2147483648
        %v750 = vsel %vm748, %v749, %v747
        %v751 = vrsqrt.pop %v664
        %v752 = vmul.f32 %v751, %v664
        %v753 = vmul.f32 %v752, %v751
        %v754 = vmul.f32 0.5, %v753
        %v755 = vsub.f32 1.5, %v754
        %v756 = vmul.f32 %v751, %v755
        %v757 = vmul.f32 %v664, %v756
        %vm758 = vcmp.eq.f32.partialorder %v664, inf
        %v759 = vsel %vm758, %v664, %v757
        %vm760 = vcmp.eq.f32.partialorder %v664, 0.0
        %v761 = vand.u32 %v664, 2147483648
        %v762 = vsel %vm760, %v761, %v759
        %v763 = vrsqrt.pop %v665
        %v764 = vmul.f32 %v763, %v665
        %v765 = vmul.f32 %v764, %v763
        %v766 = vmul.f32 0.5, %v765
        %v767 = vsub.f32 1.5, %v766
        %v768 = vmul.f32 %v763, %v767
        %v769 = vmul.f32 %v665, %v768
        %vm770 = vcmp.eq.f32.partialorder %v665, inf
        %v771 = vsel %vm770, %v665, %v769
        %vm772 = vcmp.eq.f32.partialorder %v665, 0.0
        %v773 = vand.u32 %v665, 2147483648
        %v774 = vsel %vm772, %v773, %v771
        %v775 = vrsqrt.pop %v666
        %v776 = vmul.f32 %v775, %v666
        %v777 = vmul.f32 %v776, %v775
        %v778 = vmul.f32 0.5, %v777
        %v779 = vsub.f32 1.5, %v778
        %v780 = vmul.f32 %v775, %v779
        %v781 = vmul.f32 %v666, %v780
        %vm782 = vcmp.eq.f32.partialorder %v666, inf
        %v783 = vsel %vm782, %v666, %v781
        %vm784 = vcmp.eq.f32.partialorder %v666, 0.0
        %v785 = vand.u32 %v666, 2147483648
        %v786 = vsel %vm784, %v785, %v783
        %v787 = vrsqrt.pop %v667
        %v788 = vmul.f32 %v787, %v667
        %v789 = vmul.f32 %v788, %v787
        %v790 = vmul.f32 0.5, %v789
        %v791 = vsub.f32 1.5, %v790
        %v792 = vmul.f32 %v787, %v791
        %v793 = vmul.f32 %v667, %v792
        %vm794 = vcmp.eq.f32.partialorder %v667, inf
        %v795 = vsel %vm794, %v667, %v793
        %vm796 = vcmp.eq.f32.partialorder %v667, 0.0
        %v797 = vand.u32 %v667, 2147483648
        %v798 = vsel %vm796, %v797, %v795
        %v799 = vrsqrt.pop %v668
        %v800 = vmul.f32 %v799, %v668
        %v801 = vmul.f32 %v800, %v799
        %v802 = vmul.f32 0.5, %v801
        %v803 = vsub.f32 1.5, %v802
        %v804 = vmul.f32 %v799, %v803
        %v805 = vmul.f32 %v668, %v804
        %vm806 = vcmp.eq.f32.partialorder %v668, inf
        %v807 = vsel %vm806, %v668, %v805
        %vm808 = vcmp.eq.f32.partialorder %v668, 0.0
        %v809 = vand.u32 %v668, 2147483648
        %v810 = vsel %vm808, %v809, %v807
        %v811 = vrsqrt.pop %v669
        %v812 = vmul.f32 %v811, %v669
        %v813 = vmul.f32 %v812, %v811
        %v814 = vmul.f32 0.5, %v813
        %v815 = vsub.f32 1.5, %v814
        %v816 = vmul.f32 %v811, %v815
        %v817 = vmul.f32 %v669, %v816
        %vm818 = vcmp.eq.f32.partialorder %v669, inf
        %v819 = vsel %vm818, %v669, %v817
        %vm820 = vcmp.eq.f32.partialorder %v669, 0.0
        %v821 = vand.u32 %v669, 2147483648
        %v822 = vsel %vm820, %v821, %v819
        %v823 = vrsqrt.pop %v670
        %v824 = vmul.f32 %v823, %v670
        %v825 = vmul.f32 %v824, %v823
        %v826 = vmul.f32 0.5, %v825
        %v827 = vsub.f32 1.5, %v826
        %v828 = vmul.f32 %v823, %v827
        %v829 = vmul.f32 %v670, %v828
        %vm830 = vcmp.eq.f32.partialorder %v670, inf
        %v831 = vsel %vm830, %v670, %v829
        %vm832 = vcmp.eq.f32.partialorder %v670, 0.0
        %v833 = vand.u32 %v670, 2147483648
        %v834 = vsel %vm832, %v833, %v831
        %v835 = vrsqrt.pop %v671
        %v836 = vmul.f32 %v835, %v671
        %v837 = vmul.f32 %v836, %v835
        %v838 = vmul.f32 0.5, %v837
        %v839 = vsub.f32 1.5, %v838
        %v840 = vmul.f32 %v835, %v839
        %v841 = vmul.f32 %v671, %v840
        %vm842 = vcmp.eq.f32.partialorder %v671, inf
        %v843 = vsel %vm842, %v671, %v841
        %vm844 = vcmp.eq.f32.partialorder %v671, 0.0
        %v845 = vand.u32 %v671, 2147483648
        %v846 = vsel %vm844, %v845, %v843
        %v847 = vrsqrt.pop %v672
        %v848 = vmul.f32 %v847, %v672
        %v849 = vmul.f32 %v848, %v847
        %v850 = vmul.f32 0.5, %v849
        %v851 = vsub.f32 1.5, %v850
        %v852 = vmul.f32 %v847, %v851
        %v853 = vmul.f32 %v672, %v852
        %vm854 = vcmp.eq.f32.partialorder %v672, inf
        %v855 = vsel %vm854, %v672, %v853
        %vm856 = vcmp.eq.f32.partialorder %v672, 0.0
        %v857 = vand.u32 %v672, 2147483648
        %v858 = vsel %vm856, %v857, %v855
        %v859 = vrsqrt.pop %v673
        %v860 = vmul.f32 %v859, %v673
        %v861 = vmul.f32 %v860, %v859
        %v862 = vmul.f32 0.5, %v861
        %v863 = vsub.f32 1.5, %v862
        %v864 = vmul.f32 %v859, %v863
        %v865 = vmul.f32 %v673, %v864
        %vm866 = vcmp.eq.f32.partialorder %v673, inf
        %v867 = vsel %vm866, %v673, %v865
        %vm868 = vcmp.eq.f32.partialorder %v673, 0.0
        %v869 = vand.u32 %v673, 2147483648
        %v870 = vsel %vm868, %v869, %v867
        %v871 = vrsqrt.pop %v674
        %v872 = vmul.f32 %v871, %v674
        %v873 = vmul.f32 %v872, %v871
        %v874 = vmul.f32 0.5, %v873
        %v875 = vsub.f32 1.5, %v874
        %v876 = vmul.f32 %v871, %v875
        %v877 = vmul.f32 %v674, %v876
        %vm878 = vcmp.eq.f32.partialorder %v674, inf
        %v879 = vsel %vm878, %v674, %v877
        %vm880 = vcmp.eq.f32.partialorder %v674, 0.0
        %v881 = vand.u32 %v674, 2147483648
        %v882 = vsel %vm880, %v881, %v879
        %v883 = vrsqrt.pop %v675
        %v884 = vmul.f32 %v883, %v675
        %v885 = vmul.f32 %v884, %v883
        %v886 = vmul.f32 0.5, %v885
        %v887 = vsub.f32 1.5, %v886
        %v888 = vmul.f32 %v883, %v887
        %v889 = vmul.f32 %v675, %v888
        %vm890 = vcmp.eq.f32.partialorder %v675, inf
        %v891 = vsel %vm890, %v675, %v889
        %vm892 = vcmp.eq.f32.partialorder %v675, 0.0
        %v893 = vand.u32 %v675, 2147483648
        %v894 = vsel %vm892, %v893, %v891
        %v895 = vrsqrt.pop %v676
        %v896 = vmul.f32 %v895, %v676
        %v897 = vmul.f32 %v896, %v895
        %v898 = vmul.f32 0.5, %v897
        %v899 = vsub.f32 1.5, %v898
        %v900 = vmul.f32 %v895, %v899
        %v901 = vmul.f32 %v676, %v900
        %vm902 = vcmp.eq.f32.partialorder %v676, inf
        %v903 = vsel %vm902, %v676, %v901
        %vm904 = vcmp.eq.f32.partialorder %v676, 0.0
        %v905 = vand.u32 %v676, 2147483648
        %v906 = vsel %vm904, %v905, %v903
        %v907 = vrsqrt.pop %v677
        %v908 = vmul.f32 %v907, %v677
        %v909 = vmul.f32 %v908, %v907
        %v910 = vmul.f32 0.5, %v909
        %v911 = vsub.f32 1.5, %v910
        %v912 = vmul.f32 %v907, %v911
        %v913 = vmul.f32 %v677, %v912
        %vm914 = vcmp.eq.f32.partialorder %v677, inf
        %v915 = vsel %vm914, %v677, %v913
        %vm916 = vcmp.eq.f32.partialorder %v677, 0.0
        %v917 = vand.u32 %v677, 2147483648
        %v918 = vsel %vm916, %v917, %v915
        %v919 = vrsqrt.pop %v678
        %v920 = vmul.f32 %v919, %v678
        %v921 = vmul.f32 %v920, %v919
        %v922 = vmul.f32 0.5, %v921
        %v923 = vsub.f32 1.5, %v922
        %v924 = vmul.f32 %v919, %v923
        %v925 = vmul.f32 %v678, %v924
        %vm926 = vcmp.eq.f32.partialorder %v678, inf
        %v927 = vsel %vm926, %v678, %v925
        %vm928 = vcmp.eq.f32.partialorder %v678, 0.0
        %v929 = vand.u32 %v678, 2147483648
        %v930 = vsel %vm928, %v929, %v927
        %v931 = vrsqrt.pop %v679
        %v932 = vmul.f32 %v931, %v679
        %v933 = vmul.f32 %v932, %v931
        %v934 = vmul.f32 0.5, %v933
        %v935 = vsub.f32 1.5, %v934
        %v936 = vmul.f32 %v931, %v935
        %v937 = vmul.f32 %v679, %v936
        %vm938 = vcmp.eq.f32.partialorder %v679, inf
        %v939 = vsel %vm938, %v679, %v937
        %vm940 = vcmp.eq.f32.partialorder %v679, 0.0
        %v941 = vand.u32 %v679, 2147483648
        %v942 = vsel %vm940, %v941, %v939
        %v943 = vrsqrt.pop %v680
        %v944 = vmul.f32 %v943, %v680
        %v945 = vmul.f32 %v944, %v943
        %v946 = vmul.f32 0.5, %v945
        %v947 = vsub.f32 1.5, %v946
        %v948 = vmul.f32 %v943, %v947
        %v949 = vmul.f32 %v680, %v948
        %vm950 = vcmp.eq.f32.partialorder %v680, inf
        %v951 = vsel %vm950, %v680, %v949
        %vm952 = vcmp.eq.f32.partialorder %v680, 0.0
        %v953 = vand.u32 %v680, 2147483648
        %v954 = vsel %vm952, %v953, %v951
        %v955 = vrsqrt.pop %v681
        %v956 = vmul.f32 %v955, %v681
        %v957 = vmul.f32 %v956, %v955
        %v958 = vmul.f32 0.5, %v957
        %v959 = vsub.f32 1.5, %v958
        %v960 = vmul.f32 %v955, %v959
        %v961 = vmul.f32 %v681, %v960
        %vm962 = vcmp.eq.f32.partialorder %v681, inf
        %v963 = vsel %vm962, %v681, %v961
        %vm964 = vcmp.eq.f32.partialorder %v681, 0.0
        %v965 = vand.u32 %v681, 2147483648
        %v966 = vsel %vm964, %v965, %v963
        %v967 = vrsqrt.pop %v682
        %v968 = vmul.f32 %v967, %v682
        %v969 = vmul.f32 %v968, %v967
        %v970 = vmul.f32 0.5, %v969
        %v971 = vsub.f32 1.5, %v970
        %v972 = vmul.f32 %v967, %v971
        %v973 = vmul.f32 %v682, %v972
        %vm974 = vcmp.eq.f32.partialorder %v682, inf
        %v975 = vsel %vm974, %v682, %v973
        %vm976 = vcmp.eq.f32.partialorder %v682, 0.0
        %v977 = vand.u32 %v682, 2147483648
        %v978 = vsel %vm976, %v977, %v975
        %v979 = vrsqrt.pop %v683
        %v980 = vmul.f32 %v979, %v683
        %v981 = vmul.f32 %v980, %v979
        %v982 = vmul.f32 0.5, %v981
        %v983 = vsub.f32 1.5, %v982
        %v984 = vmul.f32 %v979, %v983
        %v985 = vmul.f32 %v683, %v984
        %vm986 = vcmp.eq.f32.partialorder %v683, inf
        %v987 = vsel %vm986, %v683, %v985
        %vm988 = vcmp.eq.f32.partialorder %v683, 0.0
        %v989 = vand.u32 %v683, 2147483648
        %v990 = vsel %vm988, %v989, %v987
        %v991 = vrsqrt.pop %v684
        %v992 = vmul.f32 %v991, %v684
        %v993 = vmul.f32 %v992, %v991
        %v994 = vmul.f32 0.5, %v993
        %v995 = vsub.f32 1.5, %v994
        %v996 = vmul.f32 %v991, %v995
        %v997 = vmul.f32 %v684, %v996
        %vm998 = vcmp.eq.f32.partialorder %v684, inf
        %v999 = vsel %vm998, %v684, %v997
        %vm1000 = vcmp.eq.f32.partialorder %v684, 0.0
        %v1001 = vand.u32 %v684, 2147483648
        %v1002 = vsel %vm1000, %v1001, %v999
        %v1003 = vrsqrt.pop %v685
        %v1004 = vmul.f32 %v1003, %v685
        %v1005 = vmul.f32 %v1004, %v1003
        %v1006 = vmul.f32 0.5, %v1005
        %v1007 = vsub.f32 1.5, %v1006
        %v1008 = vmul.f32 %v1003, %v1007
        %v1009 = vmul.f32 %v685, %v1008
        %vm1010 = vcmp.eq.f32.partialorder %v685, inf
        %v1011 = vsel %vm1010, %v685, %v1009
        %vm1012 = vcmp.eq.f32.partialorder %v685, 0.0
        %v1013 = vand.u32 %v685, 2147483648
        %v1014 = vsel %vm1012, %v1013, %v1011
        %v1015 = vrsqrt.pop %v686
        %v1016 = vmul.f32 %v1015, %v686
        %v1017 = vmul.f32 %v1016, %v1015
        %v1018 = vmul.f32 0.5, %v1017
        %v1019 = vsub.f32 1.5, %v1018
        %v1020 = vmul.f32 %v1015, %v1019
        %v1021 = vmul.f32 %v686, %v1020
        %vm1022 = vcmp.eq.f32.partialorder %v686, inf
        %v1023 = vsel %vm1022, %v686, %v1021
        %vm1024 = vcmp.eq.f32.partialorder %v686, 0.0
        %v1025 = vand.u32 %v686, 2147483648
        %v1026 = vsel %vm1024, %v1025, %v1023
        %v1027 = vrsqrt.pop %v687
        %v1028 = vmul.f32 %v1027, %v687
        %v1029 = vmul.f32 %v1028, %v1027
        %v1030 = vmul.f32 0.5, %v1029
        %v1031 = vsub.f32 1.5, %v1030
        %v1032 = vmul.f32 %v1027, %v1031
        %v1033 = vmul.f32 %v687, %v1032
        %vm1034 = vcmp.eq.f32.partialorder %v687, inf
        %v1035 = vsel %vm1034, %v687, %v1033
        %vm1036 = vcmp.eq.f32.partialorder %v687, 0.0
        %v1037 = vand.u32 %v687, 2147483648
        %v1038 = vsel %vm1036, %v1037, %v1035
        %v1039 = vrsqrt.pop %v688
        %v1040 = vmul.f32 %v1039, %v688
        %v1041 = vmul.f32 %v1040, %v1039
        %v1042 = vmul.f32 0.5, %v1041
        %v1043 = vsub.f32 1.5, %v1042
        %v1044 = vmul.f32 %v1039, %v1043
        %v1045 = vmul.f32 %v688, %v1044
        %vm1046 = vcmp.eq.f32.partialorder %v688, inf
        %v1047 = vsel %vm1046, %v688, %v1045
        %vm1048 = vcmp.eq.f32.partialorder %v688, 0.0
        %v1049 = vand.u32 %v688, 2147483648
        %v1050 = vsel %vm1048, %v1049, %v1047
        %v1051 = vrsqrt.pop %v689
        %v1052 = vmul.f32 %v1051, %v689
        %v1053 = vmul.f32 %v1052, %v1051
        %v1054 = vmul.f32 0.5, %v1053
        %v1055 = vsub.f32 1.5, %v1054
        %v1056 = vmul.f32 %v1051, %v1055
        %v1057 = vmul.f32 %v689, %v1056
        %vm1058 = vcmp.eq.f32.partialorder %v689, inf
        %v1059 = vsel %vm1058, %v689, %v1057
        %vm1060 = vcmp.eq.f32.partialorder %v689, 0.0
        %v1061 = vand.u32 %v689, 2147483648
        %v1062 = vsel %vm1060, %v1061, %v1059
        %v1063 = vrsqrt.pop %v690
        %v1064 = vmul.f32 %v1063, %v690
        %v1065 = vmul.f32 %v1064, %v1063
        %v1066 = vmul.f32 0.5, %v1065
        %v1067 = vsub.f32 1.5, %v1066
        %v1068 = vmul.f32 %v1063, %v1067
        %v1069 = vmul.f32 %v690, %v1068
        %vm1070 = vcmp.eq.f32.partialorder %v690, inf
        %v1071 = vsel %vm1070, %v690, %v1069
        %vm1072 = vcmp.eq.f32.partialorder %v690, 0.0
        %v1073 = vand.u32 %v690, 2147483648
        %v1074 = vsel %vm1072, %v1073, %v1071
        %v1075 = vadd.f32 %v595, %v702
        %v1076 = vadd.f32 %v596, %v714
        %v1077 = vadd.f32 %v597, %v726
        %v1078 = vadd.f32 %v598, %v738
        %v1079 = vadd.f32 %v599, %v750
        %v1080 = vadd.f32 %v600, %v762
        %v1081 = vadd.f32 %v601, %v774
        %v1082 = vadd.f32 %v602, %v786
        %v1083 = vadd.f32 %v603, %v798
        %v1084 = vadd.f32 %v604, %v810
        %v1085 = vadd.f32 %v605, %v822
        %v1086 = vadd.f32 %v606, %v834
        %v1087 = vadd.f32 %v607, %v846
        %v1088 = vadd.f32 %v608, %v858
        %v1089 = vadd.f32 %v609, %v870
        %v1090 = vadd.f32 %v610, %v882
        %v1091 = vadd.f32 %v611, %v894
        %v1092 = vadd.f32 %v612, %v906
        %v1093 = vadd.f32 %v613, %v918
        %v1094 = vadd.f32 %v614, %v930
        %v1095 = vadd.f32 %v615, %v942
        %v1096 = vadd.f32 %v616, %v954
        %v1097 = vadd.f32 %v617, %v966
        %v1098 = vadd.f32 %v618, %v978
        %v1099 = vadd.f32 %v619, %v990
        %v1100 = vadd.f32 %v620, %v1002
        %v1101 = vadd.f32 %v621, %v1014
        %v1102 = vadd.f32 %v622, %v1026
        %v1103 = vadd.f32 %v623, %v1038
        %v1104 = vadd.f32 %v624, %v1050
        %v1105 = vadd.f32 %v625, %v1062
        %v1106 = vadd.f32 %v626, %v1074
        %v1107 = vadd.f32 %v1075, 1.0
        %v1108 = vlog2.pop %v1107
        %v1109 = vmul.f32 %v1108, 0.6931472
        %v1110 = vmul.f32 -0.5, %v1075
        %v1111 = vadd.f32 %v1110, 1.0
        %v1112 = vmul.f32 %v1111, %v1075
        %v1113 = vand.u32 2147483647, %v1075
        %vm1114 = vcmp.lt.f32.partialorder %v1113, 0.0004427343
        %v1115 = vsel %vm1114, %v1112, %v1109
        %v1116 = vadd.f32 %v1076, 1.0
        %v1117 = vlog2.pop %v1116
        %v1118 = vmul.f32 %v1117, 0.6931472
        %v1119 = vmul.f32 -0.5, %v1076
        %v1120 = vadd.f32 %v1119, 1.0
        %v1121 = vmul.f32 %v1120, %v1076
        %v1122 = vand.u32 2147483647, %v1076
        %vm1123 = vcmp.lt.f32.partialorder %v1122, 0.0004427343
        %v1124 = vsel %vm1123, %v1121, %v1118
        %v1125 = vadd.f32 %v1077, 1.0
        %v1126 = vlog2.pop %v1125
        %v1127 = vmul.f32 %v1126, 0.6931472
        %v1128 = vmul.f32 -0.5, %v1077
        %v1129 = vadd.f32 %v1128, 1.0
        %v1130 = vmul.f32 %v1129, %v1077
        %v1131 = vand.u32 2147483647, %v1077
        %vm1132 = vcmp.lt.f32.partialorder %v1131, 0.0004427343
        %v1133 = vsel %vm1132, %v1130, %v1127
        %v1134 = vadd.f32 %v1078, 1.0
        %v1135 = vlog2.pop %v1134
        %v1136 = vmul.f32 %v1135, 0.6931472
        %v1137 = vmul.f32 -0.5, %v1078
        %v1138 = vadd.f32 %v1137, 1.0
        %v1139 = vmul.f32 %v1138, %v1078
        %v1140 = vand.u32 2147483647, %v1078
        %vm1141 = vcmp.lt.f32.partialorder %v1140, 0.0004427343
        %v1142 = vsel %vm1141, %v1139, %v1136
        %v1143 = vadd.f32 %v1079, 1.0
        %v1144 = vlog2.pop %v1143
        %v1145 = vmul.f32 %v1144, 0.6931472
        %v1146 = vmul.f32 -0.5, %v1079
        %v1147 = vadd.f32 %v1146, 1.0
        %v1148 = vmul.f32 %v1147, %v1079
        %v1149 = vand.u32 2147483647, %v1079
        %vm1150 = vcmp.lt.f32.partialorder %v1149, 0.0004427343
        %v1151 = vsel %vm1150, %v1148, %v1145
        %v1152 = vadd.f32 %v1080, 1.0
        %v1153 = vlog2.pop %v1152
        %v1154 = vmul.f32 %v1153, 0.6931472
        %v1155 = vmul.f32 -0.5, %v1080
        %v1156 = vadd.f32 %v1155, 1.0
        %v1157 = vmul.f32 %v1156, %v1080
        %v1158 = vand.u32 2147483647, %v1080
        %vm1159 = vcmp.lt.f32.partialorder %v1158, 0.0004427343
        %v1160 = vsel %vm1159, %v1157, %v1154
        %v1161 = vadd.f32 %v1081, 1.0
        %v1162 = vlog2.pop %v1161
        %v1163 = vmul.f32 %v1162, 0.6931472
        %v1164 = vmul.f32 -0.5, %v1081
        %v1165 = vadd.f32 %v1164, 1.0
        %v1166 = vmul.f32 %v1165, %v1081
        %v1167 = vand.u32 2147483647, %v1081
        %vm1168 = vcmp.lt.f32.partialorder %v1167, 0.0004427343
        %v1169 = vsel %vm1168, %v1166, %v1163
        %v1170 = vadd.f32 %v1082, 1.0
        %v1171 = vlog2.pop %v1170
        %v1172 = vmul.f32 %v1171, 0.6931472
        %v1173 = vmul.f32 -0.5, %v1082
        %v1174 = vadd.f32 %v1173, 1.0
        %v1175 = vmul.f32 %v1174, %v1082
        %v1176 = vand.u32 2147483647, %v1082
        %vm1177 = vcmp.lt.f32.partialorder %v1176, 0.0004427343
        %v1178 = vsel %vm1177, %v1175, %v1172
        %v1179 = vadd.f32 %v1083, 1.0
        %v1180 = vlog2.pop %v1179
        %v1181 = vmul.f32 %v1180, 0.6931472
        %v1182 = vmul.f32 -0.5, %v1083
        %v1183 = vadd.f32 %v1182, 1.0
        %v1184 = vmul.f32 %v1183, %v1083
        %v1185 = vand.u32 2147483647, %v1083
        %vm1186 = vcmp.lt.f32.partialorder %v1185, 0.0004427343
        %v1187 = vsel %vm1186, %v1184, %v1181
        %v1188 = vadd.f32 %v1084, 1.0
        %v1189 = vlog2.pop %v1188
        %v1190 = vmul.f32 %v1189, 0.6931472
        %v1191 = vmul.f32 -0.5, %v1084
        %v1192 = vadd.f32 %v1191, 1.0
        %v1193 = vmul.f32 %v1192, %v1084
        %v1194 = vand.u32 2147483647, %v1084
        %vm1195 = vcmp.lt.f32.partialorder %v1194, 0.0004427343
        %v1196 = vsel %vm1195, %v1193, %v1190
        %v1197 = vadd.f32 %v1085, 1.0
        %v1198 = vlog2.pop %v1197
        %v1199 = vmul.f32 %v1198, 0.6931472
        %v1200 = vmul.f32 -0.5, %v1085
        %v1201 = vadd.f32 %v1200, 1.0
        %v1202 = vmul.f32 %v1201, %v1085
        %v1203 = vand.u32 2147483647, %v1085
        %vm1204 = vcmp.lt.f32.partialorder %v1203, 0.0004427343
        %v1205 = vsel %vm1204, %v1202, %v1199
        %v1206 = vadd.f32 %v1086, 1.0
        %v1207 = vlog2.pop %v1206
        %v1208 = vmul.f32 %v1207, 0.6931472
        %v1209 = vmul.f32 -0.5, %v1086
        %v1210 = vadd.f32 %v1209, 1.0
        %v1211 = vmul.f32 %v1210, %v1086
        %v1212 = vand.u32 2147483647, %v1086
        %vm1213 = vcmp.lt.f32.partialorder %v1212, 0.0004427343
        %v1214 = vsel %vm1213, %v1211, %v1208
        %v1215 = vadd.f32 %v1087, 1.0
        %v1216 = vlog2.pop %v1215
        %v1217 = vmul.f32 %v1216, 0.6931472
        %v1218 = vmul.f32 -0.5, %v1087
        %v1219 = vadd.f32 %v1218, 1.0
        %v1220 = vmul.f32 %v1219, %v1087
        %v1221 = vand.u32 2147483647, %v1087
        %vm1222 = vcmp.lt.f32.partialorder %v1221, 0.0004427343
        %v1223 = vsel %vm1222, %v1220, %v1217
        %v1224 = vadd.f32 %v1088, 1.0
        %v1225 = vlog2.pop %v1224
        %v1226 = vmul.f32 %v1225, 0.6931472
        %v1227 = vmul.f32 -0.5, %v1088
        %v1228 = vadd.f32 %v1227, 1.0
        %v1229 = vmul.f32 %v1228, %v1088
        %v1230 = vand.u32 2147483647, %v1088
        %vm1231 = vcmp.lt.f32.partialorder %v1230, 0.0004427343
        %v1232 = vsel %vm1231, %v1229, %v1226
        %v1233 = vadd.f32 %v1089, 1.0
        %v1234 = vlog2.pop %v1233
        %v1235 = vmul.f32 %v1234, 0.6931472
        %v1236 = vmul.f32 -0.5, %v1089
        %v1237 = vadd.f32 %v1236, 1.0
        %v1238 = vmul.f32 %v1237, %v1089
        %v1239 = vand.u32 2147483647, %v1089
        %vm1240 = vcmp.lt.f32.partialorder %v1239, 0.0004427343
        %v1241 = vsel %vm1240, %v1238, %v1235
        %v1242 = vadd.f32 %v1090, 1.0
        %v1243 = vlog2.pop %v1242
        %v1244 = vmul.f32 %v1243, 0.6931472
        %v1245 = vmul.f32 -0.5, %v1090
        %v1246 = vadd.f32 %v1245, 1.0
        %v1247 = vmul.f32 %v1246, %v1090
        %v1248 = vand.u32 2147483647, %v1090
        %vm1249 = vcmp.lt.f32.partialorder %v1248, 0.0004427343
        %v1250 = vsel %vm1249, %v1247, %v1244
        %v1251 = vadd.f32 %v1091, 1.0
        %v1252 = vlog2.pop %v1251
        %v1253 = vmul.f32 %v1252, 0.6931472
        %v1254 = vmul.f32 -0.5, %v1091
        %v1255 = vadd.f32 %v1254, 1.0
        %v1256 = vmul.f32 %v1255, %v1091
        %v1257 = vand.u32 2147483647, %v1091
        %vm1258 = vcmp.lt.f32.partialorder %v1257, 0.0004427343
        %v1259 = vsel %vm1258, %v1256, %v1253
        %v1260 = vadd.f32 %v1092, 1.0
        %v1261 = vlog2.pop %v1260
        %v1262 = vmul.f32 %v1261, 0.6931472
        %v1263 = vmul.f32 -0.5, %v1092
        %v1264 = vadd.f32 %v1263, 1.0
        %v1265 = vmul.f32 %v1264, %v1092
        %v1266 = vand.u32 2147483647, %v1092
        %vm1267 = vcmp.lt.f32.partialorder %v1266, 0.0004427343
        %v1268 = vsel %vm1267, %v1265, %v1262
        %v1269 = vadd.f32 %v1093, 1.0
        %v1270 = vlog2.pop %v1269
        %v1271 = vmul.f32 %v1270, 0.6931472
        %v1272 = vmul.f32 -0.5, %v1093
        %v1273 = vadd.f32 %v1272, 1.0
        %v1274 = vmul.f32 %v1273, %v1093
        %v1275 = vand.u32 2147483647, %v1093
        %vm1276 = vcmp.lt.f32.partialorder %v1275, 0.0004427343
        %v1277 = vsel %vm1276, %v1274, %v1271
        %v1278 = vadd.f32 %v1094, 1.0
        %v1279 = vlog2.pop %v1278
        %v1280 = vmul.f32 %v1279, 0.6931472
        %v1281 = vmul.f32 -0.5, %v1094
        %v1282 = vadd.f32 %v1281, 1.0
        %v1283 = vmul.f32 %v1282, %v1094
        %v1284 = vand.u32 2147483647, %v1094
        %vm1285 = vcmp.lt.f32.partialorder %v1284, 0.0004427343
        %v1286 = vsel %vm1285, %v1283, %v1280
        %v1287 = vadd.f32 %v1095, 1.0
        %v1288 = vlog2.pop %v1287
        %v1289 = vmul.f32 %v1288, 0.6931472
        %v1290 = vmul.f32 -0.5, %v1095
        %v1291 = vadd.f32 %v1290, 1.0
        %v1292 = vmul.f32 %v1291, %v1095
        %v1293 = vand.u32 2147483647, %v1095
        %vm1294 = vcmp.lt.f32.partialorder %v1293, 0.0004427343
        %v1295 = vsel %vm1294, %v1292, %v1289
        %v1296 = vadd.f32 %v1096, 1.0
        %v1297 = vlog2.pop %v1296
        %v1298 = vmul.f32 %v1297, 0.6931472
        %v1299 = vmul.f32 -0.5, %v1096
        %v1300 = vadd.f32 %v1299, 1.0
        %v1301 = vmul.f32 %v1300, %v1096
        %v1302 = vand.u32 2147483647, %v1096
        %vm1303 = vcmp.lt.f32.partialorder %v1302, 0.0004427343
        %v1304 = vsel %vm1303, %v1301, %v1298
        %v1305 = vadd.f32 %v1097, 1.0
        %v1306 = vlog2.pop %v1305
        %v1307 = vmul.f32 %v1306, 0.6931472
        %v1308 = vmul.f32 -0.5, %v1097
        %v1309 = vadd.f32 %v1308, 1.0
        %v1310 = vmul.f32 %v1309, %v1097
        %v1311 = vand.u32 2147483647, %v1097
        %vm1312 = vcmp.lt.f32.partialorder %v1311, 0.0004427343
        %v1313 = vsel %vm1312, %v1310, %v1307
        %v1314 = vadd.f32 %v1098, 1.0
        %v1315 = vlog2.pop %v1314
        %v1316 = vmul.f32 %v1315, 0.6931472
        %v1317 = vmul.f32 -0.5, %v1098
        %v1318 = vadd.f32 %v1317, 1.0
        %v1319 = vmul.f32 %v1318, %v1098
        %v1320 = vand.u32 2147483647, %v1098
        %vm1321 = vcmp.lt.f32.partialorder %v1320, 0.0004427343
        %v1322 = vsel %vm1321, %v1319, %v1316
        %v1323 = vadd.f32 %v1099, 1.0
        %v1324 = vlog2.pop %v1323
        %v1325 = vmul.f32 %v1324, 0.6931472
        %v1326 = vmul.f32 -0.5, %v1099
        %v1327 = vadd.f32 %v1326, 1.0
        %v1328 = vmul.f32 %v1327, %v1099
        %v1329 = vand.u32 2147483647, %v1099
        %vm1330 = vcmp.lt.f32.partialorder %v1329, 0.0004427343
        %v1331 = vsel %vm1330, %v1328, %v1325
        %v1332 = vadd.f32 %v1100, 1.0
        %v1333 = vlog2.pop %v1332
        %v1334 = vmul.f32 %v1333, 0.6931472
        %v1335 = vmul.f32 -0.5, %v1100
        %v1336 = vadd.f32 %v1335, 1.0
        %v1337 = vmul.f32 %v1336, %v1100
        %v1338 = vand.u32 2147483647, %v1100
        %vm1339 = vcmp.lt.f32.partialorder %v1338, 0.0004427343
        %v1340 = vsel %vm1339, %v1337, %v1334
        %v1341 = vadd.f32 %v1101, 1.0
        %v1342 = vlog2.pop %v1341
        %v1343 = vmul.f32 %v1342, 0.6931472
        %v1344 = vmul.f32 -0.5, %v1101
        %v1345 = vadd.f32 %v1344, 1.0
        %v1346 = vmul.f32 %v1345, %v1101
        %v1347 = vand.u32 2147483647, %v1101
        %vm1348 = vcmp.lt.f32.partialorder %v1347, 0.0004427343
        %v1349 = vsel %vm1348, %v1346, %v1343
        %v1350 = vadd.f32 %v1102, 1.0
        %v1351 = vlog2.pop %v1350
        %v1352 = vmul.f32 %v1351, 0.6931472
        %v1353 = vmul.f32 -0.5, %v1102
        %v1354 = vadd.f32 %v1353, 1.0
        %v1355 = vmul.f32 %v1354, %v1102
        %v1356 = vand.u32 2147483647, %v1102
        %vm1357 = vcmp.lt.f32.partialorder %v1356, 0.0004427343
        %v1358 = vsel %vm1357, %v1355, %v1352
        %v1359 = vadd.f32 %v1103, 1.0
        %v1360 = vlog2.pop %v1359
        %v1361 = vmul.f32 %v1360, 0.6931472
        %v1362 = vmul.f32 -0.5, %v1103
        %v1363 = vadd.f32 %v1362, 1.0
        %v1364 = vmul.f32 %v1363, %v1103
        %v1365 = vand.u32 2147483647, %v1103
        %vm1366 = vcmp.lt.f32.partialorder %v1365, 0.0004427343
        %v1367 = vsel %vm1366, %v1364, %v1361
        %v1368 = vadd.f32 %v1104, 1.0
        %v1369 = vlog2.pop %v1368
        %v1370 = vmul.f32 %v1369, 0.6931472
        %v1371 = vmul.f32 -0.5, %v1104
        %v1372 = vadd.f32 %v1371, 1.0
        %v1373 = vmul.f32 %v1372, %v1104
        %v1374 = vand.u32 2147483647, %v1104
        %vm1375 = vcmp.lt.f32.partialorder %v1374, 0.0004427343
        %v1376 = vsel %vm1375, %v1373, %v1370
        %v1377 = vadd.f32 %v1105, 1.0
        %v1378 = vlog2.pop %v1377
        %v1379 = vmul.f32 %v1378, 0.6931472
        %v1380 = vmul.f32 -0.5, %v1105
        %v1381 = vadd.f32 %v1380, 1.0
        %v1382 = vmul.f32 %v1381, %v1105
        %v1383 = vand.u32 2147483647, %v1105
        %vm1384 = vcmp.lt.f32.partialorder %v1383, 0.0004427343
        %v1385 = vsel %vm1384, %v1382, %v1379
        %v1386 = vadd.f32 %v1106, 1.0
        %v1387 = vlog2.pop %v1386
        %v1388 = vmul.f32 %v1387, 0.6931472
        %v1389 = vmul.f32 -0.5, %v1106
        %v1390 = vadd.f32 %v1389, 1.0
        %v1391 = vmul.f32 %v1390, %v1106
        %v1392 = vand.u32 2147483647, %v1106
        %vm1393 = vcmp.lt.f32.partialorder %v1392, 0.0004427343
        %v1394 = vsel %vm1393, %v1391, %v1388
        %v1395 = vmul.f32 %v1115, %v1115
        %v1396 = vmul.f32 %v1124, %v1124
        %v1397 = vmul.f32 %v1133, %v1133
        %v1398 = vmul.f32 %v1142, %v1142
        %v1399 = vmul.f32 %v1151, %v1151
        %v1400 = vmul.f32 %v1160, %v1160
        %v1401 = vmul.f32 %v1169, %v1169
        %v1402 = vmul.f32 %v1178, %v1178
        %v1403 = vmul.f32 %v1187, %v1187
        %v1404 = vmul.f32 %v1196, %v1196
        %v1405 = vmul.f32 %v1205, %v1205
        %v1406 = vmul.f32 %v1214, %v1214
        %v1407 = vmul.f32 %v1223, %v1223
        %v1408 = vmul.f32 %v1232, %v1232
        %v1409 = vmul.f32 %v1241, %v1241
        %v1410 = vmul.f32 %v1250, %v1250
        %v1411 = vmul.f32 %v1259, %v1259
        %v1412 = vmul.f32 %v1268, %v1268
        %v1413 = vmul.f32 %v1277, %v1277
        %v1414 = vmul.f32 %v1286, %v1286
        %v1415 = vmul.f32 %v1295, %v1295
        %v1416 = vmul.f32 %v1304, %v1304
        %v1417 = vmul.f32 %v1313, %v1313
        %v1418 = vmul.f32 %v1322, %v1322
        %v1419 = vmul.f32 %v1331, %v1331
        %v1420 = vmul.f32 %v1340, %v1340
        %v1421 = vmul.f32 %v1349, %v1349
        %v1422 = vmul.f32 %v1358, %v1358
        %v1423 = vmul.f32 %v1367, %v1367
        %v1424 = vmul.f32 %v1376, %v1376
        %v1425 = vmul.f32 %v1385, %v1385
        %v1426 = vmul.f32 %v1394, %v1394
        %s1427 = sld [smem:[#allocation3]]
        %s1428 = smax.f32 %s1427, 2.0
        %s1429 = smin.f32 %s1428, 5.0
        %v1430 = vstv %s1429
        %v1431 = vmul.f32 %v1430, 1.442695
        %v1432 = vpow.pop %v1431
        %s1433 = vtos %v1432
        %s1434 = ssub.f32 0.0, %s1433
        %v1435 = vstv %s1434
        %v1436 = vmul.f32 %v1395, %v1435
        %v1437 = vmul.f32 %v1396, %v1435
        %v1438 = vmul.f32 %v1397, %v1435
        %v1439 = vmul.f32 %v1398, %v1435
        %v1440 = vmul.f32 %v1399, %v1435
        %v1441 = vmul.f32 %v1400, %v1435
        %v1442 = vmul.f32 %v1401, %v1435
        %v1443 = vmul.f32 %v1402, %v1435
        %v1444 = vmul.f32 %v1403, %v1435
        %v1445 = vmul.f32 %v1404, %v1435
        %v1446 = vmul.f32 %v1405, %v1435
        %v1447 = vmul.f32 %v1406, %v1435
        %v1448 = vmul.f32 %v1407, %v1435
        %v1449 = vmul.f32 %v1408, %v1435
        %v1450 = vmul.f32 %v1409, %v1435
        %v1451 = vmul.f32 %v1410, %v1435
        %v1452 = vmul.f32 %v1411, %v1435
        %v1453 = vmul.f32 %v1412, %v1435
        %v1454 = vmul.f32 %v1413, %v1435
        %v1455 = vmul.f32 %v1414, %v1435
        %v1456 = vmul.f32 %v1415, %v1435
        %v1457 = vmul.f32 %v1416, %v1435
        %v1458 = vmul.f32 %v1417, %v1435
        %v1459 = vmul.f32 %v1418, %v1435
        %v1460 = vmul.f32 %v1419, %v1435
        %v1461 = vmul.f32 %v1420, %v1435
        %v1462 = vmul.f32 %v1421, %v1435
        %v1463 = vmul.f32 %v1422, %v1435
        %v1464 = vmul.f32 %v1423, %v1435
        %v1465 = vmul.f32 %v1424, %v1435
        %v1466 = vmul.f32 %v1425, %v1435
        %v1467 = vmul.f32 %v1426, %v1435
        %v1468 = vlaneseq
        %v1469 = vand.u32 %v1468, 127
        %v1470 = vadd.s32 %v1469, 128
        %v1471 = vlaneseq
        %v1472 = vshrl.u32 %v1471, 7
        %v1473 = vadd.s32 %v1472, 8
        %v1474 = vadd.s32 %v1472, 16
        %v1475 = vadd.s32 %v1472, 24
        %v1476 = vadd.s32 %v1472, 32
        %v1477 = vadd.s32 %v1472, 40
        %v1478 = vadd.s32 %v1472, 48
        %v1479 = vadd.s32 %v1472, 56
        %v1480 = vadd.s32 %v1472, 64
        %v1481 = vadd.s32 %v1472, 72
        %v1482 = vadd.s32 %v1472, 80
        %v1483 = vadd.s32 %v1472, 88
        %v1484 = vadd.s32 %v1472, 96
        %v1485 = vadd.s32 %v1472, 104
        %v1486 = vadd.s32 %v1472, 112
        %v1487 = vadd.s32 %v1472, 120
        %s1488 = smul.u32 %s25, 128
        %v1489 = vstv %s1488
        %v1490 = vadd.s32 %v1472, %v1489
        %v1491 = vadd.s32 %v1473, %v1489
        %v1492 = vadd.s32 %v1474, %v1489
        %v1493 = vadd.s32 %v1475, %v1489
        %v1494 = vadd.s32 %v1476, %v1489
        %v1495 = vadd.s32 %v1477, %v1489
        %v1496 = vadd.s32 %v1478, %v1489
        %v1497 = vadd.s32 %v1479, %v1489
        %v1498 = vadd.s32 %v1480, %v1489
        %v1499 = vadd.s32 %v1481, %v1489
        %v1500 = vadd.s32 %v1482, %v1489
        %v1501 = vadd.s32 %v1483, %v1489
        %v1502 = vadd.s32 %v1484, %v1489
        %v1503 = vadd.s32 %v1485, %v1489
        %v1504 = vadd.s32 %v1486, %v1489
        %v1505 = vadd.s32 %v1487, %v1489
        %v1506 = vmul.u32 %v1490, 2654435769
        %v1507 = vmul.u32 %v1491, 2654435769
        %v1508 = vmul.u32 %v1492, 2654435769
        %v1509 = vmul.u32 %v1493, 2654435769
        %v1510 = vmul.u32 %v1494, 2654435769
        %v1511 = vmul.u32 %v1495, 2654435769
        %v1512 = vmul.u32 %v1496, 2654435769
        %v1513 = vmul.u32 %v1497, 2654435769
        %v1514 = vmul.u32 %v1498, 2654435769
        %v1515 = vmul.u32 %v1499, 2654435769
        %v1516 = vmul.u32 %v1500, 2654435769
        %v1517 = vmul.u32 %v1501, 2654435769
        %v1518 = vmul.u32 %v1502, 2654435769
        %v1519 = vmul.u32 %v1503, 2654435769
        %v1520 = vmul.u32 %v1504, 2654435769
        %v1521 = vmul.u32 %v1505, 2654435769
        %v1522 = vmul.u32 %v1469, 2146121005
        %v1523 = vmul.u32 %v1470, 2146121005
        %v1524 = vadd.s32 %v1506, %v1522
        %v1525 = vadd.s32 %v1506, %v1523
        %v1526 = vadd.s32 %v1507, %v1522
        %v1527 = vadd.s32 %v1507, %v1523
        %v1528 = vadd.s32 %v1508, %v1522
        %v1529 = vadd.s32 %v1508, %v1523
        %v1530 = vadd.s32 %v1509, %v1522
        %v1531 = vadd.s32 %v1509, %v1523
        %v1532 = vadd.s32 %v1510, %v1522
        %v1533 = vadd.s32 %v1510, %v1523
        %v1534 = vadd.s32 %v1511, %v1522
        %v1535 = vadd.s32 %v1511, %v1523
        %v1536 = vadd.s32 %v1512, %v1522
        %v1537 = vadd.s32 %v1512, %v1523
        %v1538 = vadd.s32 %v1513, %v1522
        %v1539 = vadd.s32 %v1513, %v1523
        %v1540 = vadd.s32 %v1514, %v1522
        %v1541 = vadd.s32 %v1514, %v1523
        %v1542 = vadd.s32 %v1515, %v1522
        %v1543 = vadd.s32 %v1515, %v1523
        %v1544 = vadd.s32 %v1516, %v1522
        %v1545 = vadd.s32 %v1516, %v1523
        %v1546 = vadd.s32 %v1517, %v1522
        %v1547 = vadd.s32 %v1517, %v1523
        %v1548 = vadd.s32 %v1518, %v1522
        %v1549 = vadd.s32 %v1518, %v1523
        %v1550 = vadd.s32 %v1519, %v1522
        %v1551 = vadd.s32 %v1519, %v1523
        %v1552 = vadd.s32 %v1520, %v1522
        %v1553 = vadd.s32 %v1520, %v1523
        %v1554 = vadd.s32 %v1521, %v1522
        %v1555 = vadd.s32 %v1521, %v1523
        %s1556 = sld [smem:[#allocation2]]
        %v1557 = vstv %s1556
        %v1558 = vadd.s32 %v1524, %v1557
        %v1559 = vadd.s32 %v1525, %v1557
        %v1560 = vadd.s32 %v1526, %v1557
        %v1561 = vadd.s32 %v1527, %v1557
        %v1562 = vadd.s32 %v1528, %v1557
        %v1563 = vadd.s32 %v1529, %v1557
        %v1564 = vadd.s32 %v1530, %v1557
        %v1565 = vadd.s32 %v1531, %v1557
        %v1566 = vadd.s32 %v1532, %v1557
        %v1567 = vadd.s32 %v1533, %v1557
        %v1568 = vadd.s32 %v1534, %v1557
        %v1569 = vadd.s32 %v1535, %v1557
        %v1570 = vadd.s32 %v1536, %v1557
        %v1571 = vadd.s32 %v1537, %v1557
        %v1572 = vadd.s32 %v1538, %v1557
        %v1573 = vadd.s32 %v1539, %v1557
        %v1574 = vadd.s32 %v1540, %v1557
        %v1575 = vadd.s32 %v1541, %v1557
        %v1576 = vadd.s32 %v1542, %v1557
        %v1577 = vadd.s32 %v1543, %v1557
        %v1578 = vadd.s32 %v1544, %v1557
        %v1579 = vadd.s32 %v1545, %v1557
        %v1580 = vadd.s32 %v1546, %v1557
        %v1581 = vadd.s32 %v1547, %v1557
        %v1582 = vadd.s32 %v1548, %v1557
        %v1583 = vadd.s32 %v1549, %v1557
        %v1584 = vadd.s32 %v1550, %v1557
        %v1585 = vadd.s32 %v1551, %v1557
        %v1586 = vadd.s32 %v1552, %v1557
        %v1587 = vadd.s32 %v1553, %v1557
        %v1588 = vadd.s32 %v1554, %v1557
        %v1589 = vadd.s32 %v1555, %v1557
        %v1590 = vshrl.u32 %v1558, 16
        %v1591 = vshrl.u32 %v1559, 16
        %v1592 = vshrl.u32 %v1560, 16
        %v1593 = vshrl.u32 %v1561, 16
        %v1594 = vshrl.u32 %v1562, 16
        %v1595 = vshrl.u32 %v1563, 16
        %v1596 = vshrl.u32 %v1564, 16
        %v1597 = vshrl.u32 %v1565, 16
        %v1598 = vshrl.u32 %v1566, 16
        %v1599 = vshrl.u32 %v1567, 16
        %v1600 = vshrl.u32 %v1568, 16
        %v1601 = vshrl.u32 %v1569, 16
        %v1602 = vshrl.u32 %v1570, 16
        %v1603 = vshrl.u32 %v1571, 16
        %v1604 = vshrl.u32 %v1572, 16
        %v1605 = vshrl.u32 %v1573, 16
        %v1606 = vshrl.u32 %v1574, 16
        %v1607 = vshrl.u32 %v1575, 16
        %v1608 = vshrl.u32 %v1576, 16
        %v1609 = vshrl.u32 %v1577, 16
        %v1610 = vshrl.u32 %v1578, 16
        %v1611 = vshrl.u32 %v1579, 16
        %v1612 = vshrl.u32 %v1580, 16
        %v1613 = vshrl.u32 %v1581, 16
        %v1614 = vshrl.u32 %v1582, 16
        %v1615 = vshrl.u32 %v1583, 16
        %v1616 = vshrl.u32 %v1584, 16
        %v1617 = vshrl.u32 %v1585, 16
        %v1618 = vshrl.u32 %v1586, 16
        %v1619 = vshrl.u32 %v1587, 16
        %v1620 = vshrl.u32 %v1588, 16
        %v1621 = vshrl.u32 %v1589, 16
        %v1622 = vxor.u32 %v1558, %v1590
        %v1623 = vxor.u32 %v1559, %v1591
        %v1624 = vxor.u32 %v1560, %v1592
        %v1625 = vxor.u32 %v1561, %v1593
        %v1626 = vxor.u32 %v1562, %v1594
        %v1627 = vxor.u32 %v1563, %v1595
        %v1628 = vxor.u32 %v1564, %v1596
        %v1629 = vxor.u32 %v1565, %v1597
        %v1630 = vxor.u32 %v1566, %v1598
        %v1631 = vxor.u32 %v1567, %v1599
        %v1632 = vxor.u32 %v1568, %v1600
        %v1633 = vxor.u32 %v1569, %v1601
        %v1634 = vxor.u32 %v1570, %v1602
        %v1635 = vxor.u32 %v1571, %v1603
        %v1636 = vxor.u32 %v1572, %v1604
        %v1637 = vxor.u32 %v1573, %v1605
        %v1638 = vxor.u32 %v1574, %v1606
        %v1639 = vxor.u32 %v1575, %v1607
        %v1640 = vxor.u32 %v1576, %v1608
        %v1641 = vxor.u32 %v1577, %v1609
        %v1642 = vxor.u32 %v1578, %v1610
        %v1643 = vxor.u32 %v1579, %v1611
        %v1644 = vxor.u32 %v1580, %v1612
        %v1645 = vxor.u32 %v1581, %v1613
        %v1646 = vxor.u32 %v1582, %v1614
        %v1647 = vxor.u32 %v1583, %v1615
        %v1648 = vxor.u32 %v1584, %v1616
        %v1649 = vxor.u32 %v1585, %v1617
        %v1650 = vxor.u32 %v1586, %v1618
        %v1651 = vxor.u32 %v1587, %v1619
        %v1652 = vxor.u32 %v1588, %v1620
        %v1653 = vxor.u32 %v1589, %v1621
        %v1654 = vmul.u32 %v1622, 2246822507
        %v1655 = vmul.u32 %v1623, 2246822507
        %v1656 = vmul.u32 %v1624, 2246822507
        %v1657 = vmul.u32 %v1625, 2246822507
        %v1658 = vmul.u32 %v1626, 2246822507
        %v1659 = vmul.u32 %v1627, 2246822507
        %v1660 = vmul.u32 %v1628, 2246822507
        %v1661 = vmul.u32 %v1629, 2246822507
        %v1662 = vmul.u32 %v1630, 2246822507
        %v1663 = vmul.u32 %v1631, 2246822507
        %v1664 = vmul.u32 %v1632, 2246822507
        %v1665 = vmul.u32 %v1633, 2246822507
        %v1666 = vmul.u32 %v1634, 2246822507
        %v1667 = vmul.u32 %v1635, 2246822507
        %v1668 = vmul.u32 %v1636, 2246822507
        %v1669 = vmul.u32 %v1637, 2246822507
        %v1670 = vmul.u32 %v1638, 2246822507
        %v1671 = vmul.u32 %v1639, 2246822507
        %v1672 = vmul.u32 %v1640, 2246822507
        %v1673 = vmul.u32 %v1641, 2246822507
        %v1674 = vmul.u32 %v1642, 2246822507
        %v1675 = vmul.u32 %v1643, 2246822507
        %v1676 = vmul.u32 %v1644, 2246822507
        %v1677 = vmul.u32 %v1645, 2246822507
        %v1678 = vmul.u32 %v1646, 2246822507
        %v1679 = vmul.u32 %v1647, 2246822507
        %v1680 = vmul.u32 %v1648, 2246822507
        %v1681 = vmul.u32 %v1649, 2246822507
        %v1682 = vmul.u32 %v1650, 2246822507
        %v1683 = vmul.u32 %v1651, 2246822507
        %v1684 = vmul.u32 %v1652, 2246822507
        %v1685 = vmul.u32 %v1653, 2246822507
        %v1686 = vshrl.u32 %v1654, 13
        %v1687 = vshrl.u32 %v1655, 13
        %v1688 = vshrl.u32 %v1656, 13
        %v1689 = vshrl.u32 %v1657, 13
        %v1690 = vshrl.u32 %v1658, 13
        %v1691 = vshrl.u32 %v1659, 13
        %v1692 = vshrl.u32 %v1660, 13
        %v1693 = vshrl.u32 %v1661, 13
        %v1694 = vshrl.u32 %v1662, 13
        %v1695 = vshrl.u32 %v1663, 13
        %v1696 = vshrl.u32 %v1664, 13
        %v1697 = vshrl.u32 %v1665, 13
        %v1698 = vshrl.u32 %v1666, 13
        %v1699 = vshrl.u32 %v1667, 13
        %v1700 = vshrl.u32 %v1668, 13
        %v1701 = vshrl.u32 %v1669, 13
        %v1702 = vshrl.u32 %v1670, 13
        %v1703 = vshrl.u32 %v1671, 13
        %v1704 = vshrl.u32 %v1672, 13
        %v1705 = vshrl.u32 %v1673, 13
        %v1706 = vshrl.u32 %v1674, 13
        %v1707 = vshrl.u32 %v1675, 13
        %v1708 = vshrl.u32 %v1676, 13
        %v1709 = vshrl.u32 %v1677, 13
        %v1710 = vshrl.u32 %v1678, 13
        %v1711 = vshrl.u32 %v1679, 13
        %v1712 = vshrl.u32 %v1680, 13
        %v1713 = vshrl.u32 %v1681, 13
        %v1714 = vshrl.u32 %v1682, 13
        %v1715 = vshrl.u32 %v1683, 13
        %v1716 = vshrl.u32 %v1684, 13
        %v1717 = vshrl.u32 %v1685, 13
        %v1718 = vxor.u32 %v1654, %v1686
        %v1719 = vxor.u32 %v1655, %v1687
        %v1720 = vxor.u32 %v1656, %v1688
        %v1721 = vxor.u32 %v1657, %v1689
        %v1722 = vxor.u32 %v1658, %v1690
        %v1723 = vxor.u32 %v1659, %v1691
        %v1724 = vxor.u32 %v1660, %v1692
        %v1725 = vxor.u32 %v1661, %v1693
        %v1726 = vxor.u32 %v1662, %v1694
        %v1727 = vxor.u32 %v1663, %v1695
        %v1728 = vxor.u32 %v1664, %v1696
        %v1729 = vxor.u32 %v1665, %v1697
        %v1730 = vxor.u32 %v1666, %v1698
        %v1731 = vxor.u32 %v1667, %v1699
        %v1732 = vxor.u32 %v1668, %v1700
        %v1733 = vxor.u32 %v1669, %v1701
        %v1734 = vxor.u32 %v1670, %v1702
        %v1735 = vxor.u32 %v1671, %v1703
        %v1736 = vxor.u32 %v1672, %v1704
        %v1737 = vxor.u32 %v1673, %v1705
        %v1738 = vxor.u32 %v1674, %v1706
        %v1739 = vxor.u32 %v1675, %v1707
        %v1740 = vxor.u32 %v1676, %v1708
        %v1741 = vxor.u32 %v1677, %v1709
        %v1742 = vxor.u32 %v1678, %v1710
        %v1743 = vxor.u32 %v1679, %v1711
        %v1744 = vxor.u32 %v1680, %v1712
        %v1745 = vxor.u32 %v1681, %v1713
        %v1746 = vxor.u32 %v1682, %v1714
        %v1747 = vxor.u32 %v1683, %v1715
        %v1748 = vxor.u32 %v1684, %v1716
        %v1749 = vxor.u32 %v1685, %v1717
        %v1750 = vmul.u32 %v1718, 3266489909
        %v1751 = vmul.u32 %v1719, 3266489909
        %v1752 = vmul.u32 %v1720, 3266489909
        %v1753 = vmul.u32 %v1721, 3266489909
        %v1754 = vmul.u32 %v1722, 3266489909
        %v1755 = vmul.u32 %v1723, 3266489909
        %v1756 = vmul.u32 %v1724, 3266489909
        %v1757 = vmul.u32 %v1725, 3266489909
        %v1758 = vmul.u32 %v1726, 3266489909
        %v1759 = vmul.u32 %v1727, 3266489909
        %v1760 = vmul.u32 %v1728, 3266489909
        %v1761 = vmul.u32 %v1729, 3266489909
        %v1762 = vmul.u32 %v1730, 3266489909
        %v1763 = vmul.u32 %v1731, 3266489909
        %v1764 = vmul.u32 %v1732, 3266489909
        %v1765 = vmul.u32 %v1733, 3266489909
        %v1766 = vmul.u32 %v1734, 3266489909
        %v1767 = vmul.u32 %v1735, 3266489909
        %v1768 = vmul.u32 %v1736, 3266489909
        %v1769 = vmul.u32 %v1737, 3266489909
        %v1770 = vmul.u32 %v1738, 3266489909
        %v1771 = vmul.u32 %v1739, 3266489909
        %v1772 = vmul.u32 %v1740, 3266489909
        %v1773 = vmul.u32 %v1741, 3266489909
        %v1774 = vmul.u32 %v1742, 3266489909
        %v1775 = vmul.u32 %v1743, 3266489909
        %v1776 = vmul.u32 %v1744, 3266489909
        %v1777 = vmul.u32 %v1745, 3266489909
        %v1778 = vmul.u32 %v1746, 3266489909
        %v1779 = vmul.u32 %v1747, 3266489909
        %v1780 = vmul.u32 %v1748, 3266489909
        %v1781 = vmul.u32 %v1749, 3266489909
        %v1782 = vshrl.u32 %v1750, 16
        %v1783 = vshrl.u32 %v1751, 16
        %v1784 = vshrl.u32 %v1752, 16
        %v1785 = vshrl.u32 %v1753, 16
        %v1786 = vshrl.u32 %v1754, 16
        %v1787 = vshrl.u32 %v1755, 16
        %v1788 = vshrl.u32 %v1756, 16
        %v1789 = vshrl.u32 %v1757, 16
        %v1790 = vshrl.u32 %v1758, 16
        %v1791 = vshrl.u32 %v1759, 16
        %v1792 = vshrl.u32 %v1760, 16
        %v1793 = vshrl.u32 %v1761, 16
        %v1794 = vshrl.u32 %v1762, 16
        %v1795 = vshrl.u32 %v1763, 16
        %v1796 = vshrl.u32 %v1764, 16
        %v1797 = vshrl.u32 %v1765, 16
        %v1798 = vshrl.u32 %v1766, 16
        %v1799 = vshrl.u32 %v1767, 16
        %v1800 = vshrl.u32 %v1768, 16
        %v1801 = vshrl.u32 %v1769, 16
        %v1802 = vshrl.u32 %v1770, 16
        %v1803 = vshrl.u32 %v1771, 16
        %v1804 = vshrl.u32 %v1772, 16
        %v1805 = vshrl.u32 %v1773, 16
        %v1806 = vshrl.u32 %v1774, 16
        %v1807 = vshrl.u32 %v1775, 16
        %v1808 = vshrl.u32 %v1776, 16
        %v1809 = vshrl.u32 %v1777, 16
        %v1810 = vshrl.u32 %v1778, 16
        %v1811 = vshrl.u32 %v1779, 16
        %v1812 = vshrl.u32 %v1780, 16
        %v1813 = vshrl.u32 %v1781, 16
        %v1814 = vxor.u32 %v1750, %v1782
        %v1815 = vxor.u32 %v1751, %v1783
        %v1816 = vxor.u32 %v1752, %v1784
        %v1817 = vxor.u32 %v1753, %v1785
        %v1818 = vxor.u32 %v1754, %v1786
        %v1819 = vxor.u32 %v1755, %v1787
        %v1820 = vxor.u32 %v1756, %v1788
        %v1821 = vxor.u32 %v1757, %v1789
        %v1822 = vxor.u32 %v1758, %v1790
        %v1823 = vxor.u32 %v1759, %v1791
        %v1824 = vxor.u32 %v1760, %v1792
        %v1825 = vxor.u32 %v1761, %v1793
        %v1826 = vxor.u32 %v1762, %v1794
        %v1827 = vxor.u32 %v1763, %v1795
        %v1828 = vxor.u32 %v1764, %v1796
        %v1829 = vxor.u32 %v1765, %v1797
        %v1830 = vxor.u32 %v1766, %v1798
        %v1831 = vxor.u32 %v1767, %v1799
        %v1832 = vxor.u32 %v1768, %v1800
        %v1833 = vxor.u32 %v1769, %v1801
        %v1834 = vxor.u32 %v1770, %v1802
        %v1835 = vxor.u32 %v1771, %v1803
        %v1836 = vxor.u32 %v1772, %v1804
        %v1837 = vxor.u32 %v1773, %v1805
        %v1838 = vxor.u32 %v1774, %v1806
        %v1839 = vxor.u32 %v1775, %v1807
        %v1840 = vxor.u32 %v1776, %v1808
        %v1841 = vxor.u32 %v1777, %v1809
        %v1842 = vxor.u32 %v1778, %v1810
        %v1843 = vxor.u32 %v1779, %v1811
        %v1844 = vxor.u32 %v1780, %v1812
        %v1845 = vxor.u32 %v1781, %v1813
        %v1846 = vshrl.u32 %v1814, 8
        %v1847 = vshrl.u32 %v1815, 8
        %v1848 = vshrl.u32 %v1816, 8
        %v1849 = vshrl.u32 %v1817, 8
        %v1850 = vshrl.u32 %v1818, 8
        %v1851 = vshrl.u32 %v1819, 8
        %v1852 = vshrl.u32 %v1820, 8
        %v1853 = vshrl.u32 %v1821, 8
        %v1854 = vshrl.u32 %v1822, 8
        %v1855 = vshrl.u32 %v1823, 8
        %v1856 = vshrl.u32 %v1824, 8
        %v1857 = vshrl.u32 %v1825, 8
        %v1858 = vshrl.u32 %v1826, 8
        %v1859 = vshrl.u32 %v1827, 8
        %v1860 = vshrl.u32 %v1828, 8
        %v1861 = vshrl.u32 %v1829, 8
        %v1862 = vshrl.u32 %v1830, 8
        %v1863 = vshrl.u32 %v1831, 8
        %v1864 = vshrl.u32 %v1832, 8
        %v1865 = vshrl.u32 %v1833, 8
        %v1866 = vshrl.u32 %v1834, 8
        %v1867 = vshrl.u32 %v1835, 8
        %v1868 = vshrl.u32 %v1836, 8
        %v1869 = vshrl.u32 %v1837, 8
        %v1870 = vshrl.u32 %v1838, 8
        %v1871 = vshrl.u32 %v1839, 8
        %v1872 = vshrl.u32 %v1840, 8
        %v1873 = vshrl.u32 %v1841, 8
        %v1874 = vshrl.u32 %v1842, 8
        %v1875 = vshrl.u32 %v1843, 8
        %v1876 = vshrl.u32 %v1844, 8
        %v1877 = vshrl.u32 %v1845, 8
        %v1878 = vcvt.s32.f32 %v1846
        %v1879 = vcvt.s32.f32 %v1847
        %v1880 = vcvt.s32.f32 %v1848
        %v1881 = vcvt.s32.f32 %v1849
        %v1882 = vcvt.s32.f32 %v1850
        %v1883 = vcvt.s32.f32 %v1851
        %v1884 = vcvt.s32.f32 %v1852
        %v1885 = vcvt.s32.f32 %v1853
        %v1886 = vcvt.s32.f32 %v1854
        %v1887 = vcvt.s32.f32 %v1855
        %v1888 = vcvt.s32.f32 %v1856
        %v1889 = vcvt.s32.f32 %v1857
        %v1890 = vcvt.s32.f32 %v1858
        %v1891 = vcvt.s32.f32 %v1859
        %v1892 = vcvt.s32.f32 %v1860
        %v1893 = vcvt.s32.f32 %v1861
        %v1894 = vcvt.s32.f32 %v1862
        %v1895 = vcvt.s32.f32 %v1863
        %v1896 = vcvt.s32.f32 %v1864
        %v1897 = vcvt.s32.f32 %v1865
        %v1898 = vcvt.s32.f32 %v1866
        %v1899 = vcvt.s32.f32 %v1867
        %v1900 = vcvt.s32.f32 %v1868
        %v1901 = vcvt.s32.f32 %v1869
        %v1902 = vcvt.s32.f32 %v1870
        %v1903 = vcvt.s32.f32 %v1871
        %v1904 = vcvt.s32.f32 %v1872
        %v1905 = vcvt.s32.f32 %v1873
        %v1906 = vcvt.s32.f32 %v1874
        %v1907 = vcvt.s32.f32 %v1875
        %v1908 = vcvt.s32.f32 %v1876
        %v1909 = vcvt.s32.f32 %v1877
        %v1910 = vadd.f32 %v1878, 0.5
        %v1911 = vadd.f32 %v1879, 0.5
        %v1912 = vadd.f32 %v1880, 0.5
        %v1913 = vadd.f32 %v1881, 0.5
        %v1914 = vadd.f32 %v1882, 0.5
        %v1915 = vadd.f32 %v1883, 0.5
        %v1916 = vadd.f32 %v1884, 0.5
        %v1917 = vadd.f32 %v1885, 0.5
        %v1918 = vadd.f32 %v1886, 0.5
        %v1919 = vadd.f32 %v1887, 0.5
        %v1920 = vadd.f32 %v1888, 0.5
        %v1921 = vadd.f32 %v1889, 0.5
        %v1922 = vadd.f32 %v1890, 0.5
        %v1923 = vadd.f32 %v1891, 0.5
        %v1924 = vadd.f32 %v1892, 0.5
        %v1925 = vadd.f32 %v1893, 0.5
        %v1926 = vadd.f32 %v1894, 0.5
        %v1927 = vadd.f32 %v1895, 0.5
        %v1928 = vadd.f32 %v1896, 0.5
        %v1929 = vadd.f32 %v1897, 0.5
        %v1930 = vadd.f32 %v1898, 0.5
        %v1931 = vadd.f32 %v1899, 0.5
        %v1932 = vadd.f32 %v1900, 0.5
        %v1933 = vadd.f32 %v1901, 0.5
        %v1934 = vadd.f32 %v1902, 0.5
        %v1935 = vadd.f32 %v1903, 0.5
        %v1936 = vadd.f32 %v1904, 0.5
        %v1937 = vadd.f32 %v1905, 0.5
        %v1938 = vadd.f32 %v1906, 0.5
        %v1939 = vadd.f32 %v1907, 0.5
        %v1940 = vadd.f32 %v1908, 0.5
        %v1941 = vadd.f32 %v1909, 0.5
        %v1942 = vmul.f32 %v1910, 5.9604645e-08
        %v1943 = vmul.f32 %v1911, 5.9604645e-08
        %v1944 = vmul.f32 %v1912, 5.9604645e-08
        %v1945 = vmul.f32 %v1913, 5.9604645e-08
        %v1946 = vmul.f32 %v1914, 5.9604645e-08
        %v1947 = vmul.f32 %v1915, 5.9604645e-08
        %v1948 = vmul.f32 %v1916, 5.9604645e-08
        %v1949 = vmul.f32 %v1917, 5.9604645e-08
        %v1950 = vmul.f32 %v1918, 5.9604645e-08
        %v1951 = vmul.f32 %v1919, 5.9604645e-08
        %v1952 = vmul.f32 %v1920, 5.9604645e-08
        %v1953 = vmul.f32 %v1921, 5.9604645e-08
        %v1954 = vmul.f32 %v1922, 5.9604645e-08
        %v1955 = vmul.f32 %v1923, 5.9604645e-08
        %v1956 = vmul.f32 %v1924, 5.9604645e-08
        %v1957 = vmul.f32 %v1925, 5.9604645e-08
        %v1958 = vmul.f32 %v1926, 5.9604645e-08
        %v1959 = vmul.f32 %v1927, 5.9604645e-08
        %v1960 = vmul.f32 %v1928, 5.9604645e-08
        %v1961 = vmul.f32 %v1929, 5.9604645e-08
        %v1962 = vmul.f32 %v1930, 5.9604645e-08
        %v1963 = vmul.f32 %v1931, 5.9604645e-08
        %v1964 = vmul.f32 %v1932, 5.9604645e-08
        %v1965 = vmul.f32 %v1933, 5.9604645e-08
        %v1966 = vmul.f32 %v1934, 5.9604645e-08
        %v1967 = vmul.f32 %v1935, 5.9604645e-08
        %v1968 = vmul.f32 %v1936, 5.9604645e-08
        %v1969 = vmul.f32 %v1937, 5.9604645e-08
        %v1970 = vmul.f32 %v1938, 5.9604645e-08
        %v1971 = vmul.f32 %v1939, 5.9604645e-08
        %v1972 = vmul.f32 %v1940, 5.9604645e-08
        %v1973 = vmul.f32 %v1941, 5.9604645e-08
        %v1974 = vlog2.pop %v1942
        %v1975 = vmul.f32 %v1974, 0.6931472
        %v1976 = vlog2.pop %v1943
        %v1977 = vmul.f32 %v1976, 0.6931472
        %v1978 = vlog2.pop %v1944
        %v1979 = vmul.f32 %v1978, 0.6931472
        %v1980 = vlog2.pop %v1945
        %v1981 = vmul.f32 %v1980, 0.6931472
        %v1982 = vlog2.pop %v1946
        %v1983 = vmul.f32 %v1982, 0.6931472
        %v1984 = vlog2.pop %v1947
        %v1985 = vmul.f32 %v1984, 0.6931472
        %v1986 = vlog2.pop %v1948
        %v1987 = vmul.f32 %v1986, 0.6931472
        %v1988 = vlog2.pop %v1949
        %v1989 = vmul.f32 %v1988, 0.6931472
        %v1990 = vlog2.pop %v1950
        %v1991 = vmul.f32 %v1990, 0.6931472
        %v1992 = vlog2.pop %v1951
        %v1993 = vmul.f32 %v1992, 0.6931472
        %v1994 = vlog2.pop %v1952
        %v1995 = vmul.f32 %v1994, 0.6931472
        %v1996 = vlog2.pop %v1953
        %v1997 = vmul.f32 %v1996, 0.6931472
        %v1998 = vlog2.pop %v1954
        %v1999 = vmul.f32 %v1998, 0.6931472
        %v2000 = vlog2.pop %v1955
        %v2001 = vmul.f32 %v2000, 0.6931472
        %v2002 = vlog2.pop %v1956
        %v2003 = vmul.f32 %v2002, 0.6931472
        %v2004 = vlog2.pop %v1957
        %v2005 = vmul.f32 %v2004, 0.6931472
        %v2006 = vlog2.pop %v1958
        %v2007 = vmul.f32 %v2006, 0.6931472
        %v2008 = vlog2.pop %v1959
        %v2009 = vmul.f32 %v2008, 0.6931472
        %v2010 = vlog2.pop %v1960
        %v2011 = vmul.f32 %v2010, 0.6931472
        %v2012 = vlog2.pop %v1961
        %v2013 = vmul.f32 %v2012, 0.6931472
        %v2014 = vlog2.pop %v1962
        %v2015 = vmul.f32 %v2014, 0.6931472
        %v2016 = vlog2.pop %v1963
        %v2017 = vmul.f32 %v2016, 0.6931472
        %v2018 = vlog2.pop %v1964
        %v2019 = vmul.f32 %v2018, 0.6931472
        %v2020 = vlog2.pop %v1965
        %v2021 = vmul.f32 %v2020, 0.6931472
        %v2022 = vlog2.pop %v1966
        %v2023 = vmul.f32 %v2022, 0.6931472
        %v2024 = vlog2.pop %v1967
        %v2025 = vmul.f32 %v2024, 0.6931472
        %v2026 = vlog2.pop %v1968
        %v2027 = vmul.f32 %v2026, 0.6931472
        %v2028 = vlog2.pop %v1969
        %v2029 = vmul.f32 %v2028, 0.6931472
        %v2030 = vlog2.pop %v1970
        %v2031 = vmul.f32 %v2030, 0.6931472
        %v2032 = vlog2.pop %v1971
        %v2033 = vmul.f32 %v2032, 0.6931472
        %v2034 = vlog2.pop %v1972
        %v2035 = vmul.f32 %v2034, 0.6931472
        %v2036 = vlog2.pop %v1973
        %v2037 = vmul.f32 %v2036, 0.6931472
        %v2038 = vsub.f32 0.0, %v1975
        %v2039 = vsub.f32 0.0, %v1977
        %v2040 = vsub.f32 0.0, %v1979
        %v2041 = vsub.f32 0.0, %v1981
        %v2042 = vsub.f32 0.0, %v1983
        %v2043 = vsub.f32 0.0, %v1985
        %v2044 = vsub.f32 0.0, %v1987
        %v2045 = vsub.f32 0.0, %v1989
        %v2046 = vsub.f32 0.0, %v1991
        %v2047 = vsub.f32 0.0, %v1993
        %v2048 = vsub.f32 0.0, %v1995
        %v2049 = vsub.f32 0.0, %v1997
        %v2050 = vsub.f32 0.0, %v1999
        %v2051 = vsub.f32 0.0, %v2001
        %v2052 = vsub.f32 0.0, %v2003
        %v2053 = vsub.f32 0.0, %v2005
        %v2054 = vsub.f32 0.0, %v2007
        %v2055 = vsub.f32 0.0, %v2009
        %v2056 = vsub.f32 0.0, %v2011
        %v2057 = vsub.f32 0.0, %v2013
        %v2058 = vsub.f32 0.0, %v2015
        %v2059 = vsub.f32 0.0, %v2017
        %v2060 = vsub.f32 0.0, %v2019
        %v2061 = vsub.f32 0.0, %v2021
        %v2062 = vsub.f32 0.0, %v2023
        %v2063 = vsub.f32 0.0, %v2025
        %v2064 = vsub.f32 0.0, %v2027
        %v2065 = vsub.f32 0.0, %v2029
        %v2066 = vsub.f32 0.0, %v2031
        %v2067 = vsub.f32 0.0, %v2033
        %v2068 = vsub.f32 0.0, %v2035
        %v2069 = vsub.f32 0.0, %v2037
        %v2070 = vlog2.pop %v2038
        %v2071 = vmul.f32 %v2070, 0.6931472
        %v2072 = vlog2.pop %v2039
        %v2073 = vmul.f32 %v2072, 0.6931472
        %v2074 = vlog2.pop %v2040
        %v2075 = vmul.f32 %v2074, 0.6931472
        %v2076 = vlog2.pop %v2041
        %v2077 = vmul.f32 %v2076, 0.6931472
        %v2078 = vlog2.pop %v2042
        %v2079 = vmul.f32 %v2078, 0.6931472
        %v2080 = vlog2.pop %v2043
        %v2081 = vmul.f32 %v2080, 0.6931472
        %v2082 = vlog2.pop %v2044
        %v2083 = vmul.f32 %v2082, 0.6931472
        %v2084 = vlog2.pop %v2045
        %v2085 = vmul.f32 %v2084, 0.6931472
        %v2086 = vlog2.pop %v2046
        %v2087 = vmul.f32 %v2086, 0.6931472
        %v2088 = vlog2.pop %v2047
        %v2089 = vmul.f32 %v2088, 0.6931472
        %v2090 = vlog2.pop %v2048
        %v2091 = vmul.f32 %v2090, 0.6931472
        %v2092 = vlog2.pop %v2049
        %v2093 = vmul.f32 %v2092, 0.6931472
        %v2094 = vlog2.pop %v2050
        %v2095 = vmul.f32 %v2094, 0.6931472
        %v2096 = vlog2.pop %v2051
        %v2097 = vmul.f32 %v2096, 0.6931472
        %v2098 = vlog2.pop %v2052
        %v2099 = vmul.f32 %v2098, 0.6931472
        %v2100 = vlog2.pop %v2053
        %v2101 = vmul.f32 %v2100, 0.6931472
        %v2102 = vlog2.pop %v2054
        %v2103 = vmul.f32 %v2102, 0.6931472
        %v2104 = vlog2.pop %v2055
        %v2105 = vmul.f32 %v2104, 0.6931472
        %v2106 = vlog2.pop %v2056
        %v2107 = vmul.f32 %v2106, 0.6931472
        %v2108 = vlog2.pop %v2057
        %v2109 = vmul.f32 %v2108, 0.6931472
        %v2110 = vlog2.pop %v2058
        %v2111 = vmul.f32 %v2110, 0.6931472
        %v2112 = vlog2.pop %v2059
        %v2113 = vmul.f32 %v2112, 0.6931472
        %v2114 = vlog2.pop %v2060
        %v2115 = vmul.f32 %v2114, 0.6931472
        %v2116 = vlog2.pop %v2061
        %v2117 = vmul.f32 %v2116, 0.6931472
        %v2118 = vlog2.pop %v2062
        %v2119 = vmul.f32 %v2118, 0.6931472
        %v2120 = vlog2.pop %v2063
        %v2121 = vmul.f32 %v2120, 0.6931472
        %v2122 = vlog2.pop %v2064
        %v2123 = vmul.f32 %v2122, 0.6931472
        %v2124 = vlog2.pop %v2065
        %v2125 = vmul.f32 %v2124, 0.6931472
        %v2126 = vlog2.pop %v2066
        %v2127 = vmul.f32 %v2126, 0.6931472
        %v2128 = vlog2.pop %v2067
        %v2129 = vmul.f32 %v2128, 0.6931472
        %v2130 = vlog2.pop %v2068
        %v2131 = vmul.f32 %v2130, 0.6931472
        %v2132 = vlog2.pop %v2069
        %v2133 = vmul.f32 %v2132, 0.6931472
        %v2134 = vsub.f32 0.0, %v2071
        %v2135 = vsub.f32 0.0, %v2073
        %v2136 = vsub.f32 0.0, %v2075
        %v2137 = vsub.f32 0.0, %v2077
        %v2138 = vsub.f32 0.0, %v2079
        %v2139 = vsub.f32 0.0, %v2081
        %v2140 = vsub.f32 0.0, %v2083
        %v2141 = vsub.f32 0.0, %v2085
        %v2142 = vsub.f32 0.0, %v2087
        %v2143 = vsub.f32 0.0, %v2089
        %v2144 = vsub.f32 0.0, %v2091
        %v2145 = vsub.f32 0.0, %v2093
        %v2146 = vsub.f32 0.0, %v2095
        %v2147 = vsub.f32 0.0, %v2097
        %v2148 = vsub.f32 0.0, %v2099
        %v2149 = vsub.f32 0.0, %v2101
        %v2150 = vsub.f32 0.0, %v2103
        %v2151 = vsub.f32 0.0, %v2105
        %v2152 = vsub.f32 0.0, %v2107
        %v2153 = vsub.f32 0.0, %v2109
        %v2154 = vsub.f32 0.0, %v2111
        %v2155 = vsub.f32 0.0, %v2113
        %v2156 = vsub.f32 0.0, %v2115
        %v2157 = vsub.f32 0.0, %v2117
        %v2158 = vsub.f32 0.0, %v2119
        %v2159 = vsub.f32 0.0, %v2121
        %v2160 = vsub.f32 0.0, %v2123
        %v2161 = vsub.f32 0.0, %v2125
        %v2162 = vsub.f32 0.0, %v2127
        %v2163 = vsub.f32 0.0, %v2129
        %v2164 = vsub.f32 0.0, %v2131
        %v2165 = vsub.f32 0.0, %v2133
        %v2166 = vadd.f32 %v1436, %v2134
        %v2167 = vadd.f32 %v1437, %v2135
        %v2168 = vadd.f32 %v1438, %v2136
        %v2169 = vadd.f32 %v1439, %v2137
        %v2170 = vadd.f32 %v1440, %v2138
        %v2171 = vadd.f32 %v1441, %v2139
        %v2172 = vadd.f32 %v1442, %v2140
        %v2173 = vadd.f32 %v1443, %v2141
        %v2174 = vadd.f32 %v1444, %v2142
        %v2175 = vadd.f32 %v1445, %v2143
        %v2176 = vadd.f32 %v1446, %v2144
        %v2177 = vadd.f32 %v1447, %v2145
        %v2178 = vadd.f32 %v1448, %v2146
        %v2179 = vadd.f32 %v1449, %v2147
        %v2180 = vadd.f32 %v1450, %v2148
        %v2181 = vadd.f32 %v1451, %v2149
        %v2182 = vadd.f32 %v1452, %v2150
        %v2183 = vadd.f32 %v1453, %v2151
        %v2184 = vadd.f32 %v1454, %v2152
        %v2185 = vadd.f32 %v1455, %v2153
        %v2186 = vadd.f32 %v1456, %v2154
        %v2187 = vadd.f32 %v1457, %v2155
        %v2188 = vadd.f32 %v1458, %v2156
        %v2189 = vadd.f32 %v1459, %v2157
        %v2190 = vadd.f32 %v1460, %v2158
        %v2191 = vadd.f32 %v1461, %v2159
        %v2192 = vadd.f32 %v1462, %v2160
        %v2193 = vadd.f32 %v1463, %v2161
        %v2194 = vadd.f32 %v1464, %v2162
        %v2195 = vadd.f32 %v1465, %v2163
        %v2196 = vadd.f32 %v1466, %v2164
        %v2197 = vadd.f32 %v1467, %v2165
        %v2198 = vstv %s1429
        %v2199 = vrcp.pop %v2198
        %v2200 = vmul.f32 %v2198, %v2199
        %v2201 = vsub.f32 1.0, %v2200
        %v2202 = vmul.f32 %v2199, %v2201
        %v2203 = vadd.f32 %v2199, %v2202
        %vm2204 = vweird.f32 %v2198
        %vm2205 = vweird.f32 %v2199
        %vm2206 = vmor %vm2204, %vm2205
        %v2207 = vsel %vm2206, %v2199, %v2203
        %v2208 = vand.u32 2147483647, %v2198
        %vm2209 = vcmp.eq.f32.partialorder %v2208, 8.507059e+37
        %v2210 = vand.u32 %v2198, 2147483648
        %v2211 = vor.u32 1.1754944e-38, %v2210
        %v2212 = vsel %vm2209, %v2211, %v2207
        %s2213 = vtos %v2212
        %v2214 = vstv %s2213
        %v2215 = vmul.f32 %v2166, %v2214
        %v2216 = vmul.f32 %v2167, %v2214
        %v2217 = vmul.f32 %v2168, %v2214
        %v2218 = vmul.f32 %v2169, %v2214
        %v2219 = vmul.f32 %v2170, %v2214
        %v2220 = vmul.f32 %v2171, %v2214
        %v2221 = vmul.f32 %v2172, %v2214
        %v2222 = vmul.f32 %v2173, %v2214
        %v2223 = vmul.f32 %v2174, %v2214
        %v2224 = vmul.f32 %v2175, %v2214
        %v2225 = vmul.f32 %v2176, %v2214
        %v2226 = vmul.f32 %v2177, %v2214
        %v2227 = vmul.f32 %v2178, %v2214
        %v2228 = vmul.f32 %v2179, %v2214
        %v2229 = vmul.f32 %v2180, %v2214
        %v2230 = vmul.f32 %v2181, %v2214
        %v2231 = vmul.f32 %v2182, %v2214
        %v2232 = vmul.f32 %v2183, %v2214
        %v2233 = vmul.f32 %v2184, %v2214
        %v2234 = vmul.f32 %v2185, %v2214
        %v2235 = vmul.f32 %v2186, %v2214
        %v2236 = vmul.f32 %v2187, %v2214
        %v2237 = vmul.f32 %v2188, %v2214
        %v2238 = vmul.f32 %v2189, %v2214
        %v2239 = vmul.f32 %v2190, %v2214
        %v2240 = vmul.f32 %v2191, %v2214
        %v2241 = vmul.f32 %v2192, %v2214
        %v2242 = vmul.f32 %v2193, %v2214
        %v2243 = vmul.f32 %v2194, %v2214
        %v2244 = vmul.f32 %v2195, %v2214
        %v2245 = vmul.f32 %v2196, %v2214
        %v2246 = vmul.f32 %v2197, %v2214
        %v2247 = vmax.f32 %v2215, %v2216
        %2248 = vmax.xlane.f32.xlu0 %v2247
        %v2249 = vpop.xlane.xlu0 %2248
        %v2250 = vmax.f32 %v2217, %v2218
        %2251 = vmax.xlane.f32.xlu0 %v2250
        %v2252 = vpop.xlane.xlu0 %2251
        %v2253 = vmax.f32 %v2219, %v2220
        %2254 = vmax.xlane.f32.xlu0 %v2253
        %v2255 = vpop.xlane.xlu0 %2254
        %v2256 = vmax.f32 %v2221, %v2222
        %2257 = vmax.xlane.f32.xlu0 %v2256
        %v2258 = vpop.xlane.xlu0 %2257
        %v2259 = vmax.f32 %v2223, %v2224
        %2260 = vmax.xlane.f32.xlu0 %v2259
        %v2261 = vpop.xlane.xlu0 %2260
        %v2262 = vmax.f32 %v2225, %v2226
        %2263 = vmax.xlane.f32.xlu0 %v2262
        %v2264 = vpop.xlane.xlu0 %2263
        %v2265 = vmax.f32 %v2227, %v2228
        %2266 = vmax.xlane.f32.xlu0 %v2265
        %v2267 = vpop.xlane.xlu0 %2266
        %v2268 = vmax.f32 %v2229, %v2230
        %2269 = vmax.xlane.f32.xlu0 %v2268
        %v2270 = vpop.xlane.xlu0 %2269
        %v2271 = vmax.f32 %v2231, %v2232
        %2272 = vmax.xlane.f32.xlu0 %v2271
        %v2273 = vpop.xlane.xlu0 %2272
        %v2274 = vmax.f32 %v2233, %v2234
        %2275 = vmax.xlane.f32.xlu0 %v2274
        %v2276 = vpop.xlane.xlu0 %2275
        %v2277 = vmax.f32 %v2235, %v2236
        %2278 = vmax.xlane.f32.xlu0 %v2277
        %v2279 = vpop.xlane.xlu0 %2278
        %v2280 = vmax.f32 %v2237, %v2238
        %2281 = vmax.xlane.f32.xlu0 %v2280
        %v2282 = vpop.xlane.xlu0 %2281
        %v2283 = vmax.f32 %v2239, %v2240
        %2284 = vmax.xlane.f32.xlu0 %v2283
        %v2285 = vpop.xlane.xlu0 %2284
        %v2286 = vmax.f32 %v2241, %v2242
        %2287 = vmax.xlane.f32.xlu0 %v2286
        %v2288 = vpop.xlane.xlu0 %2287
        %v2289 = vmax.f32 %v2243, %v2244
        %2290 = vmax.xlane.f32.xlu0 %v2289
        %v2291 = vpop.xlane.xlu0 %2290
        %v2292 = vmax.f32 %v2245, %v2246
        %2293 = vmax.xlane.f32.xlu0 %v2292
        %v2294 = vpop.xlane.xlu0 %2293
        %v2295 = vsub.f32 %v2215, %v2249
        %v2296 = vsub.f32 %v2216, %v2249
        %v2297 = vsub.f32 %v2217, %v2252
        %v2298 = vsub.f32 %v2218, %v2252
        %v2299 = vsub.f32 %v2219, %v2255
        %v2300 = vsub.f32 %v2220, %v2255
        %v2301 = vsub.f32 %v2221, %v2258
        %v2302 = vsub.f32 %v2222, %v2258
        %v2303 = vsub.f32 %v2223, %v2261
        %v2304 = vsub.f32 %v2224, %v2261
        %v2305 = vsub.f32 %v2225, %v2264
        %v2306 = vsub.f32 %v2226, %v2264
        %v2307 = vsub.f32 %v2227, %v2267
        %v2308 = vsub.f32 %v2228, %v2267
        %v2309 = vsub.f32 %v2229, %v2270
        %v2310 = vsub.f32 %v2230, %v2270
        %v2311 = vsub.f32 %v2231, %v2273
        %v2312 = vsub.f32 %v2232, %v2273
        %v2313 = vsub.f32 %v2233, %v2276
        %v2314 = vsub.f32 %v2234, %v2276
        %v2315 = vsub.f32 %v2235, %v2279
        %v2316 = vsub.f32 %v2236, %v2279
        %v2317 = vsub.f32 %v2237, %v2282
        %v2318 = vsub.f32 %v2238, %v2282
        %v2319 = vsub.f32 %v2239, %v2285
        %v2320 = vsub.f32 %v2240, %v2285
        %v2321 = vsub.f32 %v2241, %v2288
        %v2322 = vsub.f32 %v2242, %v2288
        %v2323 = vsub.f32 %v2243, %v2291
        %v2324 = vsub.f32 %v2244, %v2291
        %v2325 = vsub.f32 %v2245, %v2294
        %v2326 = vsub.f32 %v2246, %v2294
        %v2327 = vmul.f32 %v2295, 1.442695
        %v2328 = vpow.pop %v2327
        %v2329 = vmul.f32 %v2296, 1.442695
        %v2330 = vpow.pop %v2329
        %v2331 = vmul.f32 %v2297, 1.442695
        %v2332 = vpow.pop %v2331
        %v2333 = vmul.f32 %v2298, 1.442695
        %v2334 = vpow.pop %v2333
        %v2335 = vmul.f32 %v2299, 1.442695
        %v2336 = vpow.pop %v2335
        %v2337 = vmul.f32 %v2300, 1.442695
        %v2338 = vpow.pop %v2337
        %v2339 = vmul.f32 %v2301, 1.442695
        %v2340 = vpow.pop %v2339
        %v2341 = vmul.f32 %v2302, 1.442695
        %v2342 = vpow.pop %v2341
        %v2343 = vmul.f32 %v2303, 1.442695
        %v2344 = vpow.pop %v2343
        %v2345 = vmul.f32 %v2304, 1.442695
        %v2346 = vpow.pop %v2345
        %v2347 = vmul.f32 %v2305, 1.442695
        %v2348 = vpow.pop %v2347
        %v2349 = vmul.f32 %v2306, 1.442695
        %v2350 = vpow.pop %v2349
        %v2351 = vmul.f32 %v2307, 1.442695
        %v2352 = vpow.pop %v2351
        %v2353 = vmul.f32 %v2308, 1.442695
        %v2354 = vpow.pop %v2353
        %v2355 = vmul.f32 %v2309, 1.442695
        %v2356 = vpow.pop %v2355
        %v2357 = vmul.f32 %v2310, 1.442695
        %v2358 = vpow.pop %v2357
        %v2359 = vmul.f32 %v2311, 1.442695
        %v2360 = vpow.pop %v2359
        %v2361 = vmul.f32 %v2312, 1.442695
        %v2362 = vpow.pop %v2361
        %v2363 = vmul.f32 %v2313, 1.442695
        %v2364 = vpow.pop %v2363
        %v2365 = vmul.f32 %v2314, 1.442695
        %v2366 = vpow.pop %v2365
        %v2367 = vmul.f32 %v2315, 1.442695
        %v2368 = vpow.pop %v2367
        %v2369 = vmul.f32 %v2316, 1.442695
        %v2370 = vpow.pop %v2369
        %v2371 = vmul.f32 %v2317, 1.442695
        %v2372 = vpow.pop %v2371
        %v2373 = vmul.f32 %v2318, 1.442695
        %v2374 = vpow.pop %v2373
        %v2375 = vmul.f32 %v2319, 1.442695
        %v2376 = vpow.pop %v2375
        %v2377 = vmul.f32 %v2320, 1.442695
        %v2378 = vpow.pop %v2377
        %v2379 = vmul.f32 %v2321, 1.442695
        %v2380 = vpow.pop %v2379
        %v2381 = vmul.f32 %v2322, 1.442695
        %v2382 = vpow.pop %v2381
        %v2383 = vmul.f32 %v2323, 1.442695
        %v2384 = vpow.pop %v2383
        %v2385 = vmul.f32 %v2324, 1.442695
        %v2386 = vpow.pop %v2385
        %v2387 = vmul.f32 %v2325, 1.442695
        %v2388 = vpow.pop %v2387
        %v2389 = vmul.f32 %v2326, 1.442695
        %v2390 = vpow.pop %v2389
        %v2391 = vadd.f32 %v2328, %v2330
        %2392 = vadd.xlane.f32.xlu0 %v2391
        %v2393 = vpop.xlane.xlu0 %2392
        %v2394 = vadd.f32 %v2332, %v2334
        %2395 = vadd.xlane.f32.xlu0 %v2394
        %v2396 = vpop.xlane.xlu0 %2395
        %v2397 = vadd.f32 %v2336, %v2338
        %2398 = vadd.xlane.f32.xlu0 %v2397
        %v2399 = vpop.xlane.xlu0 %2398
        %v2400 = vadd.f32 %v2340, %v2342
        %2401 = vadd.xlane.f32.xlu0 %v2400
        %v2402 = vpop.xlane.xlu0 %2401
        %v2403 = vadd.f32 %v2344, %v2346
        %2404 = vadd.xlane.f32.xlu0 %v2403
        %v2405 = vpop.xlane.xlu0 %2404
        %v2406 = vadd.f32 %v2348, %v2350
        %2407 = vadd.xlane.f32.xlu0 %v2406
        %v2408 = vpop.xlane.xlu0 %2407
        %v2409 = vadd.f32 %v2352, %v2354
        %2410 = vadd.xlane.f32.xlu0 %v2409
        %v2411 = vpop.xlane.xlu0 %2410
        %v2412 = vadd.f32 %v2356, %v2358
        %2413 = vadd.xlane.f32.xlu0 %v2412
        %v2414 = vpop.xlane.xlu0 %2413
        %v2415 = vadd.f32 %v2360, %v2362
        %2416 = vadd.xlane.f32.xlu0 %v2415
        %v2417 = vpop.xlane.xlu0 %2416
        %v2418 = vadd.f32 %v2364, %v2366
        %2419 = vadd.xlane.f32.xlu0 %v2418
        %v2420 = vpop.xlane.xlu0 %2419
        %v2421 = vadd.f32 %v2368, %v2370
        %2422 = vadd.xlane.f32.xlu0 %v2421
        %v2423 = vpop.xlane.xlu0 %2422
        %v2424 = vadd.f32 %v2372, %v2374
        %2425 = vadd.xlane.f32.xlu0 %v2424
        %v2426 = vpop.xlane.xlu0 %2425
        %v2427 = vadd.f32 %v2376, %v2378
        %2428 = vadd.xlane.f32.xlu0 %v2427
        %v2429 = vpop.xlane.xlu0 %2428
        %v2430 = vadd.f32 %v2380, %v2382
        %2431 = vadd.xlane.f32.xlu0 %v2430
        %v2432 = vpop.xlane.xlu0 %2431
        %v2433 = vadd.f32 %v2384, %v2386
        %2434 = vadd.xlane.f32.xlu0 %v2433
        %v2435 = vpop.xlane.xlu0 %2434
        %v2436 = vadd.f32 %v2388, %v2390
        %2437 = vadd.xlane.f32.xlu0 %v2436
        %v2438 = vpop.xlane.xlu0 %2437
        %v2439 = vrcp.pop %v2393
        %v2440 = vmul.f32 %v2393, %v2439
        %v2441 = vsub.f32 1.0, %v2440
        %v2442 = vmul.f32 %v2439, %v2441
        %v2443 = vadd.f32 %v2439, %v2442
        %vm2444 = vweird.f32 %v2393
        %vm2445 = vweird.f32 %v2439
        %vm2446 = vmor %vm2444, %vm2445
        %v2447 = vsel %vm2446, %v2439, %v2443
        %v2448 = vand.u32 2147483647, %v2393
        %vm2449 = vcmp.eq.f32.partialorder %v2448, 8.507059e+37
        %v2450 = vand.u32 %v2393, 2147483648
        %v2451 = vor.u32 1.1754944e-38, %v2450
        %v2452 = vsel %vm2449, %v2451, %v2447
        %v2453 = vmul.f32 1.0, %v2452
        %v2454 = vrcp.pop %v2396
        %v2455 = vmul.f32 %v2396, %v2454
        %v2456 = vsub.f32 1.0, %v2455
        %v2457 = vmul.f32 %v2454, %v2456
        %v2458 = vadd.f32 %v2454, %v2457
        %vm2459 = vweird.f32 %v2396
        %vm2460 = vweird.f32 %v2454
        %vm2461 = vmor %vm2459, %vm2460
        %v2462 = vsel %vm2461, %v2454, %v2458
        %v2463 = vand.u32 2147483647, %v2396
        %vm2464 = vcmp.eq.f32.partialorder %v2463, 8.507059e+37
        %v2465 = vand.u32 %v2396, 2147483648
        %v2466 = vor.u32 1.1754944e-38, %v2465
        %v2467 = vsel %vm2464, %v2466, %v2462
        %v2468 = vmul.f32 1.0, %v2467
        %v2469 = vrcp.pop %v2399
        %v2470 = vmul.f32 %v2399, %v2469
        %v2471 = vsub.f32 1.0, %v2470
        %v2472 = vmul.f32 %v2469, %v2471
        %v2473 = vadd.f32 %v2469, %v2472
        %vm2474 = vweird.f32 %v2399
        %vm2475 = vweird.f32 %v2469
        %vm2476 = vmor %vm2474, %vm2475
        %v2477 = vsel %vm2476, %v2469, %v2473
        %v2478 = vand.u32 2147483647, %v2399
        %vm2479 = vcmp.eq.f32.partialorder %v2478, 8.507059e+37
        %v2480 = vand.u32 %v2399, 2147483648
        %v2481 = vor.u32 1.1754944e-38, %v2480
        %v2482 = vsel %vm2479, %v2481, %v2477
        %v2483 = vmul.f32 1.0, %v2482
        %v2484 = vrcp.pop %v2402
        %v2485 = vmul.f32 %v2402, %v2484
        %v2486 = vsub.f32 1.0, %v2485
        %v2487 = vmul.f32 %v2484, %v2486
        %v2488 = vadd.f32 %v2484, %v2487
        %vm2489 = vweird.f32 %v2402
        %vm2490 = vweird.f32 %v2484
        %vm2491 = vmor %vm2489, %vm2490
        %v2492 = vsel %vm2491, %v2484, %v2488
        %v2493 = vand.u32 2147483647, %v2402
        %vm2494 = vcmp.eq.f32.partialorder %v2493, 8.507059e+37
        %v2495 = vand.u32 %v2402, 2147483648
        %v2496 = vor.u32 1.1754944e-38, %v2495
        %v2497 = vsel %vm2494, %v2496, %v2492
        %v2498 = vmul.f32 1.0, %v2497
        %v2499 = vrcp.pop %v2405
        %v2500 = vmul.f32 %v2405, %v2499
        %v2501 = vsub.f32 1.0, %v2500
        %v2502 = vmul.f32 %v2499, %v2501
        %v2503 = vadd.f32 %v2499, %v2502
        %vm2504 = vweird.f32 %v2405
        %vm2505 = vweird.f32 %v2499
        %vm2506 = vmor %vm2504, %vm2505
        %v2507 = vsel %vm2506, %v2499, %v2503
        %v2508 = vand.u32 2147483647, %v2405
        %vm2509 = vcmp.eq.f32.partialorder %v2508, 8.507059e+37
        %v2510 = vand.u32 %v2405, 2147483648
        %v2511 = vor.u32 1.1754944e-38, %v2510
        %v2512 = vsel %vm2509, %v2511, %v2507
        %v2513 = vmul.f32 1.0, %v2512
        %v2514 = vrcp.pop %v2408
        %v2515 = vmul.f32 %v2408, %v2514
        %v2516 = vsub.f32 1.0, %v2515
        %v2517 = vmul.f32 %v2514, %v2516
        %v2518 = vadd.f32 %v2514, %v2517
        %vm2519 = vweird.f32 %v2408
        %vm2520 = vweird.f32 %v2514
        %vm2521 = vmor %vm2519, %vm2520
        %v2522 = vsel %vm2521, %v2514, %v2518
        %v2523 = vand.u32 2147483647, %v2408
        %vm2524 = vcmp.eq.f32.partialorder %v2523, 8.507059e+37
        %v2525 = vand.u32 %v2408, 2147483648
        %v2526 = vor.u32 1.1754944e-38, %v2525
        %v2527 = vsel %vm2524, %v2526, %v2522
        %v2528 = vmul.f32 1.0, %v2527
        %v2529 = vrcp.pop %v2411
        %v2530 = vmul.f32 %v2411, %v2529
        %v2531 = vsub.f32 1.0, %v2530
        %v2532 = vmul.f32 %v2529, %v2531
        %v2533 = vadd.f32 %v2529, %v2532
        %vm2534 = vweird.f32 %v2411
        %vm2535 = vweird.f32 %v2529
        %vm2536 = vmor %vm2534, %vm2535
        %v2537 = vsel %vm2536, %v2529, %v2533
        %v2538 = vand.u32 2147483647, %v2411
        %vm2539 = vcmp.eq.f32.partialorder %v2538, 8.507059e+37
        %v2540 = vand.u32 %v2411, 2147483648
        %v2541 = vor.u32 1.1754944e-38, %v2540
        %v2542 = vsel %vm2539, %v2541, %v2537
        %v2543 = vmul.f32 1.0, %v2542
        %v2544 = vrcp.pop %v2414
        %v2545 = vmul.f32 %v2414, %v2544
        %v2546 = vsub.f32 1.0, %v2545
        %v2547 = vmul.f32 %v2544, %v2546
        %v2548 = vadd.f32 %v2544, %v2547
        %vm2549 = vweird.f32 %v2414
        %vm2550 = vweird.f32 %v2544
        %vm2551 = vmor %vm2549, %vm2550
        %v2552 = vsel %vm2551, %v2544, %v2548
        %v2553 = vand.u32 2147483647, %v2414
        %vm2554 = vcmp.eq.f32.partialorder %v2553, 8.507059e+37
        %v2555 = vand.u32 %v2414, 2147483648
        %v2556 = vor.u32 1.1754944e-38, %v2555
        %v2557 = vsel %vm2554, %v2556, %v2552
        %v2558 = vmul.f32 1.0, %v2557
        %v2559 = vrcp.pop %v2417
        %v2560 = vmul.f32 %v2417, %v2559
        %v2561 = vsub.f32 1.0, %v2560
        %v2562 = vmul.f32 %v2559, %v2561
        %v2563 = vadd.f32 %v2559, %v2562
        %vm2564 = vweird.f32 %v2417
        %vm2565 = vweird.f32 %v2559
        %vm2566 = vmor %vm2564, %vm2565
        %v2567 = vsel %vm2566, %v2559, %v2563
        %v2568 = vand.u32 2147483647, %v2417
        %vm2569 = vcmp.eq.f32.partialorder %v2568, 8.507059e+37
        %v2570 = vand.u32 %v2417, 2147483648
        %v2571 = vor.u32 1.1754944e-38, %v2570
        %v2572 = vsel %vm2569, %v2571, %v2567
        %v2573 = vmul.f32 1.0, %v2572
        %v2574 = vrcp.pop %v2420
        %v2575 = vmul.f32 %v2420, %v2574
        %v2576 = vsub.f32 1.0, %v2575
        %v2577 = vmul.f32 %v2574, %v2576
        %v2578 = vadd.f32 %v2574, %v2577
        %vm2579 = vweird.f32 %v2420
        %vm2580 = vweird.f32 %v2574
        %vm2581 = vmor %vm2579, %vm2580
        %v2582 = vsel %vm2581, %v2574, %v2578
        %v2583 = vand.u32 2147483647, %v2420
        %vm2584 = vcmp.eq.f32.partialorder %v2583, 8.507059e+37
        %v2585 = vand.u32 %v2420, 2147483648
        %v2586 = vor.u32 1.1754944e-38, %v2585
        %v2587 = vsel %vm2584, %v2586, %v2582
        %v2588 = vmul.f32 1.0, %v2587
        %v2589 = vrcp.pop %v2423
        %v2590 = vmul.f32 %v2423, %v2589
        %v2591 = vsub.f32 1.0, %v2590
        %v2592 = vmul.f32 %v2589, %v2591
        %v2593 = vadd.f32 %v2589, %v2592
        %vm2594 = vweird.f32 %v2423
        %vm2595 = vweird.f32 %v2589
        %vm2596 = vmor %vm2594, %vm2595
        %v2597 = vsel %vm2596, %v2589, %v2593
        %v2598 = vand.u32 2147483647, %v2423
        %vm2599 = vcmp.eq.f32.partialorder %v2598, 8.507059e+37
        %v2600 = vand.u32 %v2423, 2147483648
        %v2601 = vor.u32 1.1754944e-38, %v2600
        %v2602 = vsel %vm2599, %v2601, %v2597
        %v2603 = vmul.f32 1.0, %v2602
        %v2604 = vrcp.pop %v2426
        %v2605 = vmul.f32 %v2426, %v2604
        %v2606 = vsub.f32 1.0, %v2605
        %v2607 = vmul.f32 %v2604, %v2606
        %v2608 = vadd.f32 %v2604, %v2607
        %vm2609 = vweird.f32 %v2426
        %vm2610 = vweird.f32 %v2604
        %vm2611 = vmor %vm2609, %vm2610
        %v2612 = vsel %vm2611, %v2604, %v2608
        %v2613 = vand.u32 2147483647, %v2426
        %vm2614 = vcmp.eq.f32.partialorder %v2613, 8.507059e+37
        %v2615 = vand.u32 %v2426, 2147483648
        %v2616 = vor.u32 1.1754944e-38, %v2615
        %v2617 = vsel %vm2614, %v2616, %v2612
        %v2618 = vmul.f32 1.0, %v2617
        %v2619 = vrcp.pop %v2429
        %v2620 = vmul.f32 %v2429, %v2619
        %v2621 = vsub.f32 1.0, %v2620
        %v2622 = vmul.f32 %v2619, %v2621
        %v2623 = vadd.f32 %v2619, %v2622
        %vm2624 = vweird.f32 %v2429
        %vm2625 = vweird.f32 %v2619
        %vm2626 = vmor %vm2624, %vm2625
        %v2627 = vsel %vm2626, %v2619, %v2623
        %v2628 = vand.u32 2147483647, %v2429
        %vm2629 = vcmp.eq.f32.partialorder %v2628, 8.507059e+37
        %v2630 = vand.u32 %v2429, 2147483648
        %v2631 = vor.u32 1.1754944e-38, %v2630
        %v2632 = vsel %vm2629, %v2631, %v2627
        %v2633 = vmul.f32 1.0, %v2632
        %v2634 = vrcp.pop %v2432
        %v2635 = vmul.f32 %v2432, %v2634
        %v2636 = vsub.f32 1.0, %v2635
        %v2637 = vmul.f32 %v2634, %v2636
        %v2638 = vadd.f32 %v2634, %v2637
        %vm2639 = vweird.f32 %v2432
        %vm2640 = vweird.f32 %v2634
        %vm2641 = vmor %vm2639, %vm2640
        %v2642 = vsel %vm2641, %v2634, %v2638
        %v2643 = vand.u32 2147483647, %v2432
        %vm2644 = vcmp.eq.f32.partialorder %v2643, 8.507059e+37
        %v2645 = vand.u32 %v2432, 2147483648
        %v2646 = vor.u32 1.1754944e-38, %v2645
        %v2647 = vsel %vm2644, %v2646, %v2642
        %v2648 = vmul.f32 1.0, %v2647
        %v2649 = vrcp.pop %v2435
        %v2650 = vmul.f32 %v2435, %v2649
        %v2651 = vsub.f32 1.0, %v2650
        %v2652 = vmul.f32 %v2649, %v2651
        %v2653 = vadd.f32 %v2649, %v2652
        %vm2654 = vweird.f32 %v2435
        %vm2655 = vweird.f32 %v2649
        %vm2656 = vmor %vm2654, %vm2655
        %v2657 = vsel %vm2656, %v2649, %v2653
        %v2658 = vand.u32 2147483647, %v2435
        %vm2659 = vcmp.eq.f32.partialorder %v2658, 8.507059e+37
        %v2660 = vand.u32 %v2435, 2147483648
        %v2661 = vor.u32 1.1754944e-38, %v2660
        %v2662 = vsel %vm2659, %v2661, %v2657
        %v2663 = vmul.f32 1.0, %v2662
        %v2664 = vrcp.pop %v2438
        %v2665 = vmul.f32 %v2438, %v2664
        %v2666 = vsub.f32 1.0, %v2665
        %v2667 = vmul.f32 %v2664, %v2666
        %v2668 = vadd.f32 %v2664, %v2667
        %vm2669 = vweird.f32 %v2438
        %vm2670 = vweird.f32 %v2664
        %vm2671 = vmor %vm2669, %vm2670
        %v2672 = vsel %vm2671, %v2664, %v2668
        %v2673 = vand.u32 2147483647, %v2438
        %vm2674 = vcmp.eq.f32.partialorder %v2673, 8.507059e+37
        %v2675 = vand.u32 %v2438, 2147483648
        %v2676 = vor.u32 1.1754944e-38, %v2675
        %v2677 = vsel %vm2674, %v2676, %v2672
        %v2678 = vmul.f32 1.0, %v2677
        %vm2679 = vcmp.eq.f32.partialorder %v2215, %v2249
        %vm2680 = vcmp.eq.f32.partialorder %v2216, %v2249
        %vm2681 = vcmp.eq.f32.partialorder %v2217, %v2252
        %vm2682 = vcmp.eq.f32.partialorder %v2218, %v2252
        %vm2683 = vcmp.eq.f32.partialorder %v2219, %v2255
        %vm2684 = vcmp.eq.f32.partialorder %v2220, %v2255
        %vm2685 = vcmp.eq.f32.partialorder %v2221, %v2258
        %vm2686 = vcmp.eq.f32.partialorder %v2222, %v2258
        %vm2687 = vcmp.eq.f32.partialorder %v2223, %v2261
        %vm2688 = vcmp.eq.f32.partialorder %v2224, %v2261
        %vm2689 = vcmp.eq.f32.partialorder %v2225, %v2264
        %vm2690 = vcmp.eq.f32.partialorder %v2226, %v2264
        %vm2691 = vcmp.eq.f32.partialorder %v2227, %v2267
        %vm2692 = vcmp.eq.f32.partialorder %v2228, %v2267
        %vm2693 = vcmp.eq.f32.partialorder %v2229, %v2270
        %vm2694 = vcmp.eq.f32.partialorder %v2230, %v2270
        %vm2695 = vcmp.eq.f32.partialorder %v2231, %v2273
        %vm2696 = vcmp.eq.f32.partialorder %v2232, %v2273
        %vm2697 = vcmp.eq.f32.partialorder %v2233, %v2276
        %vm2698 = vcmp.eq.f32.partialorder %v2234, %v2276
        %vm2699 = vcmp.eq.f32.partialorder %v2235, %v2279
        %vm2700 = vcmp.eq.f32.partialorder %v2236, %v2279
        %vm2701 = vcmp.eq.f32.partialorder %v2237, %v2282
        %vm2702 = vcmp.eq.f32.partialorder %v2238, %v2282
        %vm2703 = vcmp.eq.f32.partialorder %v2239, %v2285
        %vm2704 = vcmp.eq.f32.partialorder %v2240, %v2285
        %vm2705 = vcmp.eq.f32.partialorder %v2241, %v2288
        %vm2706 = vcmp.eq.f32.partialorder %v2242, %v2288
        %vm2707 = vcmp.eq.f32.partialorder %v2243, %v2291
        %vm2708 = vcmp.eq.f32.partialorder %v2244, %v2291
        %vm2709 = vcmp.eq.f32.partialorder %v2245, %v2294
        %vm2710 = vcmp.eq.f32.partialorder %v2246, %v2294
        %v2711 = vsel %vm2679, %v1469, 256
        %v2712 = vsel %vm2680, %v1470, 256
        %v2713 = vsel %vm2681, %v1469, 256
        %v2714 = vsel %vm2682, %v1470, 256
        %v2715 = vsel %vm2683, %v1469, 256
        %v2716 = vsel %vm2684, %v1470, 256
        %v2717 = vsel %vm2685, %v1469, 256
        %v2718 = vsel %vm2686, %v1470, 256
        %v2719 = vsel %vm2687, %v1469, 256
        %v2720 = vsel %vm2688, %v1470, 256
        %v2721 = vsel %vm2689, %v1469, 256
        %v2722 = vsel %vm2690, %v1470, 256
        %v2723 = vsel %vm2691, %v1469, 256
        %v2724 = vsel %vm2692, %v1470, 256
        %v2725 = vsel %vm2693, %v1469, 256
        %v2726 = vsel %vm2694, %v1470, 256
        %v2727 = vsel %vm2695, %v1469, 256
        %v2728 = vsel %vm2696, %v1470, 256
        %v2729 = vsel %vm2697, %v1469, 256
        %v2730 = vsel %vm2698, %v1470, 256
        %v2731 = vsel %vm2699, %v1469, 256
        %v2732 = vsel %vm2700, %v1470, 256
        %v2733 = vsel %vm2701, %v1469, 256
        %v2734 = vsel %vm2702, %v1470, 256
        %v2735 = vsel %vm2703, %v1469, 256
        %v2736 = vsel %vm2704, %v1470, 256
        %v2737 = vsel %vm2705, %v1469, 256
        %v2738 = vsel %vm2706, %v1470, 256
        %v2739 = vsel %vm2707, %v1469, 256
        %v2740 = vsel %vm2708, %v1470, 256
        %v2741 = vsel %vm2709, %v1469, 256
        %v2742 = vsel %vm2710, %v1470, 256
        %vm2743 = vcmp.lt.s32.totalorder %v2711, %v2712
        %v2744 = vsel %vm2743, %v2711, %v2712
        %v2745 = vand.u32 %v2744, 65535
        %v2746 = vshra.s32 %v2744, 16
        %v2747 = vcvt.s32.f32 %v2745
        %v2748 = vcvt.s32.f32 %v2746
        %2749 = vmin.xlane.f32.xlu0 %v2748
        %v2750 = vpop.xlane.xlu0 %2749
        %vm2751 = vcmp.eq.f32.partialorder %v2748, %v2750
        %v2752 = vsel %vm2751, %v2747, inf
        %2753 = vmin.xlane.f32.xlu0 %v2752
        %v2754 = vpop.xlane.xlu0 %2753
        %v2755 = vcvt.f32.s32 %v2754
        %v2756 = vcvt.f32.s32 %v2750
        %v2757 = vshll.u32 %v2756, 16
        %v2758 = vadd.s32 %v2757, %v2755
        %vm2759 = vcmp.lt.s32.totalorder %v2713, %v2714
        %v2760 = vsel %vm2759, %v2713, %v2714
        %v2761 = vand.u32 %v2760, 65535
        %v2762 = vshra.s32 %v2760, 16
        %v2763 = vcvt.s32.f32 %v2761
        %v2764 = vcvt.s32.f32 %v2762
        %2765 = vmin.xlane.f32.xlu0 %v2764
        %v2766 = vpop.xlane.xlu0 %2765
        %vm2767 = vcmp.eq.f32.partialorder %v2764, %v2766
        %v2768 = vsel %vm2767, %v2763, inf
        %2769 = vmin.xlane.f32.xlu0 %v2768
        %v2770 = vpop.xlane.xlu0 %2769
        %v2771 = vcvt.f32.s32 %v2770
        %v2772 = vcvt.f32.s32 %v2766
        %v2773 = vshll.u32 %v2772, 16
        %v2774 = vadd.s32 %v2773, %v2771
        %vm2775 = vcmp.lt.s32.totalorder %v2715, %v2716
        %v2776 = vsel %vm2775, %v2715, %v2716
        %v2777 = vand.u32 %v2776, 65535
        %v2778 = vshra.s32 %v2776, 16
        %v2779 = vcvt.s32.f32 %v2777
        %v2780 = vcvt.s32.f32 %v2778
        %2781 = vmin.xlane.f32.xlu0 %v2780
        %v2782 = vpop.xlane.xlu0 %2781
        %vm2783 = vcmp.eq.f32.partialorder %v2780, %v2782
        %v2784 = vsel %vm2783, %v2779, inf
        %2785 = vmin.xlane.f32.xlu0 %v2784
        %v2786 = vpop.xlane.xlu0 %2785
        %v2787 = vcvt.f32.s32 %v2786
        %v2788 = vcvt.f32.s32 %v2782
        %v2789 = vshll.u32 %v2788, 16
        %v2790 = vadd.s32 %v2789, %v2787
        %vm2791 = vcmp.lt.s32.totalorder %v2717, %v2718
        %v2792 = vsel %vm2791, %v2717, %v2718
        %v2793 = vand.u32 %v2792, 65535
        %v2794 = vshra.s32 %v2792, 16
        %v2795 = vcvt.s32.f32 %v2793
        %v2796 = vcvt.s32.f32 %v2794
        %2797 = vmin.xlane.f32.xlu0 %v2796
        %v2798 = vpop.xlane.xlu0 %2797
        %vm2799 = vcmp.eq.f32.partialorder %v2796, %v2798
        %v2800 = vsel %vm2799, %v2795, inf
        %2801 = vmin.xlane.f32.xlu0 %v2800
        %v2802 = vpop.xlane.xlu0 %2801
        %v2803 = vcvt.f32.s32 %v2802
        %v2804 = vcvt.f32.s32 %v2798
        %v2805 = vshll.u32 %v2804, 16
        %v2806 = vadd.s32 %v2805, %v2803
        %vm2807 = vcmp.lt.s32.totalorder %v2719, %v2720
        %v2808 = vsel %vm2807, %v2719, %v2720
        %v2809 = vand.u32 %v2808, 65535
        %v2810 = vshra.s32 %v2808, 16
        %v2811 = vcvt.s32.f32 %v2809
        %v2812 = vcvt.s32.f32 %v2810
        %2813 = vmin.xlane.f32.xlu0 %v2812
        %v2814 = vpop.xlane.xlu0 %2813
        %vm2815 = vcmp.eq.f32.partialorder %v2812, %v2814
        %v2816 = vsel %vm2815, %v2811, inf
        %2817 = vmin.xlane.f32.xlu0 %v2816
        %v2818 = vpop.xlane.xlu0 %2817
        %v2819 = vcvt.f32.s32 %v2818
        %v2820 = vcvt.f32.s32 %v2814
        %v2821 = vshll.u32 %v2820, 16
        %v2822 = vadd.s32 %v2821, %v2819
        %vm2823 = vcmp.lt.s32.totalorder %v2721, %v2722
        %v2824 = vsel %vm2823, %v2721, %v2722
        %v2825 = vand.u32 %v2824, 65535
        %v2826 = vshra.s32 %v2824, 16
        %v2827 = vcvt.s32.f32 %v2825
        %v2828 = vcvt.s32.f32 %v2826
        %2829 = vmin.xlane.f32.xlu0 %v2828
        %v2830 = vpop.xlane.xlu0 %2829
        %vm2831 = vcmp.eq.f32.partialorder %v2828, %v2830
        %v2832 = vsel %vm2831, %v2827, inf
        %2833 = vmin.xlane.f32.xlu0 %v2832
        %v2834 = vpop.xlane.xlu0 %2833
        %v2835 = vcvt.f32.s32 %v2834
        %v2836 = vcvt.f32.s32 %v2830
        %v2837 = vshll.u32 %v2836, 16
        %v2838 = vadd.s32 %v2837, %v2835
        %vm2839 = vcmp.lt.s32.totalorder %v2723, %v2724
        %v2840 = vsel %vm2839, %v2723, %v2724
        %v2841 = vand.u32 %v2840, 65535
        %v2842 = vshra.s32 %v2840, 16
        %v2843 = vcvt.s32.f32 %v2841
        %v2844 = vcvt.s32.f32 %v2842
        %2845 = vmin.xlane.f32.xlu0 %v2844
        %v2846 = vpop.xlane.xlu0 %2845
        %vm2847 = vcmp.eq.f32.partialorder %v2844, %v2846
        %v2848 = vsel %vm2847, %v2843, inf
        %2849 = vmin.xlane.f32.xlu0 %v2848
        %v2850 = vpop.xlane.xlu0 %2849
        %v2851 = vcvt.f32.s32 %v2850
        %v2852 = vcvt.f32.s32 %v2846
        %v2853 = vshll.u32 %v2852, 16
        %v2854 = vadd.s32 %v2853, %v2851
        %vm2855 = vcmp.lt.s32.totalorder %v2725, %v2726
        %v2856 = vsel %vm2855, %v2725, %v2726
        %v2857 = vand.u32 %v2856, 65535
        %v2858 = vshra.s32 %v2856, 16
        %v2859 = vcvt.s32.f32 %v2857
        %v2860 = vcvt.s32.f32 %v2858
        %2861 = vmin.xlane.f32.xlu0 %v2860
        %v2862 = vpop.xlane.xlu0 %2861
        %vm2863 = vcmp.eq.f32.partialorder %v2860, %v2862
        %v2864 = vsel %vm2863, %v2859, inf
        %2865 = vmin.xlane.f32.xlu0 %v2864
        %v2866 = vpop.xlane.xlu0 %2865
        %v2867 = vcvt.f32.s32 %v2866
        %v2868 = vcvt.f32.s32 %v2862
        %v2869 = vshll.u32 %v2868, 16
        %v2870 = vadd.s32 %v2869, %v2867
        %vm2871 = vcmp.lt.s32.totalorder %v2727, %v2728
        %v2872 = vsel %vm2871, %v2727, %v2728
        %v2873 = vand.u32 %v2872, 65535
        %v2874 = vshra.s32 %v2872, 16
        %v2875 = vcvt.s32.f32 %v2873
        %v2876 = vcvt.s32.f32 %v2874
        %2877 = vmin.xlane.f32.xlu0 %v2876
        %v2878 = vpop.xlane.xlu0 %2877
        %vm2879 = vcmp.eq.f32.partialorder %v2876, %v2878
        %v2880 = vsel %vm2879, %v2875, inf
        %2881 = vmin.xlane.f32.xlu0 %v2880
        %v2882 = vpop.xlane.xlu0 %2881
        %v2883 = vcvt.f32.s32 %v2882
        %v2884 = vcvt.f32.s32 %v2878
        %v2885 = vshll.u32 %v2884, 16
        %v2886 = vadd.s32 %v2885, %v2883
        %vm2887 = vcmp.lt.s32.totalorder %v2729, %v2730
        %v2888 = vsel %vm2887, %v2729, %v2730
        %v2889 = vand.u32 %v2888, 65535
        %v2890 = vshra.s32 %v2888, 16
        %v2891 = vcvt.s32.f32 %v2889
        %v2892 = vcvt.s32.f32 %v2890
        %2893 = vmin.xlane.f32.xlu0 %v2892
        %v2894 = vpop.xlane.xlu0 %2893
        %vm2895 = vcmp.eq.f32.partialorder %v2892, %v2894
        %v2896 = vsel %vm2895, %v2891, inf
        %2897 = vmin.xlane.f32.xlu0 %v2896
        %v2898 = vpop.xlane.xlu0 %2897
        %v2899 = vcvt.f32.s32 %v2898
        %v2900 = vcvt.f32.s32 %v2894
        %v2901 = vshll.u32 %v2900, 16
        %v2902 = vadd.s32 %v2901, %v2899
        %vm2903 = vcmp.lt.s32.totalorder %v2731, %v2732
        %v2904 = vsel %vm2903, %v2731, %v2732
        %v2905 = vand.u32 %v2904, 65535
        %v2906 = vshra.s32 %v2904, 16
        %v2907 = vcvt.s32.f32 %v2905
        %v2908 = vcvt.s32.f32 %v2906
        %2909 = vmin.xlane.f32.xlu0 %v2908
        %v2910 = vpop.xlane.xlu0 %2909
        %vm2911 = vcmp.eq.f32.partialorder %v2908, %v2910
        %v2912 = vsel %vm2911, %v2907, inf
        %2913 = vmin.xlane.f32.xlu0 %v2912
        %v2914 = vpop.xlane.xlu0 %2913
        %v2915 = vcvt.f32.s32 %v2914
        %v2916 = vcvt.f32.s32 %v2910
        %v2917 = vshll.u32 %v2916, 16
        %v2918 = vadd.s32 %v2917, %v2915
        %vm2919 = vcmp.lt.s32.totalorder %v2733, %v2734
        %v2920 = vsel %vm2919, %v2733, %v2734
        %v2921 = vand.u32 %v2920, 65535
        %v2922 = vshra.s32 %v2920, 16
        %v2923 = vcvt.s32.f32 %v2921
        %v2924 = vcvt.s32.f32 %v2922
        %2925 = vmin.xlane.f32.xlu0 %v2924
        %v2926 = vpop.xlane.xlu0 %2925
        %vm2927 = vcmp.eq.f32.partialorder %v2924, %v2926
        %v2928 = vsel %vm2927, %v2923, inf
        %2929 = vmin.xlane.f32.xlu0 %v2928
        %v2930 = vpop.xlane.xlu0 %2929
        %v2931 = vcvt.f32.s32 %v2930
        %v2932 = vcvt.f32.s32 %v2926
        %v2933 = vshll.u32 %v2932, 16
        %v2934 = vadd.s32 %v2933, %v2931
        %vm2935 = vcmp.lt.s32.totalorder %v2735, %v2736
        %v2936 = vsel %vm2935, %v2735, %v2736
        %v2937 = vand.u32 %v2936, 65535
        %v2938 = vshra.s32 %v2936, 16
        %v2939 = vcvt.s32.f32 %v2937
        %v2940 = vcvt.s32.f32 %v2938
        %2941 = vmin.xlane.f32.xlu0 %v2940
        %v2942 = vpop.xlane.xlu0 %2941
        %vm2943 = vcmp.eq.f32.partialorder %v2940, %v2942
        %v2944 = vsel %vm2943, %v2939, inf
        %2945 = vmin.xlane.f32.xlu0 %v2944
        %v2946 = vpop.xlane.xlu0 %2945
        %v2947 = vcvt.f32.s32 %v2946
        %v2948 = vcvt.f32.s32 %v2942
        %v2949 = vshll.u32 %v2948, 16
        %v2950 = vadd.s32 %v2949, %v2947
        %vm2951 = vcmp.lt.s32.totalorder %v2737, %v2738
        %v2952 = vsel %vm2951, %v2737, %v2738
        %v2953 = vand.u32 %v2952, 65535
        %v2954 = vshra.s32 %v2952, 16
        %v2955 = vcvt.s32.f32 %v2953
        %v2956 = vcvt.s32.f32 %v2954
        %2957 = vmin.xlane.f32.xlu0 %v2956
        %v2958 = vpop.xlane.xlu0 %2957
        %vm2959 = vcmp.eq.f32.partialorder %v2956, %v2958
        %v2960 = vsel %vm2959, %v2955, inf
        %2961 = vmin.xlane.f32.xlu0 %v2960
        %v2962 = vpop.xlane.xlu0 %2961
        %v2963 = vcvt.f32.s32 %v2962
        %v2964 = vcvt.f32.s32 %v2958
        %v2965 = vshll.u32 %v2964, 16
        %v2966 = vadd.s32 %v2965, %v2963
        %vm2967 = vcmp.lt.s32.totalorder %v2739, %v2740
        %v2968 = vsel %vm2967, %v2739, %v2740
        %v2969 = vand.u32 %v2968, 65535
        %v2970 = vshra.s32 %v2968, 16
        %v2971 = vcvt.s32.f32 %v2969
        %v2972 = vcvt.s32.f32 %v2970
        %2973 = vmin.xlane.f32.xlu0 %v2972
        %v2974 = vpop.xlane.xlu0 %2973
        %vm2975 = vcmp.eq.f32.partialorder %v2972, %v2974
        %v2976 = vsel %vm2975, %v2971, inf
        %2977 = vmin.xlane.f32.xlu0 %v2976
        %v2978 = vpop.xlane.xlu0 %2977
        %v2979 = vcvt.f32.s32 %v2978
        %v2980 = vcvt.f32.s32 %v2974
        %v2981 = vshll.u32 %v2980, 16
        %v2982 = vadd.s32 %v2981, %v2979
        %vm2983 = vcmp.lt.s32.totalorder %v2741, %v2742
        %v2984 = vsel %vm2983, %v2741, %v2742
        %v2985 = vand.u32 %v2984, 65535
        %v2986 = vshra.s32 %v2984, 16
        %v2987 = vcvt.s32.f32 %v2985
        %v2988 = vcvt.s32.f32 %v2986
        %2989 = vmin.xlane.f32.xlu0 %v2988
        %v2990 = vpop.xlane.xlu0 %2989
        %vm2991 = vcmp.eq.f32.partialorder %v2988, %v2990
        %v2992 = vsel %vm2991, %v2987, inf
        %2993 = vmin.xlane.f32.xlu0 %v2992
        %v2994 = vpop.xlane.xlu0 %2993
        %v2995 = vcvt.f32.s32 %v2994
        %v2996 = vcvt.f32.s32 %v2990
        %v2997 = vshll.u32 %v2996, 16
        %v2998 = vadd.s32 %v2997, %v2995
        %v2999 = vsub.f32 %v2249, %v2249
        %v3000 = vsub.f32 %v2252, %v2252
        %v3001 = vsub.f32 %v2255, %v2255
        %v3002 = vsub.f32 %v2258, %v2258
        %v3003 = vsub.f32 %v2261, %v2261
        %v3004 = vsub.f32 %v2264, %v2264
        %v3005 = vsub.f32 %v2267, %v2267
        %v3006 = vsub.f32 %v2270, %v2270
        %v3007 = vsub.f32 %v2273, %v2273
        %v3008 = vsub.f32 %v2276, %v2276
        %v3009 = vsub.f32 %v2279, %v2279
        %v3010 = vsub.f32 %v2282, %v2282
        %v3011 = vsub.f32 %v2285, %v2285
        %v3012 = vsub.f32 %v2288, %v2288
        %v3013 = vsub.f32 %v2291, %v2291
        %v3014 = vsub.f32 %v2294, %v2294
        %v3015 = vmul.f32 %v2999, 1.442695
        %v3016 = vpow.pop %v3015
        %v3017 = vmul.f32 %v3000, 1.442695
        %v3018 = vpow.pop %v3017
        %v3019 = vmul.f32 %v3001, 1.442695
        %v3020 = vpow.pop %v3019
        %v3021 = vmul.f32 %v3002, 1.442695
        %v3022 = vpow.pop %v3021
        %v3023 = vmul.f32 %v3003, 1.442695
        %v3024 = vpow.pop %v3023
        %v3025 = vmul.f32 %v3004, 1.442695
        %v3026 = vpow.pop %v3025
        %v3027 = vmul.f32 %v3005, 1.442695
        %v3028 = vpow.pop %v3027
        %v3029 = vmul.f32 %v3006, 1.442695
        %v3030 = vpow.pop %v3029
        %v3031 = vmul.f32 %v3007, 1.442695
        %v3032 = vpow.pop %v3031
        %v3033 = vmul.f32 %v3008, 1.442695
        %v3034 = vpow.pop %v3033
        %v3035 = vmul.f32 %v3009, 1.442695
        %v3036 = vpow.pop %v3035
        %v3037 = vmul.f32 %v3010, 1.442695
        %v3038 = vpow.pop %v3037
        %v3039 = vmul.f32 %v3011, 1.442695
        %v3040 = vpow.pop %v3039
        %v3041 = vmul.f32 %v3012, 1.442695
        %v3042 = vpow.pop %v3041
        %v3043 = vmul.f32 %v3013, 1.442695
        %v3044 = vpow.pop %v3043
        %v3045 = vmul.f32 %v3014, 1.442695
        %v3046 = vpow.pop %v3045
        %v3047 = vmul.f32 %v3016, %v2453
        %v3048 = vmul.f32 %v3018, %v2468
        %v3049 = vmul.f32 %v3020, %v2483
        %v3050 = vmul.f32 %v3022, %v2498
        %v3051 = vmul.f32 %v3024, %v2513
        %v3052 = vmul.f32 %v3026, %v2528
        %v3053 = vmul.f32 %v3028, %v2543
        %v3054 = vmul.f32 %v3030, %v2558
        %v3055 = vmul.f32 %v3032, %v2573
        %v3056 = vmul.f32 %v3034, %v2588
        %v3057 = vmul.f32 %v3036, %v2603
        %v3058 = vmul.f32 %v3038, %v2618
        %v3059 = vmul.f32 %v3040, %v2633
        %v3060 = vmul.f32 %v3042, %v2648
        %v3061 = vmul.f32 %v3044, %v2663
        %v3062 = vmul.f32 %v3046, %v2678
        %vm3063 = vcmp.eq.s32.totalorder %v1469, 0
        %v3064 = vsel %vm3063, %v3047, 0.0
        %v3065 = vsel %vm3063, %v3048, 0.0
        %v3066 = vsel %vm3063, %v3049, 0.0
        %v3067 = vsel %vm3063, %v3050, 0.0
        %v3068 = vsel %vm3063, %v3051, 0.0
        %v3069 = vsel %vm3063, %v3052, 0.0
        %v3070 = vsel %vm3063, %v3053, 0.0
        %v3071 = vsel %vm3063, %v3054, 0.0
        %v3072 = vsel %vm3063, %v3055, 0.0
        %v3073 = vsel %vm3063, %v3056, 0.0
        %v3074 = vsel %vm3063, %v3057, 0.0
        %v3075 = vsel %vm3063, %v3058, 0.0
        %v3076 = vsel %vm3063, %v3059, 0.0
        %v3077 = vsel %vm3063, %v3060, 0.0
        %v3078 = vsel %vm3063, %v3061, 0.0
        %v3079 = vsel %vm3063, %v3062, 0.0
        %v3080 = vsel %vm3063, %v2758, 0
        %v3081 = vsel %vm3063, %v2774, 0
        %v3082 = vsel %vm3063, %v2790, 0
        %v3083 = vsel %vm3063, %v2806, 0
        %v3084 = vsel %vm3063, %v2822, 0
        %v3085 = vsel %vm3063, %v2838, 0
        %v3086 = vsel %vm3063, %v2854, 0
        %v3087 = vsel %vm3063, %v2870, 0
        %v3088 = vsel %vm3063, %v2886, 0
        %v3089 = vsel %vm3063, %v2902, 0
        %v3090 = vsel %vm3063, %v2918, 0
        %v3091 = vsel %vm3063, %v2934, 0
        %v3092 = vsel %vm3063, %v2950, 0
        %v3093 = vsel %vm3063, %v2966, 0
        %v3094 = vsel %vm3063, %v2982, 0
        %v3095 = vsel %vm3063, %v2998, 0
        %v3096 = vsel %vm2679, -inf, %v2215
        %v3097 = vsel %vm2680, -inf, %v2216
        %v3098 = vsel %vm2681, -inf, %v2217
        %v3099 = vsel %vm2682, -inf, %v2218
        %v3100 = vsel %vm2683, -inf, %v2219
        %v3101 = vsel %vm2684, -inf, %v2220
        %v3102 = vsel %vm2685, -inf, %v2221
        %v3103 = vsel %vm2686, -inf, %v2222
        %v3104 = vsel %vm2687, -inf, %v2223
        %v3105 = vsel %vm2688, -inf, %v2224
        %v3106 = vsel %vm2689, -inf, %v2225
        %v3107 = vsel %vm2690, -inf, %v2226
        %v3108 = vsel %vm2691, -inf, %v2227
        %v3109 = vsel %vm2692, -inf, %v2228
        %v3110 = vsel %vm2693, -inf, %v2229
        %v3111 = vsel %vm2694, -inf, %v2230
        %v3112 = vsel %vm2695, -inf, %v2231
        %v3113 = vsel %vm2696, -inf, %v2232
        %v3114 = vsel %vm2697, -inf, %v2233
        %v3115 = vsel %vm2698, -inf, %v2234
        %v3116 = vsel %vm2699, -inf, %v2235
        %v3117 = vsel %vm2700, -inf, %v2236
        %v3118 = vsel %vm2701, -inf, %v2237
        %v3119 = vsel %vm2702, -inf, %v2238
        %v3120 = vsel %vm2703, -inf, %v2239
        %v3121 = vsel %vm2704, -inf, %v2240
        %v3122 = vsel %vm2705, -inf, %v2241
        %v3123 = vsel %vm2706, -inf, %v2242
        %v3124 = vsel %vm2707, -inf, %v2243
        %v3125 = vsel %vm2708, -inf, %v2244
        %v3126 = vsel %vm2709, -inf, %v2245
        %v3127 = vsel %vm2710, -inf, %v2246
        %v3128 = vmax.f32 %v3096, %v3097
        %3129 = vmax.xlane.f32.xlu0 %v3128
        %v3130 = vpop.xlane.xlu0 %3129
        %v3131 = vmax.f32 %v3098, %v3099
        %3132 = vmax.xlane.f32.xlu0 %v3131
        %v3133 = vpop.xlane.xlu0 %3132
        %v3134 = vmax.f32 %v3100, %v3101
        %3135 = vmax.xlane.f32.xlu0 %v3134
        %v3136 = vpop.xlane.xlu0 %3135
        %v3137 = vmax.f32 %v3102, %v3103
        %3138 = vmax.xlane.f32.xlu0 %v3137
        %v3139 = vpop.xlane.xlu0 %3138
        %v3140 = vmax.f32 %v3104, %v3105
        %3141 = vmax.xlane.f32.xlu0 %v3140
        %v3142 = vpop.xlane.xlu0 %3141
        %v3143 = vmax.f32 %v3106, %v3107
        %3144 = vmax.xlane.f32.xlu0 %v3143
        %v3145 = vpop.xlane.xlu0 %3144
        %v3146 = vmax.f32 %v3108, %v3109
        %3147 = vmax.xlane.f32.xlu0 %v3146
        %v3148 = vpop.xlane.xlu0 %3147
        %v3149 = vmax.f32 %v3110, %v3111
        %3150 = vmax.xlane.f32.xlu0 %v3149
        %v3151 = vpop.xlane.xlu0 %3150
        %v3152 = vmax.f32 %v3112, %v3113
        %3153 = vmax.xlane.f32.xlu0 %v3152
        %v3154 = vpop.xlane.xlu0 %3153
        %v3155 = vmax.f32 %v3114, %v3115
        %3156 = vmax.xlane.f32.xlu0 %v3155
        %v3157 = vpop.xlane.xlu0 %3156
        %v3158 = vmax.f32 %v3116, %v3117
        %3159 = vmax.xlane.f32.xlu0 %v3158
        %v3160 = vpop.xlane.xlu0 %3159
        %v3161 = vmax.f32 %v3118, %v3119
        %3162 = vmax.xlane.f32.xlu0 %v3161
        %v3163 = vpop.xlane.xlu0 %3162
        %v3164 = vmax.f32 %v3120, %v3121
        %3165 = vmax.xlane.f32.xlu0 %v3164
        %v3166 = vpop.xlane.xlu0 %3165
        %v3167 = vmax.f32 %v3122, %v3123
        %3168 = vmax.xlane.f32.xlu0 %v3167
        %v3169 = vpop.xlane.xlu0 %3168
        %v3170 = vmax.f32 %v3124, %v3125
        %3171 = vmax.xlane.f32.xlu0 %v3170
        %v3172 = vpop.xlane.xlu0 %3171
        %v3173 = vmax.f32 %v3126, %v3127
        %3174 = vmax.xlane.f32.xlu0 %v3173
        %v3175 = vpop.xlane.xlu0 %3174
        %vm3176 = vcmp.eq.f32.partialorder %v3096, %v3130
        %vm3177 = vcmp.eq.f32.partialorder %v3097, %v3130
        %vm3178 = vcmp.eq.f32.partialorder %v3098, %v3133
        %vm3179 = vcmp.eq.f32.partialorder %v3099, %v3133
        %vm3180 = vcmp.eq.f32.partialorder %v3100, %v3136
        %vm3181 = vcmp.eq.f32.partialorder %v3101, %v3136
        %vm3182 = vcmp.eq.f32.partialorder %v3102, %v3139
        %vm3183 = vcmp.eq.f32.partialorder %v3103, %v3139
        %vm3184 = vcmp.eq.f32.partialorder %v3104, %v3142
        %vm3185 = vcmp.eq.f32.partialorder %v3105, %v3142
        %vm3186 = vcmp.eq.f32.partialorder %v3106, %v3145
        %vm3187 = vcmp.eq.f32.partialorder %v3107, %v3145
        %vm3188 = vcmp.eq.f32.partialorder %v3108, %v3148
        %vm3189 = vcmp.eq.f32.partialorder %v3109, %v3148
        %vm3190 = vcmp.eq.f32.partialorder %v3110, %v3151
        %vm3191 = vcmp.eq.f32.partialorder %v3111, %v3151
        %vm3192 = vcmp.eq.f32.partialorder %v3112, %v3154
        %vm3193 = vcmp.eq.f32.partialorder %v3113, %v3154
        %vm3194 = vcmp.eq.f32.partialorder %v3114, %v3157
        %vm3195 = vcmp.eq.f32.partialorder %v3115, %v3157
        %vm3196 = vcmp.eq.f32.partialorder %v3116, %v3160
        %vm3197 = vcmp.eq.f32.partialorder %v3117, %v3160
        %vm3198 = vcmp.eq.f32.partialorder %v3118, %v3163
        %vm3199 = vcmp.eq.f32.partialorder %v3119, %v3163
        %vm3200 = vcmp.eq.f32.partialorder %v3120, %v3166
        %vm3201 = vcmp.eq.f32.partialorder %v3121, %v3166
        %vm3202 = vcmp.eq.f32.partialorder %v3122, %v3169
        %vm3203 = vcmp.eq.f32.partialorder %v3123, %v3169
        %vm3204 = vcmp.eq.f32.partialorder %v3124, %v3172
        %vm3205 = vcmp.eq.f32.partialorder %v3125, %v3172
        %vm3206 = vcmp.eq.f32.partialorder %v3126, %v3175
        %vm3207 = vcmp.eq.f32.partialorder %v3127, %v3175
        %v3208 = vsel %vm3176, %v1469, 256
        %v3209 = vsel %vm3177, %v1470, 256
        %v3210 = vsel %vm3178, %v1469, 256
        %v3211 = vsel %vm3179, %v1470, 256
        %v3212 = vsel %vm3180, %v1469, 256
        %v3213 = vsel %vm3181, %v1470, 256
        %v3214 = vsel %vm3182, %v1469, 256
        %v3215 = vsel %vm3183, %v1470, 256
        %v3216 = vsel %vm3184, %v1469, 256
        %v3217 = vsel %vm3185, %v1470, 256
        %v3218 = vsel %vm3186, %v1469, 256
        %v3219 = vsel %vm3187, %v1470, 256
        %v3220 = vsel %vm3188, %v1469, 256
        %v3221 = vsel %vm3189, %v1470, 256
        %v3222 = vsel %vm3190, %v1469, 256
        %v3223 = vsel %vm3191, %v1470, 256
        %v3224 = vsel %vm3192, %v1469, 256
        %v3225 = vsel %vm3193, %v1470, 256
        %v3226 = vsel %vm3194, %v1469, 256
        %v3227 = vsel %vm3195, %v1470, 256
        %v3228 = vsel %vm3196, %v1469, 256
        %v3229 = vsel %vm3197, %v1470, 256
        %v3230 = vsel %vm3198, %v1469, 256
        %v3231 = vsel %vm3199, %v1470, 256
        %v3232 = vsel %vm3200, %v1469, 256
        %v3233 = vsel %vm3201, %v1470, 256
        %v3234 = vsel %vm3202, %v1469, 256
        %v3235 = vsel %vm3203, %v1470, 256
        %v3236 = vsel %vm3204, %v1469, 256
        %v3237 = vsel %vm3205, %v1470, 256
        %v3238 = vsel %vm3206, %v1469, 256
        %v3239 = vsel %vm3207, %v1470, 256
        %vm3240 = vcmp.lt.s32.totalorder %v3208, %v3209
        %v3241 = vsel %vm3240, %v3208, %v3209
        %v3242 = vand.u32 %v3241, 65535
        %v3243 = vshra.s32 %v3241, 16
        %v3244 = vcvt.s32.f32 %v3242
        %v3245 = vcvt.s32.f32 %v3243
        %3246 = vmin.xlane.f32.xlu0 %v3245
        %v3247 = vpop.xlane.xlu0 %3246
        %vm3248 = vcmp.eq.f32.partialorder %v3245, %v3247
        %v3249 = vsel %vm3248, %v3244, inf
        %3250 = vmin.xlane.f32.xlu0 %v3249
        %v3251 = vpop.xlane.xlu0 %3250
        %v3252 = vcvt.f32.s32 %v3251
        %v3253 = vcvt.f32.s32 %v3247
        %v3254 = vshll.u32 %v3253, 16
        %v3255 = vadd.s32 %v3254, %v3252
        %vm3256 = vcmp.lt.s32.totalorder %v3210, %v3211
        %v3257 = vsel %vm3256, %v3210, %v3211
        %v3258 = vand.u32 %v3257, 65535
        %v3259 = vshra.s32 %v3257, 16
        %v3260 = vcvt.s32.f32 %v3258
        %v3261 = vcvt.s32.f32 %v3259
        %3262 = vmin.xlane.f32.xlu0 %v3261
        %v3263 = vpop.xlane.xlu0 %3262
        %vm3264 = vcmp.eq.f32.partialorder %v3261, %v3263
        %v3265 = vsel %vm3264, %v3260, inf
        %3266 = vmin.xlane.f32.xlu0 %v3265
        %v3267 = vpop.xlane.xlu0 %3266
        %v3268 = vcvt.f32.s32 %v3267
        %v3269 = vcvt.f32.s32 %v3263
        %v3270 = vshll.u32 %v3269, 16
        %v3271 = vadd.s32 %v3270, %v3268
        %vm3272 = vcmp.lt.s32.totalorder %v3212, %v3213
        %v3273 = vsel %vm3272, %v3212, %v3213
        %v3274 = vand.u32 %v3273, 65535
        %v3275 = vshra.s32 %v3273, 16
        %v3276 = vcvt.s32.f32 %v3274
        %v3277 = vcvt.s32.f32 %v3275
        %3278 = vmin.xlane.f32.xlu0 %v3277
        %v3279 = vpop.xlane.xlu0 %3278
        %vm3280 = vcmp.eq.f32.partialorder %v3277, %v3279
        %v3281 = vsel %vm3280, %v3276, inf
        %3282 = vmin.xlane.f32.xlu0 %v3281
        %v3283 = vpop.xlane.xlu0 %3282
        %v3284 = vcvt.f32.s32 %v3283
        %v3285 = vcvt.f32.s32 %v3279
        %v3286 = vshll.u32 %v3285, 16
        %v3287 = vadd.s32 %v3286, %v3284
        %vm3288 = vcmp.lt.s32.totalorder %v3214, %v3215
        %v3289 = vsel %vm3288, %v3214, %v3215
        %v3290 = vand.u32 %v3289, 65535
        %v3291 = vshra.s32 %v3289, 16
        %v3292 = vcvt.s32.f32 %v3290
        %v3293 = vcvt.s32.f32 %v3291
        %3294 = vmin.xlane.f32.xlu0 %v3293
        %v3295 = vpop.xlane.xlu0 %3294
        %vm3296 = vcmp.eq.f32.partialorder %v3293, %v3295
        %v3297 = vsel %vm3296, %v3292, inf
        %3298 = vmin.xlane.f32.xlu0 %v3297
        %v3299 = vpop.xlane.xlu0 %3298
        %v3300 = vcvt.f32.s32 %v3299
        %v3301 = vcvt.f32.s32 %v3295
        %v3302 = vshll.u32 %v3301, 16
        %v3303 = vadd.s32 %v3302, %v3300
        %vm3304 = vcmp.lt.s32.totalorder %v3216, %v3217
        %v3305 = vsel %vm3304, %v3216, %v3217
        %v3306 = vand.u32 %v3305, 65535
        %v3307 = vshra.s32 %v3305, 16
        %v3308 = vcvt.s32.f32 %v3306
        %v3309 = vcvt.s32.f32 %v3307
        %3310 = vmin.xlane.f32.xlu0 %v3309
        %v3311 = vpop.xlane.xlu0 %3310
        %vm3312 = vcmp.eq.f32.partialorder %v3309, %v3311
        %v3313 = vsel %vm3312, %v3308, inf
        %3314 = vmin.xlane.f32.xlu0 %v3313
        %v3315 = vpop.xlane.xlu0 %3314
        %v3316 = vcvt.f32.s32 %v3315
        %v3317 = vcvt.f32.s32 %v3311
        %v3318 = vshll.u32 %v3317, 16
        %v3319 = vadd.s32 %v3318, %v3316
        %vm3320 = vcmp.lt.s32.totalorder %v3218, %v3219
        %v3321 = vsel %vm3320, %v3218, %v3219
        %v3322 = vand.u32 %v3321, 65535
        %v3323 = vshra.s32 %v3321, 16
        %v3324 = vcvt.s32.f32 %v3322
        %v3325 = vcvt.s32.f32 %v3323
        %3326 = vmin.xlane.f32.xlu0 %v3325
        %v3327 = vpop.xlane.xlu0 %3326
        %vm3328 = vcmp.eq.f32.partialorder %v3325, %v3327
        %v3329 = vsel %vm3328, %v3324, inf
        %3330 = vmin.xlane.f32.xlu0 %v3329
        %v3331 = vpop.xlane.xlu0 %3330
        %v3332 = vcvt.f32.s32 %v3331
        %v3333 = vcvt.f32.s32 %v3327
        %v3334 = vshll.u32 %v3333, 16
        %v3335 = vadd.s32 %v3334, %v3332
        %vm3336 = vcmp.lt.s32.totalorder %v3220, %v3221
        %v3337 = vsel %vm3336, %v3220, %v3221
        %v3338 = vand.u32 %v3337, 65535
        %v3339 = vshra.s32 %v3337, 16
        %v3340 = vcvt.s32.f32 %v3338
        %v3341 = vcvt.s32.f32 %v3339
        %3342 = vmin.xlane.f32.xlu0 %v3341
        %v3343 = vpop.xlane.xlu0 %3342
        %vm3344 = vcmp.eq.f32.partialorder %v3341, %v3343
        %v3345 = vsel %vm3344, %v3340, inf
        %3346 = vmin.xlane.f32.xlu0 %v3345
        %v3347 = vpop.xlane.xlu0 %3346
        %v3348 = vcvt.f32.s32 %v3347
        %v3349 = vcvt.f32.s32 %v3343
        %v3350 = vshll.u32 %v3349, 16
        %v3351 = vadd.s32 %v3350, %v3348
        %vm3352 = vcmp.lt.s32.totalorder %v3222, %v3223
        %v3353 = vsel %vm3352, %v3222, %v3223
        %v3354 = vand.u32 %v3353, 65535
        %v3355 = vshra.s32 %v3353, 16
        %v3356 = vcvt.s32.f32 %v3354
        %v3357 = vcvt.s32.f32 %v3355
        %3358 = vmin.xlane.f32.xlu0 %v3357
        %v3359 = vpop.xlane.xlu0 %3358
        %vm3360 = vcmp.eq.f32.partialorder %v3357, %v3359
        %v3361 = vsel %vm3360, %v3356, inf
        %3362 = vmin.xlane.f32.xlu0 %v3361
        %v3363 = vpop.xlane.xlu0 %3362
        %v3364 = vcvt.f32.s32 %v3363
        %v3365 = vcvt.f32.s32 %v3359
        %v3366 = vshll.u32 %v3365, 16
        %v3367 = vadd.s32 %v3366, %v3364
        %vm3368 = vcmp.lt.s32.totalorder %v3224, %v3225
        %v3369 = vsel %vm3368, %v3224, %v3225
        %v3370 = vand.u32 %v3369, 65535
        %v3371 = vshra.s32 %v3369, 16
        %v3372 = vcvt.s32.f32 %v3370
        %v3373 = vcvt.s32.f32 %v3371
        %3374 = vmin.xlane.f32.xlu0 %v3373
        %v3375 = vpop.xlane.xlu0 %3374
        %vm3376 = vcmp.eq.f32.partialorder %v3373, %v3375
        %v3377 = vsel %vm3376, %v3372, inf
        %3378 = vmin.xlane.f32.xlu0 %v3377
        %v3379 = vpop.xlane.xlu0 %3378
        %v3380 = vcvt.f32.s32 %v3379
        %v3381 = vcvt.f32.s32 %v3375
        %v3382 = vshll.u32 %v3381, 16
        %v3383 = vadd.s32 %v3382, %v3380
        %vm3384 = vcmp.lt.s32.totalorder %v3226, %v3227
        %v3385 = vsel %vm3384, %v3226, %v3227
        %v3386 = vand.u32 %v3385, 65535
        %v3387 = vshra.s32 %v3385, 16
        %v3388 = vcvt.s32.f32 %v3386
        %v3389 = vcvt.s32.f32 %v3387
        %3390 = vmin.xlane.f32.xlu0 %v3389
        %v3391 = vpop.xlane.xlu0 %3390
        %vm3392 = vcmp.eq.f32.partialorder %v3389, %v3391
        %v3393 = vsel %vm3392, %v3388, inf
        %3394 = vmin.xlane.f32.xlu0 %v3393
        %v3395 = vpop.xlane.xlu0 %3394
        %v3396 = vcvt.f32.s32 %v3395
        %v3397 = vcvt.f32.s32 %v3391
        %v3398 = vshll.u32 %v3397, 16
        %v3399 = vadd.s32 %v3398, %v3396
        %vm3400 = vcmp.lt.s32.totalorder %v3228, %v3229
        %v3401 = vsel %vm3400, %v3228, %v3229
        %v3402 = vand.u32 %v3401, 65535
        %v3403 = vshra.s32 %v3401, 16
        %v3404 = vcvt.s32.f32 %v3402
        %v3405 = vcvt.s32.f32 %v3403
        %3406 = vmin.xlane.f32.xlu0 %v3405
        %v3407 = vpop.xlane.xlu0 %3406
        %vm3408 = vcmp.eq.f32.partialorder %v3405, %v3407
        %v3409 = vsel %vm3408, %v3404, inf
        %3410 = vmin.xlane.f32.xlu0 %v3409
        %v3411 = vpop.xlane.xlu0 %3410
        %v3412 = vcvt.f32.s32 %v3411
        %v3413 = vcvt.f32.s32 %v3407
        %v3414 = vshll.u32 %v3413, 16
        %v3415 = vadd.s32 %v3414, %v3412
        %vm3416 = vcmp.lt.s32.totalorder %v3230, %v3231
        %v3417 = vsel %vm3416, %v3230, %v3231
        %v3418 = vand.u32 %v3417, 65535
        %v3419 = vshra.s32 %v3417, 16
        %v3420 = vcvt.s32.f32 %v3418
        %v3421 = vcvt.s32.f32 %v3419
        %3422 = vmin.xlane.f32.xlu0 %v3421
        %v3423 = vpop.xlane.xlu0 %3422
        %vm3424 = vcmp.eq.f32.partialorder %v3421, %v3423
        %v3425 = vsel %vm3424, %v3420, inf
        %3426 = vmin.xlane.f32.xlu0 %v3425
        %v3427 = vpop.xlane.xlu0 %3426
        %v3428 = vcvt.f32.s32 %v3427
        %v3429 = vcvt.f32.s32 %v3423
        %v3430 = vshll.u32 %v3429, 16
        %v3431 = vadd.s32 %v3430, %v3428
        %vm3432 = vcmp.lt.s32.totalorder %v3232, %v3233
        %v3433 = vsel %vm3432, %v3232, %v3233
        %v3434 = vand.u32 %v3433, 65535
        %v3435 = vshra.s32 %v3433, 16
        %v3436 = vcvt.s32.f32 %v3434
        %v3437 = vcvt.s32.f32 %v3435
        %3438 = vmin.xlane.f32.xlu0 %v3437
        %v3439 = vpop.xlane.xlu0 %3438
        %vm3440 = vcmp.eq.f32.partialorder %v3437, %v3439
        %v3441 = vsel %vm3440, %v3436, inf
        %3442 = vmin.xlane.f32.xlu0 %v3441
        %v3443 = vpop.xlane.xlu0 %3442
        %v3444 = vcvt.f32.s32 %v3443
        %v3445 = vcvt.f32.s32 %v3439
        %v3446 = vshll.u32 %v3445, 16
        %v3447 = vadd.s32 %v3446, %v3444
        %vm3448 = vcmp.lt.s32.totalorder %v3234, %v3235
        %v3449 = vsel %vm3448, %v3234, %v3235
        %v3450 = vand.u32 %v3449, 65535
        %v3451 = vshra.s32 %v3449, 16
        %v3452 = vcvt.s32.f32 %v3450
        %v3453 = vcvt.s32.f32 %v3451
        %3454 = vmin.xlane.f32.xlu0 %v3453
        %v3455 = vpop.xlane.xlu0 %3454
        %vm3456 = vcmp.eq.f32.partialorder %v3453, %v3455
        %v3457 = vsel %vm3456, %v3452, inf
        %3458 = vmin.xlane.f32.xlu0 %v3457
        %v3459 = vpop.xlane.xlu0 %3458
        %v3460 = vcvt.f32.s32 %v3459
        %v3461 = vcvt.f32.s32 %v3455
        %v3462 = vshll.u32 %v3461, 16
        %v3463 = vadd.s32 %v3462, %v3460
        %vm3464 = vcmp.lt.s32.totalorder %v3236, %v3237
        %v3465 = vsel %vm3464, %v3236, %v3237
        %v3466 = vand.u32 %v3465, 65535
        %v3467 = vshra.s32 %v3465, 16
        %v3468 = vcvt.s32.f32 %v3466
        %v3469 = vcvt.s32.f32 %v3467
        %3470 = vmin.xlane.f32.xlu0 %v3469
        %v3471 = vpop.xlane.xlu0 %3470
        %vm3472 = vcmp.eq.f32.partialorder %v3469, %v3471
        %v3473 = vsel %vm3472, %v3468, inf
        %3474 = vmin.xlane.f32.xlu0 %v3473
        %v3475 = vpop.xlane.xlu0 %3474
        %v3476 = vcvt.f32.s32 %v3475
        %v3477 = vcvt.f32.s32 %v3471
        %v3478 = vshll.u32 %v3477, 16
        %v3479 = vadd.s32 %v3478, %v3476
        %vm3480 = vcmp.lt.s32.totalorder %v3238, %v3239
        %v3481 = vsel %vm3480, %v3238, %v3239
        %v3482 = vand.u32 %v3481, 65535
        %v3483 = vshra.s32 %v3481, 16
        %v3484 = vcvt.s32.f32 %v3482
        %v3485 = vcvt.s32.f32 %v3483
        %3486 = vmin.xlane.f32.xlu0 %v3485
        %v3487 = vpop.xlane.xlu0 %3486
        %vm3488 = vcmp.eq.f32.partialorder %v3485, %v3487
        %v3489 = vsel %vm3488, %v3484, inf
        %3490 = vmin.xlane.f32.xlu0 %v3489
        %v3491 = vpop.xlane.xlu0 %3490
        %v3492 = vcvt.f32.s32 %v3491
        %v3493 = vcvt.f32.s32 %v3487
        %v3494 = vshll.u32 %v3493, 16
        %v3495 = vadd.s32 %v3494, %v3492
        %v3496 = vsub.f32 %v3130, %v2249
        %v3497 = vsub.f32 %v3133, %v2252
        %v3498 = vsub.f32 %v3136, %v2255
        %v3499 = vsub.f32 %v3139, %v2258
        %v3500 = vsub.f32 %v3142, %v2261
        %v3501 = vsub.f32 %v3145, %v2264
        %v3502 = vsub.f32 %v3148, %v2267
        %v3503 = vsub.f32 %v3151, %v2270
        %v3504 = vsub.f32 %v3154, %v2273
        %v3505 = vsub.f32 %v3157, %v2276
        %v3506 = vsub.f32 %v3160, %v2279
        %v3507 = vsub.f32 %v3163, %v2282
        %v3508 = vsub.f32 %v3166, %v2285
        %v3509 = vsub.f32 %v3169, %v2288
        %v3510 = vsub.f32 %v3172, %v2291
        %v3511 = vsub.f32 %v3175, %v2294
        %v3512 = vmul.f32 %v3496, 1.442695
        %v3513 = vpow.pop %v3512
        %v3514 = vmul.f32 %v3497, 1.442695
        %v3515 = vpow.pop %v3514
        %v3516 = vmul.f32 %v3498, 1.442695
        %v3517 = vpow.pop %v3516
        %v3518 = vmul.f32 %v3499, 1.442695
        %v3519 = vpow.pop %v3518
        %v3520 = vmul.f32 %v3500, 1.442695
        %v3521 = vpow.pop %v3520
        %v3522 = vmul.f32 %v3501, 1.442695
        %v3523 = vpow.pop %v3522
        %v3524 = vmul.f32 %v3502, 1.442695
        %v3525 = vpow.pop %v3524
        %v3526 = vmul.f32 %v3503, 1.442695
        %v3527 = vpow.pop %v3526
        %v3528 = vmul.f32 %v3504, 1.442695
        %v3529 = vpow.pop %v3528
        %v3530 = vmul.f32 %v3505, 1.442695
        %v3531 = vpow.pop %v3530
        %v3532 = vmul.f32 %v3506, 1.442695
        %v3533 = vpow.pop %v3532
        %v3534 = vmul.f32 %v3507, 1.442695
        %v3535 = vpow.pop %v3534
        %v3536 = vmul.f32 %v3508, 1.442695
        %v3537 = vpow.pop %v3536
        %v3538 = vmul.f32 %v3509, 1.442695
        %v3539 = vpow.pop %v3538
        %v3540 = vmul.f32 %v3510, 1.442695
        %v3541 = vpow.pop %v3540
        %v3542 = vmul.f32 %v3511, 1.442695
        %v3543 = vpow.pop %v3542
        %v3544 = vmul.f32 %v3513, %v2453
        %v3545 = vmul.f32 %v3515, %v2468
        %v3546 = vmul.f32 %v3517, %v2483
        %v3547 = vmul.f32 %v3519, %v2498
        %v3548 = vmul.f32 %v3521, %v2513
        %v3549 = vmul.f32 %v3523, %v2528
        %v3550 = vmul.f32 %v3525, %v2543
        %v3551 = vmul.f32 %v3527, %v2558
        %v3552 = vmul.f32 %v3529, %v2573
        %v3553 = vmul.f32 %v3531, %v2588
        %v3554 = vmul.f32 %v3533, %v2603
        %v3555 = vmul.f32 %v3535, %v2618
        %v3556 = vmul.f32 %v3537, %v2633
        %v3557 = vmul.f32 %v3539, %v2648
        %v3558 = vmul.f32 %v3541, %v2663
        %v3559 = vmul.f32 %v3543, %v2678
        %vm3560 = vcmp.eq.s32.totalorder %v1469, 1
        %v3561 = vsel %vm3560, %v3544, %v3064
        %v3562 = vsel %vm3560, %v3545, %v3065
        %v3563 = vsel %vm3560, %v3546, %v3066
        %v3564 = vsel %vm3560, %v3547, %v3067
        %v3565 = vsel %vm3560, %v3548, %v3068
        %v3566 = vsel %vm3560, %v3549, %v3069
        %v3567 = vsel %vm3560, %v3550, %v3070
        %v3568 = vsel %vm3560, %v3551, %v3071
        %v3569 = vsel %vm3560, %v3552, %v3072
        %v3570 = vsel %vm3560, %v3553, %v3073
        %v3571 = vsel %vm3560, %v3554, %v3074
        %v3572 = vsel %vm3560, %v3555, %v3075
        %v3573 = vsel %vm3560, %v3556, %v3076
        %v3574 = vsel %vm3560, %v3557, %v3077
        %v3575 = vsel %vm3560, %v3558, %v3078
        %v3576 = vsel %vm3560, %v3559, %v3079
        %v3577 = vsel %vm3560, %v3255, %v3080
        %v3578 = vsel %vm3560, %v3271, %v3081
        %v3579 = vsel %vm3560, %v3287, %v3082
        %v3580 = vsel %vm3560, %v3303, %v3083
        %v3581 = vsel %vm3560, %v3319, %v3084
        %v3582 = vsel %vm3560, %v3335, %v3085
        %v3583 = vsel %vm3560, %v3351, %v3086
        %v3584 = vsel %vm3560, %v3367, %v3087
        %v3585 = vsel %vm3560, %v3383, %v3088
        %v3586 = vsel %vm3560, %v3399, %v3089
        %v3587 = vsel %vm3560, %v3415, %v3090
        %v3588 = vsel %vm3560, %v3431, %v3091
        %v3589 = vsel %vm3560, %v3447, %v3092
        %v3590 = vsel %vm3560, %v3463, %v3093
        %v3591 = vsel %vm3560, %v3479, %v3094
        %v3592 = vsel %vm3560, %v3495, %v3095
        %v3593 = vsel %vm3176, -inf, %v3096
        %v3594 = vsel %vm3177, -inf, %v3097
        %v3595 = vsel %vm3178, -inf, %v3098
        %v3596 = vsel %vm3179, -inf, %v3099
        %v3597 = vsel %vm3180, -inf, %v3100
        %v3598 = vsel %vm3181, -inf, %v3101
        %v3599 = vsel %vm3182, -inf, %v3102
        %v3600 = vsel %vm3183, -inf, %v3103
        %v3601 = vsel %vm3184, -inf, %v3104
        %v3602 = vsel %vm3185, -inf, %v3105
        %v3603 = vsel %vm3186, -inf, %v3106
        %v3604 = vsel %vm3187, -inf, %v3107
        %v3605 = vsel %vm3188, -inf, %v3108
        %v3606 = vsel %vm3189, -inf, %v3109
        %v3607 = vsel %vm3190, -inf, %v3110
        %v3608 = vsel %vm3191, -inf, %v3111
        %v3609 = vsel %vm3192, -inf, %v3112
        %v3610 = vsel %vm3193, -inf, %v3113
        %v3611 = vsel %vm3194, -inf, %v3114
        %v3612 = vsel %vm3195, -inf, %v3115
        %v3613 = vsel %vm3196, -inf, %v3116
        %v3614 = vsel %vm3197, -inf, %v3117
        %v3615 = vsel %vm3198, -inf, %v3118
        %v3616 = vsel %vm3199, -inf, %v3119
        %v3617 = vsel %vm3200, -inf, %v3120
        %v3618 = vsel %vm3201, -inf, %v3121
        %v3619 = vsel %vm3202, -inf, %v3122
        %v3620 = vsel %vm3203, -inf, %v3123
        %v3621 = vsel %vm3204, -inf, %v3124
        %v3622 = vsel %vm3205, -inf, %v3125
        %v3623 = vsel %vm3206, -inf, %v3126
        %v3624 = vsel %vm3207, -inf, %v3127
        %v3625 = vmax.f32 %v3593, %v3594
        %3626 = vmax.xlane.f32.xlu0 %v3625
        %v3627 = vpop.xlane.xlu0 %3626
        %v3628 = vmax.f32 %v3595, %v3596
        %3629 = vmax.xlane.f32.xlu0 %v3628
        %v3630 = vpop.xlane.xlu0 %3629
        %v3631 = vmax.f32 %v3597, %v3598
        %3632 = vmax.xlane.f32.xlu0 %v3631
        %v3633 = vpop.xlane.xlu0 %3632
        %v3634 = vmax.f32 %v3599, %v3600
        %3635 = vmax.xlane.f32.xlu0 %v3634
        %v3636 = vpop.xlane.xlu0 %3635
        %v3637 = vmax.f32 %v3601, %v3602
        %3638 = vmax.xlane.f32.xlu0 %v3637
        %v3639 = vpop.xlane.xlu0 %3638
        %v3640 = vmax.f32 %v3603, %v3604
        %3641 = vmax.xlane.f32.xlu0 %v3640
        %v3642 = vpop.xlane.xlu0 %3641
        %v3643 = vmax.f32 %v3605, %v3606
        %3644 = vmax.xlane.f32.xlu0 %v3643
        %v3645 = vpop.xlane.xlu0 %3644
        %v3646 = vmax.f32 %v3607, %v3608
        %3647 = vmax.xlane.f32.xlu0 %v3646
        %v3648 = vpop.xlane.xlu0 %3647
        %v3649 = vmax.f32 %v3609, %v3610
        %3650 = vmax.xlane.f32.xlu0 %v3649
        %v3651 = vpop.xlane.xlu0 %3650
        %v3652 = vmax.f32 %v3611, %v3612
        %3653 = vmax.xlane.f32.xlu0 %v3652
        %v3654 = vpop.xlane.xlu0 %3653
        %v3655 = vmax.f32 %v3613, %v3614
        %3656 = vmax.xlane.f32.xlu0 %v3655
        %v3657 = vpop.xlane.xlu0 %3656
        %v3658 = vmax.f32 %v3615, %v3616
        %3659 = vmax.xlane.f32.xlu0 %v3658
        %v3660 = vpop.xlane.xlu0 %3659
        %v3661 = vmax.f32 %v3617, %v3618
        %3662 = vmax.xlane.f32.xlu0 %v3661
        %v3663 = vpop.xlane.xlu0 %3662
        %v3664 = vmax.f32 %v3619, %v3620
        %3665 = vmax.xlane.f32.xlu0 %v3664
        %v3666 = vpop.xlane.xlu0 %3665
        %v3667 = vmax.f32 %v3621, %v3622
        %3668 = vmax.xlane.f32.xlu0 %v3667
        %v3669 = vpop.xlane.xlu0 %3668
        %v3670 = vmax.f32 %v3623, %v3624
        %3671 = vmax.xlane.f32.xlu0 %v3670
        %v3672 = vpop.xlane.xlu0 %3671
        %vm3673 = vcmp.eq.f32.partialorder %v3593, %v3627
        %vm3674 = vcmp.eq.f32.partialorder %v3594, %v3627
        %vm3675 = vcmp.eq.f32.partialorder %v3595, %v3630
        %vm3676 = vcmp.eq.f32.partialorder %v3596, %v3630
        %vm3677 = vcmp.eq.f32.partialorder %v3597, %v3633
        %vm3678 = vcmp.eq.f32.partialorder %v3598, %v3633
        %vm3679 = vcmp.eq.f32.partialorder %v3599, %v3636
        %vm3680 = vcmp.eq.f32.partialorder %v3600, %v3636
        %vm3681 = vcmp.eq.f32.partialorder %v3601, %v3639
        %vm3682 = vcmp.eq.f32.partialorder %v3602, %v3639
        %vm3683 = vcmp.eq.f32.partialorder %v3603, %v3642
        %vm3684 = vcmp.eq.f32.partialorder %v3604, %v3642
        %vm3685 = vcmp.eq.f32.partialorder %v3605, %v3645
        %vm3686 = vcmp.eq.f32.partialorder %v3606, %v3645
        %vm3687 = vcmp.eq.f32.partialorder %v3607, %v3648
        %vm3688 = vcmp.eq.f32.partialorder %v3608, %v3648
        %vm3689 = vcmp.eq.f32.partialorder %v3609, %v3651
        %vm3690 = vcmp.eq.f32.partialorder %v3610, %v3651
        %vm3691 = vcmp.eq.f32.partialorder %v3611, %v3654
        %vm3692 = vcmp.eq.f32.partialorder %v3612, %v3654
        %vm3693 = vcmp.eq.f32.partialorder %v3613, %v3657
        %vm3694 = vcmp.eq.f32.partialorder %v3614, %v3657
        %vm3695 = vcmp.eq.f32.partialorder %v3615, %v3660
        %vm3696 = vcmp.eq.f32.partialorder %v3616, %v3660
        %vm3697 = vcmp.eq.f32.partialorder %v3617, %v3663
        %vm3698 = vcmp.eq.f32.partialorder %v3618, %v3663
        %vm3699 = vcmp.eq.f32.partialorder %v3619, %v3666
        %vm3700 = vcmp.eq.f32.partialorder %v3620, %v3666
        %vm3701 = vcmp.eq.f32.partialorder %v3621, %v3669
        %vm3702 = vcmp.eq.f32.partialorder %v3622, %v3669
        %vm3703 = vcmp.eq.f32.partialorder %v3623, %v3672
        %vm3704 = vcmp.eq.f32.partialorder %v3624, %v3672
        %v3705 = vsel %vm3673, %v1469, 256
        %v3706 = vsel %vm3674, %v1470, 256
        %v3707 = vsel %vm3675, %v1469, 256
        %v3708 = vsel %vm3676, %v1470, 256
        %v3709 = vsel %vm3677, %v1469, 256
        %v3710 = vsel %vm3678, %v1470, 256
        %v3711 = vsel %vm3679, %v1469, 256
        %v3712 = vsel %vm3680, %v1470, 256
        %v3713 = vsel %vm3681, %v1469, 256
        %v3714 = vsel %vm3682, %v1470, 256
        %v3715 = vsel %vm3683, %v1469, 256
        %v3716 = vsel %vm3684, %v1470, 256
        %v3717 = vsel %vm3685, %v1469, 256
        %v3718 = vsel %vm3686, %v1470, 256
        %v3719 = vsel %vm3687, %v1469, 256
        %v3720 = vsel %vm3688, %v1470, 256
        %v3721 = vsel %vm3689, %v1469, 256
        %v3722 = vsel %vm3690, %v1470, 256
        %v3723 = vsel %vm3691, %v1469, 256
        %v3724 = vsel %vm3692, %v1470, 256
        %v3725 = vsel %vm3693, %v1469, 256
        %v3726 = vsel %vm3694, %v1470, 256
        %v3727 = vsel %vm3695, %v1469, 256
        %v3728 = vsel %vm3696, %v1470, 256
        %v3729 = vsel %vm3697, %v1469, 256
        %v3730 = vsel %vm3698, %v1470, 256
        %v3731 = vsel %vm3699, %v1469, 256
        %v3732 = vsel %vm3700, %v1470, 256
        %v3733 = vsel %vm3701, %v1469, 256
        %v3734 = vsel %vm3702, %v1470, 256
        %v3735 = vsel %vm3703, %v1469, 256
        %v3736 = vsel %vm3704, %v1470, 256
        %vm3737 = vcmp.lt.s32.totalorder %v3705, %v3706
        %v3738 = vsel %vm3737, %v3705, %v3706
        %v3739 = vand.u32 %v3738, 65535
        %v3740 = vshra.s32 %v3738, 16
        %v3741 = vcvt.s32.f32 %v3739
        %v3742 = vcvt.s32.f32 %v3740
        %3743 = vmin.xlane.f32.xlu0 %v3742
        %v3744 = vpop.xlane.xlu0 %3743
        %vm3745 = vcmp.eq.f32.partialorder %v3742, %v3744
        %v3746 = vsel %vm3745, %v3741, inf
        %3747 = vmin.xlane.f32.xlu0 %v3746
        %v3748 = vpop.xlane.xlu0 %3747
        %v3749 = vcvt.f32.s32 %v3748
        %v3750 = vcvt.f32.s32 %v3744
        %v3751 = vshll.u32 %v3750, 16
        %v3752 = vadd.s32 %v3751, %v3749
        %vm3753 = vcmp.lt.s32.totalorder %v3707, %v3708
        %v3754 = vsel %vm3753, %v3707, %v3708
        %v3755 = vand.u32 %v3754, 65535
        %v3756 = vshra.s32 %v3754, 16
        %v3757 = vcvt.s32.f32 %v3755
        %v3758 = vcvt.s32.f32 %v3756
        %3759 = vmin.xlane.f32.xlu0 %v3758
        %v3760 = vpop.xlane.xlu0 %3759
        %vm3761 = vcmp.eq.f32.partialorder %v3758, %v3760
        %v3762 = vsel %vm3761, %v3757, inf
        %3763 = vmin.xlane.f32.xlu0 %v3762
        %v3764 = vpop.xlane.xlu0 %3763
        %v3765 = vcvt.f32.s32 %v3764
        %v3766 = vcvt.f32.s32 %v3760
        %v3767 = vshll.u32 %v3766, 16
        %v3768 = vadd.s32 %v3767, %v3765
        %vm3769 = vcmp.lt.s32.totalorder %v3709, %v3710
        %v3770 = vsel %vm3769, %v3709, %v3710
        %v3771 = vand.u32 %v3770, 65535
        %v3772 = vshra.s32 %v3770, 16
        %v3773 = vcvt.s32.f32 %v3771
        %v3774 = vcvt.s32.f32 %v3772
        %3775 = vmin.xlane.f32.xlu0 %v3774
        %v3776 = vpop.xlane.xlu0 %3775
        %vm3777 = vcmp.eq.f32.partialorder %v3774, %v3776
        %v3778 = vsel %vm3777, %v3773, inf
        %3779 = vmin.xlane.f32.xlu0 %v3778
        %v3780 = vpop.xlane.xlu0 %3779
        %v3781 = vcvt.f32.s32 %v3780
        %v3782 = vcvt.f32.s32 %v3776
        %v3783 = vshll.u32 %v3782, 16
        %v3784 = vadd.s32 %v3783, %v3781
        %vm3785 = vcmp.lt.s32.totalorder %v3711, %v3712
        %v3786 = vsel %vm3785, %v3711, %v3712
        %v3787 = vand.u32 %v3786, 65535
        %v3788 = vshra.s32 %v3786, 16
        %v3789 = vcvt.s32.f32 %v3787
        %v3790 = vcvt.s32.f32 %v3788
        %3791 = vmin.xlane.f32.xlu0 %v3790
        %v3792 = vpop.xlane.xlu0 %3791
        %vm3793 = vcmp.eq.f32.partialorder %v3790, %v3792
        %v3794 = vsel %vm3793, %v3789, inf
        %3795 = vmin.xlane.f32.xlu0 %v3794
        %v3796 = vpop.xlane.xlu0 %3795
        %v3797 = vcvt.f32.s32 %v3796
        %v3798 = vcvt.f32.s32 %v3792
        %v3799 = vshll.u32 %v3798, 16
        %v3800 = vadd.s32 %v3799, %v3797
        %vm3801 = vcmp.lt.s32.totalorder %v3713, %v3714
        %v3802 = vsel %vm3801, %v3713, %v3714
        %v3803 = vand.u32 %v3802, 65535
        %v3804 = vshra.s32 %v3802, 16
        %v3805 = vcvt.s32.f32 %v3803
        %v3806 = vcvt.s32.f32 %v3804
        %3807 = vmin.xlane.f32.xlu0 %v3806
        %v3808 = vpop.xlane.xlu0 %3807
        %vm3809 = vcmp.eq.f32.partialorder %v3806, %v3808
        %v3810 = vsel %vm3809, %v3805, inf
        %3811 = vmin.xlane.f32.xlu0 %v3810
        %v3812 = vpop.xlane.xlu0 %3811
        %v3813 = vcvt.f32.s32 %v3812
        %v3814 = vcvt.f32.s32 %v3808
        %v3815 = vshll.u32 %v3814, 16
        %v3816 = vadd.s32 %v3815, %v3813
        %vm3817 = vcmp.lt.s32.totalorder %v3715, %v3716
        %v3818 = vsel %vm3817, %v3715, %v3716
        %v3819 = vand.u32 %v3818, 65535
        %v3820 = vshra.s32 %v3818, 16
        %v3821 = vcvt.s32.f32 %v3819
        %v3822 = vcvt.s32.f32 %v3820
        %3823 = vmin.xlane.f32.xlu0 %v3822
        %v3824 = vpop.xlane.xlu0 %3823
        %vm3825 = vcmp.eq.f32.partialorder %v3822, %v3824
        %v3826 = vsel %vm3825, %v3821, inf
        %3827 = vmin.xlane.f32.xlu0 %v3826
        %v3828 = vpop.xlane.xlu0 %3827
        %v3829 = vcvt.f32.s32 %v3828
        %v3830 = vcvt.f32.s32 %v3824
        %v3831 = vshll.u32 %v3830, 16
        %v3832 = vadd.s32 %v3831, %v3829
        %vm3833 = vcmp.lt.s32.totalorder %v3717, %v3718
        %v3834 = vsel %vm3833, %v3717, %v3718
        %v3835 = vand.u32 %v3834, 65535
        %v3836 = vshra.s32 %v3834, 16
        %v3837 = vcvt.s32.f32 %v3835
        %v3838 = vcvt.s32.f32 %v3836
        %3839 = vmin.xlane.f32.xlu0 %v3838
        %v3840 = vpop.xlane.xlu0 %3839
        %vm3841 = vcmp.eq.f32.partialorder %v3838, %v3840
        %v3842 = vsel %vm3841, %v3837, inf
        %3843 = vmin.xlane.f32.xlu0 %v3842
        %v3844 = vpop.xlane.xlu0 %3843
        %v3845 = vcvt.f32.s32 %v3844
        %v3846 = vcvt.f32.s32 %v3840
        %v3847 = vshll.u32 %v3846, 16
        %v3848 = vadd.s32 %v3847, %v3845
        %vm3849 = vcmp.lt.s32.totalorder %v3719, %v3720
        %v3850 = vsel %vm3849, %v3719, %v3720
        %v3851 = vand.u32 %v3850, 65535
        %v3852 = vshra.s32 %v3850, 16
        %v3853 = vcvt.s32.f32 %v3851
        %v3854 = vcvt.s32.f32 %v3852
        %3855 = vmin.xlane.f32.xlu0 %v3854
        %v3856 = vpop.xlane.xlu0 %3855
        %vm3857 = vcmp.eq.f32.partialorder %v3854, %v3856
        %v3858 = vsel %vm3857, %v3853, inf
        %3859 = vmin.xlane.f32.xlu0 %v3858
        %v3860 = vpop.xlane.xlu0 %3859
        %v3861 = vcvt.f32.s32 %v3860
        %v3862 = vcvt.f32.s32 %v3856
        %v3863 = vshll.u32 %v3862, 16
        %v3864 = vadd.s32 %v3863, %v3861
        %vm3865 = vcmp.lt.s32.totalorder %v3721, %v3722
        %v3866 = vsel %vm3865, %v3721, %v3722
        %v3867 = vand.u32 %v3866, 65535
        %v3868 = vshra.s32 %v3866, 16
        %v3869 = vcvt.s32.f32 %v3867
        %v3870 = vcvt.s32.f32 %v3868
        %3871 = vmin.xlane.f32.xlu0 %v3870
        %v3872 = vpop.xlane.xlu0 %3871
        %vm3873 = vcmp.eq.f32.partialorder %v3870, %v3872
        %v3874 = vsel %vm3873, %v3869, inf
        %3875 = vmin.xlane.f32.xlu0 %v3874
        %v3876 = vpop.xlane.xlu0 %3875
        %v3877 = vcvt.f32.s32 %v3876
        %v3878 = vcvt.f32.s32 %v3872
        %v3879 = vshll.u32 %v3878, 16
        %v3880 = vadd.s32 %v3879, %v3877
        %vm3881 = vcmp.lt.s32.totalorder %v3723, %v3724
        %v3882 = vsel %vm3881, %v3723, %v3724
        %v3883 = vand.u32 %v3882, 65535
        %v3884 = vshra.s32 %v3882, 16
        %v3885 = vcvt.s32.f32 %v3883
        %v3886 = vcvt.s32.f32 %v3884
        %3887 = vmin.xlane.f32.xlu0 %v3886
        %v3888 = vpop.xlane.xlu0 %3887
        %vm3889 = vcmp.eq.f32.partialorder %v3886, %v3888
        %v3890 = vsel %vm3889, %v3885, inf
        %3891 = vmin.xlane.f32.xlu0 %v3890
        %v3892 = vpop.xlane.xlu0 %3891
        %v3893 = vcvt.f32.s32 %v3892
        %v3894 = vcvt.f32.s32 %v3888
        %v3895 = vshll.u32 %v3894, 16
        %v3896 = vadd.s32 %v3895, %v3893
        %vm3897 = vcmp.lt.s32.totalorder %v3725, %v3726
        %v3898 = vsel %vm3897, %v3725, %v3726
        %v3899 = vand.u32 %v3898, 65535
        %v3900 = vshra.s32 %v3898, 16
        %v3901 = vcvt.s32.f32 %v3899
        %v3902 = vcvt.s32.f32 %v3900
        %3903 = vmin.xlane.f32.xlu0 %v3902
        %v3904 = vpop.xlane.xlu0 %3903
        %vm3905 = vcmp.eq.f32.partialorder %v3902, %v3904
        %v3906 = vsel %vm3905, %v3901, inf
        %3907 = vmin.xlane.f32.xlu0 %v3906
        %v3908 = vpop.xlane.xlu0 %3907
        %v3909 = vcvt.f32.s32 %v3908
        %v3910 = vcvt.f32.s32 %v3904
        %v3911 = vshll.u32 %v3910, 16
        %v3912 = vadd.s32 %v3911, %v3909
        %vm3913 = vcmp.lt.s32.totalorder %v3727, %v3728
        %v3914 = vsel %vm3913, %v3727, %v3728
        %v3915 = vand.u32 %v3914, 65535
        %v3916 = vshra.s32 %v3914, 16
        %v3917 = vcvt.s32.f32 %v3915
        %v3918 = vcvt.s32.f32 %v3916
        %3919 = vmin.xlane.f32.xlu0 %v3918
        %v3920 = vpop.xlane.xlu0 %3919
        %vm3921 = vcmp.eq.f32.partialorder %v3918, %v3920
        %v3922 = vsel %vm3921, %v3917, inf
        %3923 = vmin.xlane.f32.xlu0 %v3922
        %v3924 = vpop.xlane.xlu0 %3923
        %v3925 = vcvt.f32.s32 %v3924
        %v3926 = vcvt.f32.s32 %v3920
        %v3927 = vshll.u32 %v3926, 16
        %v3928 = vadd.s32 %v3927, %v3925
        %vm3929 = vcmp.lt.s32.totalorder %v3729, %v3730
        %v3930 = vsel %vm3929, %v3729, %v3730
        %v3931 = vand.u32 %v3930, 65535
        %v3932 = vshra.s32 %v3930, 16
        %v3933 = vcvt.s32.f32 %v3931
        %v3934 = vcvt.s32.f32 %v3932
        %3935 = vmin.xlane.f32.xlu0 %v3934
        %v3936 = vpop.xlane.xlu0 %3935
        %vm3937 = vcmp.eq.f32.partialorder %v3934, %v3936
        %v3938 = vsel %vm3937, %v3933, inf
        %3939 = vmin.xlane.f32.xlu0 %v3938
        %v3940 = vpop.xlane.xlu0 %3939
        %v3941 = vcvt.f32.s32 %v3940
        %v3942 = vcvt.f32.s32 %v3936
        %v3943 = vshll.u32 %v3942, 16
        %v3944 = vadd.s32 %v3943, %v3941
        %vm3945 = vcmp.lt.s32.totalorder %v3731, %v3732
        %v3946 = vsel %vm3945, %v3731, %v3732
        %v3947 = vand.u32 %v3946, 65535
        %v3948 = vshra.s32 %v3946, 16
        %v3949 = vcvt.s32.f32 %v3947
        %v3950 = vcvt.s32.f32 %v3948
        %3951 = vmin.xlane.f32.xlu0 %v3950
        %v3952 = vpop.xlane.xlu0 %3951
        %vm3953 = vcmp.eq.f32.partialorder %v3950, %v3952
        %v3954 = vsel %vm3953, %v3949, inf
        %3955 = vmin.xlane.f32.xlu0 %v3954
        %v3956 = vpop.xlane.xlu0 %3955
        %v3957 = vcvt.f32.s32 %v3956
        %v3958 = vcvt.f32.s32 %v3952
        %v3959 = vshll.u32 %v3958, 16
        %v3960 = vadd.s32 %v3959, %v3957
        %vm3961 = vcmp.lt.s32.totalorder %v3733, %v3734
        %v3962 = vsel %vm3961, %v3733, %v3734
        %v3963 = vand.u32 %v3962, 65535
        %v3964 = vshra.s32 %v3962, 16
        %v3965 = vcvt.s32.f32 %v3963
        %v3966 = vcvt.s32.f32 %v3964
        %3967 = vmin.xlane.f32.xlu0 %v3966
        %v3968 = vpop.xlane.xlu0 %3967
        %vm3969 = vcmp.eq.f32.partialorder %v3966, %v3968
        %v3970 = vsel %vm3969, %v3965, inf
        %3971 = vmin.xlane.f32.xlu0 %v3970
        %v3972 = vpop.xlane.xlu0 %3971
        %v3973 = vcvt.f32.s32 %v3972
        %v3974 = vcvt.f32.s32 %v3968
        %v3975 = vshll.u32 %v3974, 16
        %v3976 = vadd.s32 %v3975, %v3973
        %vm3977 = vcmp.lt.s32.totalorder %v3735, %v3736
        %v3978 = vsel %vm3977, %v3735, %v3736
        %v3979 = vand.u32 %v3978, 65535
        %v3980 = vshra.s32 %v3978, 16
        %v3981 = vcvt.s32.f32 %v3979
        %v3982 = vcvt.s32.f32 %v3980
        %3983 = vmin.xlane.f32.xlu0 %v3982
        %v3984 = vpop.xlane.xlu0 %3983
        %vm3985 = vcmp.eq.f32.partialorder %v3982, %v3984
        %v3986 = vsel %vm3985, %v3981, inf
        %3987 = vmin.xlane.f32.xlu0 %v3986
        %v3988 = vpop.xlane.xlu0 %3987
        %v3989 = vcvt.f32.s32 %v3988
        %v3990 = vcvt.f32.s32 %v3984
        %v3991 = vshll.u32 %v3990, 16
        %v3992 = vadd.s32 %v3991, %v3989
        %v3993 = vsub.f32 %v3627, %v2249
        %v3994 = vsub.f32 %v3630, %v2252
        %v3995 = vsub.f32 %v3633, %v2255
        %v3996 = vsub.f32 %v3636, %v2258
        %v3997 = vsub.f32 %v3639, %v2261
        %v3998 = vsub.f32 %v3642, %v2264
        %v3999 = vsub.f32 %v3645, %v2267
        %v4000 = vsub.f32 %v3648, %v2270
        %v4001 = vsub.f32 %v3651, %v2273
        %v4002 = vsub.f32 %v3654, %v2276
        %v4003 = vsub.f32 %v3657, %v2279
        %v4004 = vsub.f32 %v3660, %v2282
        %v4005 = vsub.f32 %v3663, %v2285
        %v4006 = vsub.f32 %v3666, %v2288
        %v4007 = vsub.f32 %v3669, %v2291
        %v4008 = vsub.f32 %v3672, %v2294
        %v4009 = vmul.f32 %v3993, 1.442695
        %v4010 = vpow.pop %v4009
        %v4011 = vmul.f32 %v3994, 1.442695
        %v4012 = vpow.pop %v4011
        %v4013 = vmul.f32 %v3995, 1.442695
        %v4014 = vpow.pop %v4013
        %v4015 = vmul.f32 %v3996, 1.442695
        %v4016 = vpow.pop %v4015
        %v4017 = vmul.f32 %v3997, 1.442695
        %v4018 = vpow.pop %v4017
        %v4019 = vmul.f32 %v3998, 1.442695
        %v4020 = vpow.pop %v4019
        %v4021 = vmul.f32 %v3999, 1.442695
        %v4022 = vpow.pop %v4021
        %v4023 = vmul.f32 %v4000, 1.442695
        %v4024 = vpow.pop %v4023
        %v4025 = vmul.f32 %v4001, 1.442695
        %v4026 = vpow.pop %v4025
        %v4027 = vmul.f32 %v4002, 1.442695
        %v4028 = vpow.pop %v4027
        %v4029 = vmul.f32 %v4003, 1.442695
        %v4030 = vpow.pop %v4029
        %v4031 = vmul.f32 %v4004, 1.442695
        %v4032 = vpow.pop %v4031
        %v4033 = vmul.f32 %v4005, 1.442695
        %v4034 = vpow.pop %v4033
        %v4035 = vmul.f32 %v4006, 1.442695
        %v4036 = vpow.pop %v4035
        %v4037 = vmul.f32 %v4007, 1.442695
        %v4038 = vpow.pop %v4037
        %v4039 = vmul.f32 %v4008, 1.442695
        %v4040 = vpow.pop %v4039
        %v4041 = vmul.f32 %v4010, %v2453
        %v4042 = vmul.f32 %v4012, %v2468
        %v4043 = vmul.f32 %v4014, %v2483
        %v4044 = vmul.f32 %v4016, %v2498
        %v4045 = vmul.f32 %v4018, %v2513
        %v4046 = vmul.f32 %v4020, %v2528
        %v4047 = vmul.f32 %v4022, %v2543
        %v4048 = vmul.f32 %v4024, %v2558
        %v4049 = vmul.f32 %v4026, %v2573
        %v4050 = vmul.f32 %v4028, %v2588
        %v4051 = vmul.f32 %v4030, %v2603
        %v4052 = vmul.f32 %v4032, %v2618
        %v4053 = vmul.f32 %v4034, %v2633
        %v4054 = vmul.f32 %v4036, %v2648
        %v4055 = vmul.f32 %v4038, %v2663
        %v4056 = vmul.f32 %v4040, %v2678
        %vm4057 = vcmp.eq.s32.totalorder %v1469, 2
        %v4058 = vsel %vm4057, %v4041, %v3561
        %v4059 = vsel %vm4057, %v4042, %v3562
        %v4060 = vsel %vm4057, %v4043, %v3563
        %v4061 = vsel %vm4057, %v4044, %v3564
        %v4062 = vsel %vm4057, %v4045, %v3565
        %v4063 = vsel %vm4057, %v4046, %v3566
        %v4064 = vsel %vm4057, %v4047, %v3567
        %v4065 = vsel %vm4057, %v4048, %v3568
        %v4066 = vsel %vm4057, %v4049, %v3569
        %v4067 = vsel %vm4057, %v4050, %v3570
        %v4068 = vsel %vm4057, %v4051, %v3571
        %v4069 = vsel %vm4057, %v4052, %v3572
        %v4070 = vsel %vm4057, %v4053, %v3573
        %v4071 = vsel %vm4057, %v4054, %v3574
        %v4072 = vsel %vm4057, %v4055, %v3575
        %v4073 = vsel %vm4057, %v4056, %v3576
        %v4074 = vsel %vm4057, %v3752, %v3577
        %v4075 = vsel %vm4057, %v3768, %v3578
        %v4076 = vsel %vm4057, %v3784, %v3579
        %v4077 = vsel %vm4057, %v3800, %v3580
        %v4078 = vsel %vm4057, %v3816, %v3581
        %v4079 = vsel %vm4057, %v3832, %v3582
        %v4080 = vsel %vm4057, %v3848, %v3583
        %v4081 = vsel %vm4057, %v3864, %v3584
        %v4082 = vsel %vm4057, %v3880, %v3585
        %v4083 = vsel %vm4057, %v3896, %v3586
        %v4084 = vsel %vm4057, %v3912, %v3587
        %v4085 = vsel %vm4057, %v3928, %v3588
        %v4086 = vsel %vm4057, %v3944, %v3589
        %v4087 = vsel %vm4057, %v3960, %v3590
        %v4088 = vsel %vm4057, %v3976, %v3591
        %v4089 = vsel %vm4057, %v3992, %v3592
        %v4090 = vsel %vm3673, -inf, %v3593
        %v4091 = vsel %vm3674, -inf, %v3594
        %v4092 = vsel %vm3675, -inf, %v3595
        %v4093 = vsel %vm3676, -inf, %v3596
        %v4094 = vsel %vm3677, -inf, %v3597
        %v4095 = vsel %vm3678, -inf, %v3598
        %v4096 = vsel %vm3679, -inf, %v3599
        %v4097 = vsel %vm3680, -inf, %v3600
        %v4098 = vsel %vm3681, -inf, %v3601
        %v4099 = vsel %vm3682, -inf, %v3602
        %v4100 = vsel %vm3683, -inf, %v3603
        %v4101 = vsel %vm3684, -inf, %v3604
        %v4102 = vsel %vm3685, -inf, %v3605
        %v4103 = vsel %vm3686, -inf, %v3606
        %v4104 = vsel %vm3687, -inf, %v3607
        %v4105 = vsel %vm3688, -inf, %v3608
        %v4106 = vsel %vm3689, -inf, %v3609
        %v4107 = vsel %vm3690, -inf, %v3610
        %v4108 = vsel %vm3691, -inf, %v3611
        %v4109 = vsel %vm3692, -inf, %v3612
        %v4110 = vsel %vm3693, -inf, %v3613
        %v4111 = vsel %vm3694, -inf, %v3614
        %v4112 = vsel %vm3695, -inf, %v3615
        %v4113 = vsel %vm3696, -inf, %v3616
        %v4114 = vsel %vm3697, -inf, %v3617
        %v4115 = vsel %vm3698, -inf, %v3618
        %v4116 = vsel %vm3699, -inf, %v3619
        %v4117 = vsel %vm3700, -inf, %v3620
        %v4118 = vsel %vm3701, -inf, %v3621
        %v4119 = vsel %vm3702, -inf, %v3622
        %v4120 = vsel %vm3703, -inf, %v3623
        %v4121 = vsel %vm3704, -inf, %v3624
        %v4122 = vmax.f32 %v4090, %v4091
        %4123 = vmax.xlane.f32.xlu0 %v4122
        %v4124 = vpop.xlane.xlu0 %4123
        %v4125 = vmax.f32 %v4092, %v4093
        %4126 = vmax.xlane.f32.xlu0 %v4125
        %v4127 = vpop.xlane.xlu0 %4126
        %v4128 = vmax.f32 %v4094, %v4095
        %4129 = vmax.xlane.f32.xlu0 %v4128
        %v4130 = vpop.xlane.xlu0 %4129
        %v4131 = vmax.f32 %v4096, %v4097
        %4132 = vmax.xlane.f32.xlu0 %v4131
        %v4133 = vpop.xlane.xlu0 %4132
        %v4134 = vmax.f32 %v4098, %v4099
        %4135 = vmax.xlane.f32.xlu0 %v4134
        %v4136 = vpop.xlane.xlu0 %4135
        %v4137 = vmax.f32 %v4100, %v4101
        %4138 = vmax.xlane.f32.xlu0 %v4137
        %v4139 = vpop.xlane.xlu0 %4138
        %v4140 = vmax.f32 %v4102, %v4103
        %4141 = vmax.xlane.f32.xlu0 %v4140
        %v4142 = vpop.xlane.xlu0 %4141
        %v4143 = vmax.f32 %v4104, %v4105
        %4144 = vmax.xlane.f32.xlu0 %v4143
        %v4145 = vpop.xlane.xlu0 %4144
        %v4146 = vmax.f32 %v4106, %v4107
        %4147 = vmax.xlane.f32.xlu0 %v4146
        %v4148 = vpop.xlane.xlu0 %4147
        %v4149 = vmax.f32 %v4108, %v4109
        %4150 = vmax.xlane.f32.xlu0 %v4149
        %v4151 = vpop.xlane.xlu0 %4150
        %v4152 = vmax.f32 %v4110, %v4111
        %4153 = vmax.xlane.f32.xlu0 %v4152
        %v4154 = vpop.xlane.xlu0 %4153
        %v4155 = vmax.f32 %v4112, %v4113
        %4156 = vmax.xlane.f32.xlu0 %v4155
        %v4157 = vpop.xlane.xlu0 %4156
        %v4158 = vmax.f32 %v4114, %v4115
        %4159 = vmax.xlane.f32.xlu0 %v4158
        %v4160 = vpop.xlane.xlu0 %4159
        %v4161 = vmax.f32 %v4116, %v4117
        %4162 = vmax.xlane.f32.xlu0 %v4161
        %v4163 = vpop.xlane.xlu0 %4162
        %v4164 = vmax.f32 %v4118, %v4119
        %4165 = vmax.xlane.f32.xlu0 %v4164
        %v4166 = vpop.xlane.xlu0 %4165
        %v4167 = vmax.f32 %v4120, %v4121
        %4168 = vmax.xlane.f32.xlu0 %v4167
        %v4169 = vpop.xlane.xlu0 %4168
        %vm4170 = vcmp.eq.f32.partialorder %v4090, %v4124
        %vm4171 = vcmp.eq.f32.partialorder %v4091, %v4124
        %vm4172 = vcmp.eq.f32.partialorder %v4092, %v4127
        %vm4173 = vcmp.eq.f32.partialorder %v4093, %v4127
        %vm4174 = vcmp.eq.f32.partialorder %v4094, %v4130
        %vm4175 = vcmp.eq.f32.partialorder %v4095, %v4130
        %vm4176 = vcmp.eq.f32.partialorder %v4096, %v4133
        %vm4177 = vcmp.eq.f32.partialorder %v4097, %v4133
        %vm4178 = vcmp.eq.f32.partialorder %v4098, %v4136
        %vm4179 = vcmp.eq.f32.partialorder %v4099, %v4136
        %vm4180 = vcmp.eq.f32.partialorder %v4100, %v4139
        %vm4181 = vcmp.eq.f32.partialorder %v4101, %v4139
        %vm4182 = vcmp.eq.f32.partialorder %v4102, %v4142
        %vm4183 = vcmp.eq.f32.partialorder %v4103, %v4142
        %vm4184 = vcmp.eq.f32.partialorder %v4104, %v4145
        %vm4185 = vcmp.eq.f32.partialorder %v4105, %v4145
        %vm4186 = vcmp.eq.f32.partialorder %v4106, %v4148
        %vm4187 = vcmp.eq.f32.partialorder %v4107, %v4148
        %vm4188 = vcmp.eq.f32.partialorder %v4108, %v4151
        %vm4189 = vcmp.eq.f32.partialorder %v4109, %v4151
        %vm4190 = vcmp.eq.f32.partialorder %v4110, %v4154
        %vm4191 = vcmp.eq.f32.partialorder %v4111, %v4154
        %vm4192 = vcmp.eq.f32.partialorder %v4112, %v4157
        %vm4193 = vcmp.eq.f32.partialorder %v4113, %v4157
        %vm4194 = vcmp.eq.f32.partialorder %v4114, %v4160
        %vm4195 = vcmp.eq.f32.partialorder %v4115, %v4160
        %vm4196 = vcmp.eq.f32.partialorder %v4116, %v4163
        %vm4197 = vcmp.eq.f32.partialorder %v4117, %v4163
        %vm4198 = vcmp.eq.f32.partialorder %v4118, %v4166
        %vm4199 = vcmp.eq.f32.partialorder %v4119, %v4166
        %vm4200 = vcmp.eq.f32.partialorder %v4120, %v4169
        %vm4201 = vcmp.eq.f32.partialorder %v4121, %v4169
        %v4202 = vsel %vm4170, %v1469, 256
        %v4203 = vsel %vm4171, %v1470, 256
        %v4204 = vsel %vm4172, %v1469, 256
        %v4205 = vsel %vm4173, %v1470, 256
        %v4206 = vsel %vm4174, %v1469, 256
        %v4207 = vsel %vm4175, %v1470, 256
        %v4208 = vsel %vm4176, %v1469, 256
        %v4209 = vsel %vm4177, %v1470, 256
        %v4210 = vsel %vm4178, %v1469, 256
        %v4211 = vsel %vm4179, %v1470, 256
        %v4212 = vsel %vm4180, %v1469, 256
        %v4213 = vsel %vm4181, %v1470, 256
        %v4214 = vsel %vm4182, %v1469, 256
        %v4215 = vsel %vm4183, %v1470, 256
        %v4216 = vsel %vm4184, %v1469, 256
        %v4217 = vsel %vm4185, %v1470, 256
        %v4218 = vsel %vm4186, %v1469, 256
        %v4219 = vsel %vm4187, %v1470, 256
        %v4220 = vsel %vm4188, %v1469, 256
        %v4221 = vsel %vm4189, %v1470, 256
        %v4222 = vsel %vm4190, %v1469, 256
        %v4223 = vsel %vm4191, %v1470, 256
        %v4224 = vsel %vm4192, %v1469, 256
        %v4225 = vsel %vm4193, %v1470, 256
        %v4226 = vsel %vm4194, %v1469, 256
        %v4227 = vsel %vm4195, %v1470, 256
        %v4228 = vsel %vm4196, %v1469, 256
        %v4229 = vsel %vm4197, %v1470, 256
        %v4230 = vsel %vm4198, %v1469, 256
        %v4231 = vsel %vm4199, %v1470, 256
        %v4232 = vsel %vm4200, %v1469, 256
        %v4233 = vsel %vm4201, %v1470, 256
        %vm4234 = vcmp.lt.s32.totalorder %v4202, %v4203
        %v4235 = vsel %vm4234, %v4202, %v4203
        %v4236 = vand.u32 %v4235, 65535
        %v4237 = vshra.s32 %v4235, 16
        %v4238 = vcvt.s32.f32 %v4236
        %v4239 = vcvt.s32.f32 %v4237
        %4240 = vmin.xlane.f32.xlu0 %v4239
        %v4241 = vpop.xlane.xlu0 %4240
        %vm4242 = vcmp.eq.f32.partialorder %v4239, %v4241
        %v4243 = vsel %vm4242, %v4238, inf
        %4244 = vmin.xlane.f32.xlu0 %v4243
        %v4245 = vpop.xlane.xlu0 %4244
        %v4246 = vcvt.f32.s32 %v4245
        %v4247 = vcvt.f32.s32 %v4241
        %v4248 = vshll.u32 %v4247, 16
        %v4249 = vadd.s32 %v4248, %v4246
        %vm4250 = vcmp.lt.s32.totalorder %v4204, %v4205
        %v4251 = vsel %vm4250, %v4204, %v4205
        %v4252 = vand.u32 %v4251, 65535
        %v4253 = vshra.s32 %v4251, 16
        %v4254 = vcvt.s32.f32 %v4252
        %v4255 = vcvt.s32.f32 %v4253
        %4256 = vmin.xlane.f32.xlu0 %v4255
        %v4257 = vpop.xlane.xlu0 %4256
        %vm4258 = vcmp.eq.f32.partialorder %v4255, %v4257
        %v4259 = vsel %vm4258, %v4254, inf
        %4260 = vmin.xlane.f32.xlu0 %v4259
        %v4261 = vpop.xlane.xlu0 %4260
        %v4262 = vcvt.f32.s32 %v4261
        %v4263 = vcvt.f32.s32 %v4257
        %v4264 = vshll.u32 %v4263, 16
        %v4265 = vadd.s32 %v4264, %v4262
        %vm4266 = vcmp.lt.s32.totalorder %v4206, %v4207
        %v4267 = vsel %vm4266, %v4206, %v4207
        %v4268 = vand.u32 %v4267, 65535
        %v4269 = vshra.s32 %v4267, 16
        %v4270 = vcvt.s32.f32 %v4268
        %v4271 = vcvt.s32.f32 %v4269
        %4272 = vmin.xlane.f32.xlu0 %v4271
        %v4273 = vpop.xlane.xlu0 %4272
        %vm4274 = vcmp.eq.f32.partialorder %v4271, %v4273
        %v4275 = vsel %vm4274, %v4270, inf
        %4276 = vmin.xlane.f32.xlu0 %v4275
        %v4277 = vpop.xlane.xlu0 %4276
        %v4278 = vcvt.f32.s32 %v4277
        %v4279 = vcvt.f32.s32 %v4273
        %v4280 = vshll.u32 %v4279, 16
        %v4281 = vadd.s32 %v4280, %v4278
        %vm4282 = vcmp.lt.s32.totalorder %v4208, %v4209
        %v4283 = vsel %vm4282, %v4208, %v4209
        %v4284 = vand.u32 %v4283, 65535
        %v4285 = vshra.s32 %v4283, 16
        %v4286 = vcvt.s32.f32 %v4284
        %v4287 = vcvt.s32.f32 %v4285
        %4288 = vmin.xlane.f32.xlu0 %v4287
        %v4289 = vpop.xlane.xlu0 %4288
        %vm4290 = vcmp.eq.f32.partialorder %v4287, %v4289
        %v4291 = vsel %vm4290, %v4286, inf
        %4292 = vmin.xlane.f32.xlu0 %v4291
        %v4293 = vpop.xlane.xlu0 %4292
        %v4294 = vcvt.f32.s32 %v4293
        %v4295 = vcvt.f32.s32 %v4289
        %v4296 = vshll.u32 %v4295, 16
        %v4297 = vadd.s32 %v4296, %v4294
        %vm4298 = vcmp.lt.s32.totalorder %v4210, %v4211
        %v4299 = vsel %vm4298, %v4210, %v4211
        %v4300 = vand.u32 %v4299, 65535
        %v4301 = vshra.s32 %v4299, 16
        %v4302 = vcvt.s32.f32 %v4300
        %v4303 = vcvt.s32.f32 %v4301
        %4304 = vmin.xlane.f32.xlu0 %v4303
        %v4305 = vpop.xlane.xlu0 %4304
        %vm4306 = vcmp.eq.f32.partialorder %v4303, %v4305
        %v4307 = vsel %vm4306, %v4302, inf
        %4308 = vmin.xlane.f32.xlu0 %v4307
        %v4309 = vpop.xlane.xlu0 %4308
        %v4310 = vcvt.f32.s32 %v4309
        %v4311 = vcvt.f32.s32 %v4305
        %v4312 = vshll.u32 %v4311, 16
        %v4313 = vadd.s32 %v4312, %v4310
        %vm4314 = vcmp.lt.s32.totalorder %v4212, %v4213
        %v4315 = vsel %vm4314, %v4212, %v4213
        %v4316 = vand.u32 %v4315, 65535
        %v4317 = vshra.s32 %v4315, 16
        %v4318 = vcvt.s32.f32 %v4316
        %v4319 = vcvt.s32.f32 %v4317
        %4320 = vmin.xlane.f32.xlu0 %v4319
        %v4321 = vpop.xlane.xlu0 %4320
        %vm4322 = vcmp.eq.f32.partialorder %v4319, %v4321
        %v4323 = vsel %vm4322, %v4318, inf
        %4324 = vmin.xlane.f32.xlu0 %v4323
        %v4325 = vpop.xlane.xlu0 %4324
        %v4326 = vcvt.f32.s32 %v4325
        %v4327 = vcvt.f32.s32 %v4321
        %v4328 = vshll.u32 %v4327, 16
        %v4329 = vadd.s32 %v4328, %v4326
        %vm4330 = vcmp.lt.s32.totalorder %v4214, %v4215
        %v4331 = vsel %vm4330, %v4214, %v4215
        %v4332 = vand.u32 %v4331, 65535
        %v4333 = vshra.s32 %v4331, 16
        %v4334 = vcvt.s32.f32 %v4332
        %v4335 = vcvt.s32.f32 %v4333
        %4336 = vmin.xlane.f32.xlu0 %v4335
        %v4337 = vpop.xlane.xlu0 %4336
        %vm4338 = vcmp.eq.f32.partialorder %v4335, %v4337
        %v4339 = vsel %vm4338, %v4334, inf
        %4340 = vmin.xlane.f32.xlu0 %v4339
        %v4341 = vpop.xlane.xlu0 %4340
        %v4342 = vcvt.f32.s32 %v4341
        %v4343 = vcvt.f32.s32 %v4337
        %v4344 = vshll.u32 %v4343, 16
        %v4345 = vadd.s32 %v4344, %v4342
        %vm4346 = vcmp.lt.s32.totalorder %v4216, %v4217
        %v4347 = vsel %vm4346, %v4216, %v4217
        %v4348 = vand.u32 %v4347, 65535
        %v4349 = vshra.s32 %v4347, 16
        %v4350 = vcvt.s32.f32 %v4348
        %v4351 = vcvt.s32.f32 %v4349
        %4352 = vmin.xlane.f32.xlu0 %v4351
        %v4353 = vpop.xlane.xlu0 %4352
        %vm4354 = vcmp.eq.f32.partialorder %v4351, %v4353
        %v4355 = vsel %vm4354, %v4350, inf
        %4356 = vmin.xlane.f32.xlu0 %v4355
        %v4357 = vpop.xlane.xlu0 %4356
        %v4358 = vcvt.f32.s32 %v4357
        %v4359 = vcvt.f32.s32 %v4353
        %v4360 = vshll.u32 %v4359, 16
        %v4361 = vadd.s32 %v4360, %v4358
        %vm4362 = vcmp.lt.s32.totalorder %v4218, %v4219
        %v4363 = vsel %vm4362, %v4218, %v4219
        %v4364 = vand.u32 %v4363, 65535
        %v4365 = vshra.s32 %v4363, 16
        %v4366 = vcvt.s32.f32 %v4364
        %v4367 = vcvt.s32.f32 %v4365
        %4368 = vmin.xlane.f32.xlu0 %v4367
        %v4369 = vpop.xlane.xlu0 %4368
        %vm4370 = vcmp.eq.f32.partialorder %v4367, %v4369
        %v4371 = vsel %vm4370, %v4366, inf
        %4372 = vmin.xlane.f32.xlu0 %v4371
        %v4373 = vpop.xlane.xlu0 %4372
        %v4374 = vcvt.f32.s32 %v4373
        %v4375 = vcvt.f32.s32 %v4369
        %v4376 = vshll.u32 %v4375, 16
        %v4377 = vadd.s32 %v4376, %v4374
        %vm4378 = vcmp.lt.s32.totalorder %v4220, %v4221
        %v4379 = vsel %vm4378, %v4220, %v4221
        %v4380 = vand.u32 %v4379, 65535
        %v4381 = vshra.s32 %v4379, 16
        %v4382 = vcvt.s32.f32 %v4380
        %v4383 = vcvt.s32.f32 %v4381
        %4384 = vmin.xlane.f32.xlu0 %v4383
        %v4385 = vpop.xlane.xlu0 %4384
        %vm4386 = vcmp.eq.f32.partialorder %v4383, %v4385
        %v4387 = vsel %vm4386, %v4382, inf
        %4388 = vmin.xlane.f32.xlu0 %v4387
        %v4389 = vpop.xlane.xlu0 %4388
        %v4390 = vcvt.f32.s32 %v4389
        %v4391 = vcvt.f32.s32 %v4385
        %v4392 = vshll.u32 %v4391, 16
        %v4393 = vadd.s32 %v4392, %v4390
        %vm4394 = vcmp.lt.s32.totalorder %v4222, %v4223
        %v4395 = vsel %vm4394, %v4222, %v4223
        %v4396 = vand.u32 %v4395, 65535
        %v4397 = vshra.s32 %v4395, 16
        %v4398 = vcvt.s32.f32 %v4396
        %v4399 = vcvt.s32.f32 %v4397
        %4400 = vmin.xlane.f32.xlu0 %v4399
        %v4401 = vpop.xlane.xlu0 %4400
        %vm4402 = vcmp.eq.f32.partialorder %v4399, %v4401
        %v4403 = vsel %vm4402, %v4398, inf
        %4404 = vmin.xlane.f32.xlu0 %v4403
        %v4405 = vpop.xlane.xlu0 %4404
        %v4406 = vcvt.f32.s32 %v4405
        %v4407 = vcvt.f32.s32 %v4401
        %v4408 = vshll.u32 %v4407, 16
        %v4409 = vadd.s32 %v4408, %v4406
        %vm4410 = vcmp.lt.s32.totalorder %v4224, %v4225
        %v4411 = vsel %vm4410, %v4224, %v4225
        %v4412 = vand.u32 %v4411, 65535
        %v4413 = vshra.s32 %v4411, 16
        %v4414 = vcvt.s32.f32 %v4412
        %v4415 = vcvt.s32.f32 %v4413
        %4416 = vmin.xlane.f32.xlu0 %v4415
        %v4417 = vpop.xlane.xlu0 %4416
        %vm4418 = vcmp.eq.f32.partialorder %v4415, %v4417
        %v4419 = vsel %vm4418, %v4414, inf
        %4420 = vmin.xlane.f32.xlu0 %v4419
        %v4421 = vpop.xlane.xlu0 %4420
        %v4422 = vcvt.f32.s32 %v4421
        %v4423 = vcvt.f32.s32 %v4417
        %v4424 = vshll.u32 %v4423, 16
        %v4425 = vadd.s32 %v4424, %v4422
        %vm4426 = vcmp.lt.s32.totalorder %v4226, %v4227
        %v4427 = vsel %vm4426, %v4226, %v4227
        %v4428 = vand.u32 %v4427, 65535
        %v4429 = vshra.s32 %v4427, 16
        %v4430 = vcvt.s32.f32 %v4428
        %v4431 = vcvt.s32.f32 %v4429
        %4432 = vmin.xlane.f32.xlu0 %v4431
        %v4433 = vpop.xlane.xlu0 %4432
        %vm4434 = vcmp.eq.f32.partialorder %v4431, %v4433
        %v4435 = vsel %vm4434, %v4430, inf
        %4436 = vmin.xlane.f32.xlu0 %v4435
        %v4437 = vpop.xlane.xlu0 %4436
        %v4438 = vcvt.f32.s32 %v4437
        %v4439 = vcvt.f32.s32 %v4433
        %v4440 = vshll.u32 %v4439, 16
        %v4441 = vadd.s32 %v4440, %v4438
        %vm4442 = vcmp.lt.s32.totalorder %v4228, %v4229
        %v4443 = vsel %vm4442, %v4228, %v4229
        %v4444 = vand.u32 %v4443, 65535
        %v4445 = vshra.s32 %v4443, 16
        %v4446 = vcvt.s32.f32 %v4444
        %v4447 = vcvt.s32.f32 %v4445
        %4448 = vmin.xlane.f32.xlu0 %v4447
        %v4449 = vpop.xlane.xlu0 %4448
        %vm4450 = vcmp.eq.f32.partialorder %v4447, %v4449
        %v4451 = vsel %vm4450, %v4446, inf
        %4452 = vmin.xlane.f32.xlu0 %v4451
        %v4453 = vpop.xlane.xlu0 %4452
        %v4454 = vcvt.f32.s32 %v4453
        %v4455 = vcvt.f32.s32 %v4449
        %v4456 = vshll.u32 %v4455, 16
        %v4457 = vadd.s32 %v4456, %v4454
        %vm4458 = vcmp.lt.s32.totalorder %v4230, %v4231
        %v4459 = vsel %vm4458, %v4230, %v4231
        %v4460 = vand.u32 %v4459, 65535
        %v4461 = vshra.s32 %v4459, 16
        %v4462 = vcvt.s32.f32 %v4460
        %v4463 = vcvt.s32.f32 %v4461
        %4464 = vmin.xlane.f32.xlu0 %v4463
        %v4465 = vpop.xlane.xlu0 %4464
        %vm4466 = vcmp.eq.f32.partialorder %v4463, %v4465
        %v4467 = vsel %vm4466, %v4462, inf
        %4468 = vmin.xlane.f32.xlu0 %v4467
        %v4469 = vpop.xlane.xlu0 %4468
        %v4470 = vcvt.f32.s32 %v4469
        %v4471 = vcvt.f32.s32 %v4465
        %v4472 = vshll.u32 %v4471, 16
        %v4473 = vadd.s32 %v4472, %v4470
        %vm4474 = vcmp.lt.s32.totalorder %v4232, %v4233
        %v4475 = vsel %vm4474, %v4232, %v4233
        %v4476 = vand.u32 %v4475, 65535
        %v4477 = vshra.s32 %v4475, 16
        %v4478 = vcvt.s32.f32 %v4476
        %v4479 = vcvt.s32.f32 %v4477
        %4480 = vmin.xlane.f32.xlu0 %v4479
        %v4481 = vpop.xlane.xlu0 %4480
        %vm4482 = vcmp.eq.f32.partialorder %v4479, %v4481
        %v4483 = vsel %vm4482, %v4478, inf
        %4484 = vmin.xlane.f32.xlu0 %v4483
        %v4485 = vpop.xlane.xlu0 %4484
        %v4486 = vcvt.f32.s32 %v4485
        %v4487 = vcvt.f32.s32 %v4481
        %v4488 = vshll.u32 %v4487, 16
        %v4489 = vadd.s32 %v4488, %v4486
        %v4490 = vsub.f32 %v4124, %v2249
        %v4491 = vsub.f32 %v4127, %v2252
        %v4492 = vsub.f32 %v4130, %v2255
        %v4493 = vsub.f32 %v4133, %v2258
        %v4494 = vsub.f32 %v4136, %v2261
        %v4495 = vsub.f32 %v4139, %v2264
        %v4496 = vsub.f32 %v4142, %v2267
        %v4497 = vsub.f32 %v4145, %v2270
        %v4498 = vsub.f32 %v4148, %v2273
        %v4499 = vsub.f32 %v4151, %v2276
        %v4500 = vsub.f32 %v4154, %v2279
        %v4501 = vsub.f32 %v4157, %v2282
        %v4502 = vsub.f32 %v4160, %v2285
        %v4503 = vsub.f32 %v4163, %v2288
        %v4504 = vsub.f32 %v4166, %v2291
        %v4505 = vsub.f32 %v4169, %v2294
        %v4506 = vmul.f32 %v4490, 1.442695
        %v4507 = vpow.pop %v4506
        %v4508 = vmul.f32 %v4491, 1.442695
        %v4509 = vpow.pop %v4508
        %v4510 = vmul.f32 %v4492, 1.442695
        %v4511 = vpow.pop %v4510
        %v4512 = vmul.f32 %v4493, 1.442695
        %v4513 = vpow.pop %v4512
        %v4514 = vmul.f32 %v4494, 1.442695
        %v4515 = vpow.pop %v4514
        %v4516 = vmul.f32 %v4495, 1.442695
        %v4517 = vpow.pop %v4516
        %v4518 = vmul.f32 %v4496, 1.442695
        %v4519 = vpow.pop %v4518
        %v4520 = vmul.f32 %v4497, 1.442695
        %v4521 = vpow.pop %v4520
        %v4522 = vmul.f32 %v4498, 1.442695
        %v4523 = vpow.pop %v4522
        %v4524 = vmul.f32 %v4499, 1.442695
        %v4525 = vpow.pop %v4524
        %v4526 = vmul.f32 %v4500, 1.442695
        %v4527 = vpow.pop %v4526
        %v4528 = vmul.f32 %v4501, 1.442695
        %v4529 = vpow.pop %v4528
        %v4530 = vmul.f32 %v4502, 1.442695
        %v4531 = vpow.pop %v4530
        %v4532 = vmul.f32 %v4503, 1.442695
        %v4533 = vpow.pop %v4532
        %v4534 = vmul.f32 %v4504, 1.442695
        %v4535 = vpow.pop %v4534
        %v4536 = vmul.f32 %v4505, 1.442695
        %v4537 = vpow.pop %v4536
        %v4538 = vmul.f32 %v4507, %v2453
        %v4539 = vmul.f32 %v4509, %v2468
        %v4540 = vmul.f32 %v4511, %v2483
        %v4541 = vmul.f32 %v4513, %v2498
        %v4542 = vmul.f32 %v4515, %v2513
        %v4543 = vmul.f32 %v4517, %v2528
        %v4544 = vmul.f32 %v4519, %v2543
        %v4545 = vmul.f32 %v4521, %v2558
        %v4546 = vmul.f32 %v4523, %v2573
        %v4547 = vmul.f32 %v4525, %v2588
        %v4548 = vmul.f32 %v4527, %v2603
        %v4549 = vmul.f32 %v4529, %v2618
        %v4550 = vmul.f32 %v4531, %v2633
        %v4551 = vmul.f32 %v4533, %v2648
        %v4552 = vmul.f32 %v4535, %v2663
        %v4553 = vmul.f32 %v4537, %v2678
        %vm4554 = vcmp.eq.s32.totalorder %v1469, 3
        %v4555 = vsel %vm4554, %v4538, %v4058
        %v4556 = vsel %vm4554, %v4539, %v4059
        %v4557 = vsel %vm4554, %v4540, %v4060
        %v4558 = vsel %vm4554, %v4541, %v4061
        %v4559 = vsel %vm4554, %v4542, %v4062
        %v4560 = vsel %vm4554, %v4543, %v4063
        %v4561 = vsel %vm4554, %v4544, %v4064
        %v4562 = vsel %vm4554, %v4545, %v4065
        %v4563 = vsel %vm4554, %v4546, %v4066
        %v4564 = vsel %vm4554, %v4547, %v4067
        %v4565 = vsel %vm4554, %v4548, %v4068
        %v4566 = vsel %vm4554, %v4549, %v4069
        %v4567 = vsel %vm4554, %v4550, %v4070
        %v4568 = vsel %vm4554, %v4551, %v4071
        %v4569 = vsel %vm4554, %v4552, %v4072
        %v4570 = vsel %vm4554, %v4553, %v4073
        %v4571 = vsel %vm4554, %v4249, %v4074
        %v4572 = vsel %vm4554, %v4265, %v4075
        %v4573 = vsel %vm4554, %v4281, %v4076
        %v4574 = vsel %vm4554, %v4297, %v4077
        %v4575 = vsel %vm4554, %v4313, %v4078
        %v4576 = vsel %vm4554, %v4329, %v4079
        %v4577 = vsel %vm4554, %v4345, %v4080
        %v4578 = vsel %vm4554, %v4361, %v4081
        %v4579 = vsel %vm4554, %v4377, %v4082
        %v4580 = vsel %vm4554, %v4393, %v4083
        %v4581 = vsel %vm4554, %v4409, %v4084
        %v4582 = vsel %vm4554, %v4425, %v4085
        %v4583 = vsel %vm4554, %v4441, %v4086
        %v4584 = vsel %vm4554, %v4457, %v4087
        %v4585 = vsel %vm4554, %v4473, %v4088
        %v4586 = vsel %vm4554, %v4489, %v4089
        %v4587 = vsel %vm4170, -inf, %v4090
        %v4588 = vsel %vm4171, -inf, %v4091
        %v4589 = vsel %vm4172, -inf, %v4092
        %v4590 = vsel %vm4173, -inf, %v4093
        %v4591 = vsel %vm4174, -inf, %v4094
        %v4592 = vsel %vm4175, -inf, %v4095
        %v4593 = vsel %vm4176, -inf, %v4096
        %v4594 = vsel %vm4177, -inf, %v4097
        %v4595 = vsel %vm4178, -inf, %v4098
        %v4596 = vsel %vm4179, -inf, %v4099
        %v4597 = vsel %vm4180, -inf, %v4100
        %v4598 = vsel %vm4181, -inf, %v4101
        %v4599 = vsel %vm4182, -inf, %v4102
        %v4600 = vsel %vm4183, -inf, %v4103
        %v4601 = vsel %vm4184, -inf, %v4104
        %v4602 = vsel %vm4185, -inf, %v4105
        %v4603 = vsel %vm4186, -inf, %v4106
        %v4604 = vsel %vm4187, -inf, %v4107
        %v4605 = vsel %vm4188, -inf, %v4108
        %v4606 = vsel %vm4189, -inf, %v4109
        %v4607 = vsel %vm4190, -inf, %v4110
        %v4608 = vsel %vm4191, -inf, %v4111
        %v4609 = vsel %vm4192, -inf, %v4112
        %v4610 = vsel %vm4193, -inf, %v4113
        %v4611 = vsel %vm4194, -inf, %v4114
        %v4612 = vsel %vm4195, -inf, %v4115
        %v4613 = vsel %vm4196, -inf, %v4116
        %v4614 = vsel %vm4197, -inf, %v4117
        %v4615 = vsel %vm4198, -inf, %v4118
        %v4616 = vsel %vm4199, -inf, %v4119
        %v4617 = vsel %vm4200, -inf, %v4120
        %v4618 = vsel %vm4201, -inf, %v4121
        %v4619 = vmax.f32 %v4587, %v4588
        %4620 = vmax.xlane.f32.xlu0 %v4619
        %v4621 = vpop.xlane.xlu0 %4620
        %v4622 = vmax.f32 %v4589, %v4590
        %4623 = vmax.xlane.f32.xlu0 %v4622
        %v4624 = vpop.xlane.xlu0 %4623
        %v4625 = vmax.f32 %v4591, %v4592
        %4626 = vmax.xlane.f32.xlu0 %v4625
        %v4627 = vpop.xlane.xlu0 %4626
        %v4628 = vmax.f32 %v4593, %v4594
        %4629 = vmax.xlane.f32.xlu0 %v4628
        %v4630 = vpop.xlane.xlu0 %4629
        %v4631 = vmax.f32 %v4595, %v4596
        %4632 = vmax.xlane.f32.xlu0 %v4631
        %v4633 = vpop.xlane.xlu0 %4632
        %v4634 = vmax.f32 %v4597, %v4598
        %4635 = vmax.xlane.f32.xlu0 %v4634
        %v4636 = vpop.xlane.xlu0 %4635
        %v4637 = vmax.f32 %v4599, %v4600
        %4638 = vmax.xlane.f32.xlu0 %v4637
        %v4639 = vpop.xlane.xlu0 %4638
        %v4640 = vmax.f32 %v4601, %v4602
        %4641 = vmax.xlane.f32.xlu0 %v4640
        %v4642 = vpop.xlane.xlu0 %4641
        %v4643 = vmax.f32 %v4603, %v4604
        %4644 = vmax.xlane.f32.xlu0 %v4643
        %v4645 = vpop.xlane.xlu0 %4644
        %v4646 = vmax.f32 %v4605, %v4606
        %4647 = vmax.xlane.f32.xlu0 %v4646
        %v4648 = vpop.xlane.xlu0 %4647
        %v4649 = vmax.f32 %v4607, %v4608
        %4650 = vmax.xlane.f32.xlu0 %v4649
        %v4651 = vpop.xlane.xlu0 %4650
        %v4652 = vmax.f32 %v4609, %v4610
        %4653 = vmax.xlane.f32.xlu0 %v4652
        %v4654 = vpop.xlane.xlu0 %4653
        %v4655 = vmax.f32 %v4611, %v4612
        %4656 = vmax.xlane.f32.xlu0 %v4655
        %v4657 = vpop.xlane.xlu0 %4656
        %v4658 = vmax.f32 %v4613, %v4614
        %4659 = vmax.xlane.f32.xlu0 %v4658
        %v4660 = vpop.xlane.xlu0 %4659
        %v4661 = vmax.f32 %v4615, %v4616
        %4662 = vmax.xlane.f32.xlu0 %v4661
        %v4663 = vpop.xlane.xlu0 %4662
        %v4664 = vmax.f32 %v4617, %v4618
        %4665 = vmax.xlane.f32.xlu0 %v4664
        %v4666 = vpop.xlane.xlu0 %4665
        %vm4667 = vcmp.eq.f32.partialorder %v4587, %v4621
        %vm4668 = vcmp.eq.f32.partialorder %v4588, %v4621
        %vm4669 = vcmp.eq.f32.partialorder %v4589, %v4624
        %vm4670 = vcmp.eq.f32.partialorder %v4590, %v4624
        %vm4671 = vcmp.eq.f32.partialorder %v4591, %v4627
        %vm4672 = vcmp.eq.f32.partialorder %v4592, %v4627
        %vm4673 = vcmp.eq.f32.partialorder %v4593, %v4630
        %vm4674 = vcmp.eq.f32.partialorder %v4594, %v4630
        %vm4675 = vcmp.eq.f32.partialorder %v4595, %v4633
        %vm4676 = vcmp.eq.f32.partialorder %v4596, %v4633
        %vm4677 = vcmp.eq.f32.partialorder %v4597, %v4636
        %vm4678 = vcmp.eq.f32.partialorder %v4598, %v4636
        %vm4679 = vcmp.eq.f32.partialorder %v4599, %v4639
        %vm4680 = vcmp.eq.f32.partialorder %v4600, %v4639
        %vm4681 = vcmp.eq.f32.partialorder %v4601, %v4642
        %vm4682 = vcmp.eq.f32.partialorder %v4602, %v4642
        %vm4683 = vcmp.eq.f32.partialorder %v4603, %v4645
        %vm4684 = vcmp.eq.f32.partialorder %v4604, %v4645
        %vm4685 = vcmp.eq.f32.partialorder %v4605, %v4648
        %vm4686 = vcmp.eq.f32.partialorder %v4606, %v4648
        %vm4687 = vcmp.eq.f32.partialorder %v4607, %v4651
        %vm4688 = vcmp.eq.f32.partialorder %v4608, %v4651
        %vm4689 = vcmp.eq.f32.partialorder %v4609, %v4654
        %vm4690 = vcmp.eq.f32.partialorder %v4610, %v4654
        %vm4691 = vcmp.eq.f32.partialorder %v4611, %v4657
        %vm4692 = vcmp.eq.f32.partialorder %v4612, %v4657
        %vm4693 = vcmp.eq.f32.partialorder %v4613, %v4660
        %vm4694 = vcmp.eq.f32.partialorder %v4614, %v4660
        %vm4695 = vcmp.eq.f32.partialorder %v4615, %v4663
        %vm4696 = vcmp.eq.f32.partialorder %v4616, %v4663
        %vm4697 = vcmp.eq.f32.partialorder %v4617, %v4666
        %vm4698 = vcmp.eq.f32.partialorder %v4618, %v4666
        %v4699 = vsel %vm4667, %v1469, 256
        %v4700 = vsel %vm4668, %v1470, 256
        %v4701 = vsel %vm4669, %v1469, 256
        %v4702 = vsel %vm4670, %v1470, 256
        %v4703 = vsel %vm4671, %v1469, 256
        %v4704 = vsel %vm4672, %v1470, 256
        %v4705 = vsel %vm4673, %v1469, 256
        %v4706 = vsel %vm4674, %v1470, 256
        %v4707 = vsel %vm4675, %v1469, 256
        %v4708 = vsel %vm4676, %v1470, 256
        %v4709 = vsel %vm4677, %v1469, 256
        %v4710 = vsel %vm4678, %v1470, 256
        %v4711 = vsel %vm4679, %v1469, 256
        %v4712 = vsel %vm4680, %v1470, 256
        %v4713 = vsel %vm4681, %v1469, 256
        %v4714 = vsel %vm4682, %v1470, 256
        %v4715 = vsel %vm4683, %v1469, 256
        %v4716 = vsel %vm4684, %v1470, 256
        %v4717 = vsel %vm4685, %v1469, 256
        %v4718 = vsel %vm4686, %v1470, 256
        %v4719 = vsel %vm4687, %v1469, 256
        %v4720 = vsel %vm4688, %v1470, 256
        %v4721 = vsel %vm4689, %v1469, 256
        %v4722 = vsel %vm4690, %v1470, 256
        %v4723 = vsel %vm4691, %v1469, 256
        %v4724 = vsel %vm4692, %v1470, 256
        %v4725 = vsel %vm4693, %v1469, 256
        %v4726 = vsel %vm4694, %v1470, 256
        %v4727 = vsel %vm4695, %v1469, 256
        %v4728 = vsel %vm4696, %v1470, 256
        %v4729 = vsel %vm4697, %v1469, 256
        %v4730 = vsel %vm4698, %v1470, 256
        %vm4731 = vcmp.lt.s32.totalorder %v4699, %v4700
        %v4732 = vsel %vm4731, %v4699, %v4700
        %v4733 = vand.u32 %v4732, 65535
        %v4734 = vshra.s32 %v4732, 16
        %v4735 = vcvt.s32.f32 %v4733
        %v4736 = vcvt.s32.f32 %v4734
        %4737 = vmin.xlane.f32.xlu0 %v4736
        %v4738 = vpop.xlane.xlu0 %4737
        %vm4739 = vcmp.eq.f32.partialorder %v4736, %v4738
        %v4740 = vsel %vm4739, %v4735, inf
        %4741 = vmin.xlane.f32.xlu0 %v4740
        %v4742 = vpop.xlane.xlu0 %4741
        %v4743 = vcvt.f32.s32 %v4742
        %v4744 = vcvt.f32.s32 %v4738
        %v4745 = vshll.u32 %v4744, 16
        %v4746 = vadd.s32 %v4745, %v4743
        %vm4747 = vcmp.lt.s32.totalorder %v4701, %v4702
        %v4748 = vsel %vm4747, %v4701, %v4702
        %v4749 = vand.u32 %v4748, 65535
        %v4750 = vshra.s32 %v4748, 16
        %v4751 = vcvt.s32.f32 %v4749
        %v4752 = vcvt.s32.f32 %v4750
        %4753 = vmin.xlane.f32.xlu0 %v4752
        %v4754 = vpop.xlane.xlu0 %4753
        %vm4755 = vcmp.eq.f32.partialorder %v4752, %v4754
        %v4756 = vsel %vm4755, %v4751, inf
        %4757 = vmin.xlane.f32.xlu0 %v4756
        %v4758 = vpop.xlane.xlu0 %4757
        %v4759 = vcvt.f32.s32 %v4758
        %v4760 = vcvt.f32.s32 %v4754
        %v4761 = vshll.u32 %v4760, 16
        %v4762 = vadd.s32 %v4761, %v4759
        %vm4763 = vcmp.lt.s32.totalorder %v4703, %v4704
        %v4764 = vsel %vm4763, %v4703, %v4704
        %v4765 = vand.u32 %v4764, 65535
        %v4766 = vshra.s32 %v4764, 16
        %v4767 = vcvt.s32.f32 %v4765
        %v4768 = vcvt.s32.f32 %v4766
        %4769 = vmin.xlane.f32.xlu0 %v4768
        %v4770 = vpop.xlane.xlu0 %4769
        %vm4771 = vcmp.eq.f32.partialorder %v4768, %v4770
        %v4772 = vsel %vm4771, %v4767, inf
        %4773 = vmin.xlane.f32.xlu0 %v4772
        %v4774 = vpop.xlane.xlu0 %4773
        %v4775 = vcvt.f32.s32 %v4774
        %v4776 = vcvt.f32.s32 %v4770
        %v4777 = vshll.u32 %v4776, 16
        %v4778 = vadd.s32 %v4777, %v4775
        %vm4779 = vcmp.lt.s32.totalorder %v4705, %v4706
        %v4780 = vsel %vm4779, %v4705, %v4706
        %v4781 = vand.u32 %v4780, 65535
        %v4782 = vshra.s32 %v4780, 16
        %v4783 = vcvt.s32.f32 %v4781
        %v4784 = vcvt.s32.f32 %v4782
        %4785 = vmin.xlane.f32.xlu0 %v4784
        %v4786 = vpop.xlane.xlu0 %4785
        %vm4787 = vcmp.eq.f32.partialorder %v4784, %v4786
        %v4788 = vsel %vm4787, %v4783, inf
        %4789 = vmin.xlane.f32.xlu0 %v4788
        %v4790 = vpop.xlane.xlu0 %4789
        %v4791 = vcvt.f32.s32 %v4790
        %v4792 = vcvt.f32.s32 %v4786
        %v4793 = vshll.u32 %v4792, 16
        %v4794 = vadd.s32 %v4793, %v4791
        %vm4795 = vcmp.lt.s32.totalorder %v4707, %v4708
        %v4796 = vsel %vm4795, %v4707, %v4708
        %v4797 = vand.u32 %v4796, 65535
        %v4798 = vshra.s32 %v4796, 16
        %v4799 = vcvt.s32.f32 %v4797
        %v4800 = vcvt.s32.f32 %v4798
        %4801 = vmin.xlane.f32.xlu0 %v4800
        %v4802 = vpop.xlane.xlu0 %4801
        %vm4803 = vcmp.eq.f32.partialorder %v4800, %v4802
        %v4804 = vsel %vm4803, %v4799, inf
        %4805 = vmin.xlane.f32.xlu0 %v4804
        %v4806 = vpop.xlane.xlu0 %4805
        %v4807 = vcvt.f32.s32 %v4806
        %v4808 = vcvt.f32.s32 %v4802
        %v4809 = vshll.u32 %v4808, 16
        %v4810 = vadd.s32 %v4809, %v4807
        %vm4811 = vcmp.lt.s32.totalorder %v4709, %v4710
        %v4812 = vsel %vm4811, %v4709, %v4710
        %v4813 = vand.u32 %v4812, 65535
        %v4814 = vshra.s32 %v4812, 16
        %v4815 = vcvt.s32.f32 %v4813
        %v4816 = vcvt.s32.f32 %v4814
        %4817 = vmin.xlane.f32.xlu0 %v4816
        %v4818 = vpop.xlane.xlu0 %4817
        %vm4819 = vcmp.eq.f32.partialorder %v4816, %v4818
        %v4820 = vsel %vm4819, %v4815, inf
        %4821 = vmin.xlane.f32.xlu0 %v4820
        %v4822 = vpop.xlane.xlu0 %4821
        %v4823 = vcvt.f32.s32 %v4822
        %v4824 = vcvt.f32.s32 %v4818
        %v4825 = vshll.u32 %v4824, 16
        %v4826 = vadd.s32 %v4825, %v4823
        %vm4827 = vcmp.lt.s32.totalorder %v4711, %v4712
        %v4828 = vsel %vm4827, %v4711, %v4712
        %v4829 = vand.u32 %v4828, 65535
        %v4830 = vshra.s32 %v4828, 16
        %v4831 = vcvt.s32.f32 %v4829
        %v4832 = vcvt.s32.f32 %v4830
        %4833 = vmin.xlane.f32.xlu0 %v4832
        %v4834 = vpop.xlane.xlu0 %4833
        %vm4835 = vcmp.eq.f32.partialorder %v4832, %v4834
        %v4836 = vsel %vm4835, %v4831, inf
        %4837 = vmin.xlane.f32.xlu0 %v4836
        %v4838 = vpop.xlane.xlu0 %4837
        %v4839 = vcvt.f32.s32 %v4838
        %v4840 = vcvt.f32.s32 %v4834
        %v4841 = vshll.u32 %v4840, 16
        %v4842 = vadd.s32 %v4841, %v4839
        %vm4843 = vcmp.lt.s32.totalorder %v4713, %v4714
        %v4844 = vsel %vm4843, %v4713, %v4714
        %v4845 = vand.u32 %v4844, 65535
        %v4846 = vshra.s32 %v4844, 16
        %v4847 = vcvt.s32.f32 %v4845
        %v4848 = vcvt.s32.f32 %v4846
        %4849 = vmin.xlane.f32.xlu0 %v4848
        %v4850 = vpop.xlane.xlu0 %4849
        %vm4851 = vcmp.eq.f32.partialorder %v4848, %v4850
        %v4852 = vsel %vm4851, %v4847, inf
        %4853 = vmin.xlane.f32.xlu0 %v4852
        %v4854 = vpop.xlane.xlu0 %4853
        %v4855 = vcvt.f32.s32 %v4854
        %v4856 = vcvt.f32.s32 %v4850
        %v4857 = vshll.u32 %v4856, 16
        %v4858 = vadd.s32 %v4857, %v4855
        %vm4859 = vcmp.lt.s32.totalorder %v4715, %v4716
        %v4860 = vsel %vm4859, %v4715, %v4716
        %v4861 = vand.u32 %v4860, 65535
        %v4862 = vshra.s32 %v4860, 16
        %v4863 = vcvt.s32.f32 %v4861
        %v4864 = vcvt.s32.f32 %v4862
        %4865 = vmin.xlane.f32.xlu0 %v4864
        %v4866 = vpop.xlane.xlu0 %4865
        %vm4867 = vcmp.eq.f32.partialorder %v4864, %v4866
        %v4868 = vsel %vm4867, %v4863, inf
        %4869 = vmin.xlane.f32.xlu0 %v4868
        %v4870 = vpop.xlane.xlu0 %4869
        %v4871 = vcvt.f32.s32 %v4870
        %v4872 = vcvt.f32.s32 %v4866
        %v4873 = vshll.u32 %v4872, 16
        %v4874 = vadd.s32 %v4873, %v4871
        %vm4875 = vcmp.lt.s32.totalorder %v4717, %v4718
        %v4876 = vsel %vm4875, %v4717, %v4718
        %v4877 = vand.u32 %v4876, 65535
        %v4878 = vshra.s32 %v4876, 16
        %v4879 = vcvt.s32.f32 %v4877
        %v4880 = vcvt.s32.f32 %v4878
        %4881 = vmin.xlane.f32.xlu0 %v4880
        %v4882 = vpop.xlane.xlu0 %4881
        %vm4883 = vcmp.eq.f32.partialorder %v4880, %v4882
        %v4884 = vsel %vm4883, %v4879, inf
        %4885 = vmin.xlane.f32.xlu0 %v4884
        %v4886 = vpop.xlane.xlu0 %4885
        %v4887 = vcvt.f32.s32 %v4886
        %v4888 = vcvt.f32.s32 %v4882
        %v4889 = vshll.u32 %v4888, 16
        %v4890 = vadd.s32 %v4889, %v4887
        %vm4891 = vcmp.lt.s32.totalorder %v4719, %v4720
        %v4892 = vsel %vm4891, %v4719, %v4720
        %v4893 = vand.u32 %v4892, 65535
        %v4894 = vshra.s32 %v4892, 16
        %v4895 = vcvt.s32.f32 %v4893
        %v4896 = vcvt.s32.f32 %v4894
        %4897 = vmin.xlane.f32.xlu0 %v4896
        %v4898 = vpop.xlane.xlu0 %4897
        %vm4899 = vcmp.eq.f32.partialorder %v4896, %v4898
        %v4900 = vsel %vm4899, %v4895, inf
        %4901 = vmin.xlane.f32.xlu0 %v4900
        %v4902 = vpop.xlane.xlu0 %4901
        %v4903 = vcvt.f32.s32 %v4902
        %v4904 = vcvt.f32.s32 %v4898
        %v4905 = vshll.u32 %v4904, 16
        %v4906 = vadd.s32 %v4905, %v4903
        %vm4907 = vcmp.lt.s32.totalorder %v4721, %v4722
        %v4908 = vsel %vm4907, %v4721, %v4722
        %v4909 = vand.u32 %v4908, 65535
        %v4910 = vshra.s32 %v4908, 16
        %v4911 = vcvt.s32.f32 %v4909
        %v4912 = vcvt.s32.f32 %v4910
        %4913 = vmin.xlane.f32.xlu0 %v4912
        %v4914 = vpop.xlane.xlu0 %4913
        %vm4915 = vcmp.eq.f32.partialorder %v4912, %v4914
        %v4916 = vsel %vm4915, %v4911, inf
        %4917 = vmin.xlane.f32.xlu0 %v4916
        %v4918 = vpop.xlane.xlu0 %4917
        %v4919 = vcvt.f32.s32 %v4918
        %v4920 = vcvt.f32.s32 %v4914
        %v4921 = vshll.u32 %v4920, 16
        %v4922 = vadd.s32 %v4921, %v4919
        %vm4923 = vcmp.lt.s32.totalorder %v4723, %v4724
        %v4924 = vsel %vm4923, %v4723, %v4724
        %v4925 = vand.u32 %v4924, 65535
        %v4926 = vshra.s32 %v4924, 16
        %v4927 = vcvt.s32.f32 %v4925
        %v4928 = vcvt.s32.f32 %v4926
        %4929 = vmin.xlane.f32.xlu0 %v4928
        %v4930 = vpop.xlane.xlu0 %4929
        %vm4931 = vcmp.eq.f32.partialorder %v4928, %v4930
        %v4932 = vsel %vm4931, %v4927, inf
        %4933 = vmin.xlane.f32.xlu0 %v4932
        %v4934 = vpop.xlane.xlu0 %4933
        %v4935 = vcvt.f32.s32 %v4934
        %v4936 = vcvt.f32.s32 %v4930
        %v4937 = vshll.u32 %v4936, 16
        %v4938 = vadd.s32 %v4937, %v4935
        %vm4939 = vcmp.lt.s32.totalorder %v4725, %v4726
        %v4940 = vsel %vm4939, %v4725, %v4726
        %v4941 = vand.u32 %v4940, 65535
        %v4942 = vshra.s32 %v4940, 16
        %v4943 = vcvt.s32.f32 %v4941
        %v4944 = vcvt.s32.f32 %v4942
        %4945 = vmin.xlane.f32.xlu0 %v4944
        %v4946 = vpop.xlane.xlu0 %4945
        %vm4947 = vcmp.eq.f32.partialorder %v4944, %v4946
        %v4948 = vsel %vm4947, %v4943, inf
        %4949 = vmin.xlane.f32.xlu0 %v4948
        %v4950 = vpop.xlane.xlu0 %4949
        %v4951 = vcvt.f32.s32 %v4950
        %v4952 = vcvt.f32.s32 %v4946
        %v4953 = vshll.u32 %v4952, 16
        %v4954 = vadd.s32 %v4953, %v4951
        %vm4955 = vcmp.lt.s32.totalorder %v4727, %v4728
        %v4956 = vsel %vm4955, %v4727, %v4728
        %v4957 = vand.u32 %v4956, 65535
        %v4958 = vshra.s32 %v4956, 16
        %v4959 = vcvt.s32.f32 %v4957
        %v4960 = vcvt.s32.f32 %v4958
        %4961 = vmin.xlane.f32.xlu0 %v4960
        %v4962 = vpop.xlane.xlu0 %4961
        %vm4963 = vcmp.eq.f32.partialorder %v4960, %v4962
        %v4964 = vsel %vm4963, %v4959, inf
        %4965 = vmin.xlane.f32.xlu0 %v4964
        %v4966 = vpop.xlane.xlu0 %4965
        %v4967 = vcvt.f32.s32 %v4966
        %v4968 = vcvt.f32.s32 %v4962
        %v4969 = vshll.u32 %v4968, 16
        %v4970 = vadd.s32 %v4969, %v4967
        %vm4971 = vcmp.lt.s32.totalorder %v4729, %v4730
        %v4972 = vsel %vm4971, %v4729, %v4730
        %v4973 = vand.u32 %v4972, 65535
        %v4974 = vshra.s32 %v4972, 16
        %v4975 = vcvt.s32.f32 %v4973
        %v4976 = vcvt.s32.f32 %v4974
        %4977 = vmin.xlane.f32.xlu0 %v4976
        %v4978 = vpop.xlane.xlu0 %4977
        %vm4979 = vcmp.eq.f32.partialorder %v4976, %v4978
        %v4980 = vsel %vm4979, %v4975, inf
        %4981 = vmin.xlane.f32.xlu0 %v4980
        %v4982 = vpop.xlane.xlu0 %4981
        %v4983 = vcvt.f32.s32 %v4982
        %v4984 = vcvt.f32.s32 %v4978
        %v4985 = vshll.u32 %v4984, 16
        %v4986 = vadd.s32 %v4985, %v4983
        %v4987 = vsub.f32 %v4621, %v2249
        %v4988 = vsub.f32 %v4624, %v2252
        %v4989 = vsub.f32 %v4627, %v2255
        %v4990 = vsub.f32 %v4630, %v2258
        %v4991 = vsub.f32 %v4633, %v2261
        %v4992 = vsub.f32 %v4636, %v2264
        %v4993 = vsub.f32 %v4639, %v2267
        %v4994 = vsub.f32 %v4642, %v2270
        %v4995 = vsub.f32 %v4645, %v2273
        %v4996 = vsub.f32 %v4648, %v2276
        %v4997 = vsub.f32 %v4651, %v2279
        %v4998 = vsub.f32 %v4654, %v2282
        %v4999 = vsub.f32 %v4657, %v2285
        %v5000 = vsub.f32 %v4660, %v2288
        %v5001 = vsub.f32 %v4663, %v2291
        %v5002 = vsub.f32 %v4666, %v2294
        %v5003 = vmul.f32 %v4987, 1.442695
        %v5004 = vpow.pop %v5003
        %v5005 = vmul.f32 %v4988, 1.442695
        %v5006 = vpow.pop %v5005
        %v5007 = vmul.f32 %v4989, 1.442695
        %v5008 = vpow.pop %v5007
        %v5009 = vmul.f32 %v4990, 1.442695
        %v5010 = vpow.pop %v5009
        %v5011 = vmul.f32 %v4991, 1.442695
        %v5012 = vpow.pop %v5011
        %v5013 = vmul.f32 %v4992, 1.442695
        %v5014 = vpow.pop %v5013
        %v5015 = vmul.f32 %v4993, 1.442695
        %v5016 = vpow.pop %v5015
        %v5017 = vmul.f32 %v4994, 1.442695
        %v5018 = vpow.pop %v5017
        %v5019 = vmul.f32 %v4995, 1.442695
        %v5020 = vpow.pop %v5019
        %v5021 = vmul.f32 %v4996, 1.442695
        %v5022 = vpow.pop %v5021
        %v5023 = vmul.f32 %v4997, 1.442695
        %v5024 = vpow.pop %v5023
        %v5025 = vmul.f32 %v4998, 1.442695
        %v5026 = vpow.pop %v5025
        %v5027 = vmul.f32 %v4999, 1.442695
        %v5028 = vpow.pop %v5027
        %v5029 = vmul.f32 %v5000, 1.442695
        %v5030 = vpow.pop %v5029
        %v5031 = vmul.f32 %v5001, 1.442695
        %v5032 = vpow.pop %v5031
        %v5033 = vmul.f32 %v5002, 1.442695
        %v5034 = vpow.pop %v5033
        %v5035 = vmul.f32 %v5004, %v2453
        %v5036 = vmul.f32 %v5006, %v2468
        %v5037 = vmul.f32 %v5008, %v2483
        %v5038 = vmul.f32 %v5010, %v2498
        %v5039 = vmul.f32 %v5012, %v2513
        %v5040 = vmul.f32 %v5014, %v2528
        %v5041 = vmul.f32 %v5016, %v2543
        %v5042 = vmul.f32 %v5018, %v2558
        %v5043 = vmul.f32 %v5020, %v2573
        %v5044 = vmul.f32 %v5022, %v2588
        %v5045 = vmul.f32 %v5024, %v2603
        %v5046 = vmul.f32 %v5026, %v2618
        %v5047 = vmul.f32 %v5028, %v2633
        %v5048 = vmul.f32 %v5030, %v2648
        %v5049 = vmul.f32 %v5032, %v2663
        %v5050 = vmul.f32 %v5034, %v2678
        %vm5051 = vcmp.eq.s32.totalorder %v1469, 4
        %v5052 = vsel %vm5051, %v5035, %v4555
        %v5053 = vsel %vm5051, %v5036, %v4556
        %v5054 = vsel %vm5051, %v5037, %v4557
        %v5055 = vsel %vm5051, %v5038, %v4558
        %v5056 = vsel %vm5051, %v5039, %v4559
        %v5057 = vsel %vm5051, %v5040, %v4560
        %v5058 = vsel %vm5051, %v5041, %v4561
        %v5059 = vsel %vm5051, %v5042, %v4562
        %v5060 = vsel %vm5051, %v5043, %v4563
        %v5061 = vsel %vm5051, %v5044, %v4564
        %v5062 = vsel %vm5051, %v5045, %v4565
        %v5063 = vsel %vm5051, %v5046, %v4566
        %v5064 = vsel %vm5051, %v5047, %v4567
        %v5065 = vsel %vm5051, %v5048, %v4568
        %v5066 = vsel %vm5051, %v5049, %v4569
        %v5067 = vsel %vm5051, %v5050, %v4570
        %v5068 = vsel %vm5051, %v4746, %v4571
        %v5069 = vsel %vm5051, %v4762, %v4572
        %v5070 = vsel %vm5051, %v4778, %v4573
        %v5071 = vsel %vm5051, %v4794, %v4574
        %v5072 = vsel %vm5051, %v4810, %v4575
        %v5073 = vsel %vm5051, %v4826, %v4576
        %v5074 = vsel %vm5051, %v4842, %v4577
        %v5075 = vsel %vm5051, %v4858, %v4578
        %v5076 = vsel %vm5051, %v4874, %v4579
        %v5077 = vsel %vm5051, %v4890, %v4580
        %v5078 = vsel %vm5051, %v4906, %v4581
        %v5079 = vsel %vm5051, %v4922, %v4582
        %v5080 = vsel %vm5051, %v4938, %v4583
        %v5081 = vsel %vm5051, %v4954, %v4584
        %v5082 = vsel %vm5051, %v4970, %v4585
        %v5083 = vsel %vm5051, %v4986, %v4586
        %5084 = vst [vmem:[%s224] sm:$0xff] %v5052
        %5085 = vst [vmem:[%s224 + $0x8] sm:$0xff] %v5053
        %5086 = vst [vmem:[%s224 + $0x10] sm:$0xff] %v5054
        %5087 = vst [vmem:[%s224 + $0x18] sm:$0xff] %v5055
        %5088 = vst [vmem:[%s224 + $0x20] sm:$0xff] %v5056
        %5089 = vst [vmem:[%s224 + $0x28] sm:$0xff] %v5057
        %5090 = vst [vmem:[%s224 + $0x30] sm:$0xff] %v5058
        %5091 = vst [vmem:[%s224 + $0x38] sm:$0xff] %v5059
        %5092 = vst [vmem:[%s224 + $0x40] sm:$0xff] %v5060
        %5093 = vst [vmem:[%s224 + $0x48] sm:$0xff] %v5061
        %5094 = vst [vmem:[%s224 + $0x50] sm:$0xff] %v5062
        %5095 = vst [vmem:[%s224 + $0x58] sm:$0xff] %v5063
        %5096 = vst [vmem:[%s224 + $0x60] sm:$0xff] %v5064
        %5097 = vst [vmem:[%s224 + $0x68] sm:$0xff] %v5065
        %5098 = vst [vmem:[%s224 + $0x70] sm:$0xff] %v5066
        %5099 = vst [vmem:[%s224 + $0x78] sm:$0xff] %v5067
        %5100 = vst [vmem:[%s231] sm:$0xff] %v5068
        %5101 = vst [vmem:[%s231 + $0x8] sm:$0xff] %v5069
        %5102 = vst [vmem:[%s231 + $0x10] sm:$0xff] %v5070
        %5103 = vst [vmem:[%s231 + $0x18] sm:$0xff] %v5071
        %5104 = vst [vmem:[%s231 + $0x20] sm:$0xff] %v5072
        %5105 = vst [vmem:[%s231 + $0x28] sm:$0xff] %v5073
        %5106 = vst [vmem:[%s231 + $0x30] sm:$0xff] %v5074
        %5107 = vst [vmem:[%s231 + $0x38] sm:$0xff] %v5075
        %5108 = vst [vmem:[%s231 + $0x40] sm:$0xff] %v5076
        %5109 = vst [vmem:[%s231 + $0x48] sm:$0xff] %v5077
        %5110 = vst [vmem:[%s231 + $0x50] sm:$0xff] %v5078
        %5111 = vst [vmem:[%s231 + $0x58] sm:$0xff] %v5079
        %5112 = vst [vmem:[%s231 + $0x60] sm:$0xff] %v5080
        %5113 = vst [vmem:[%s231 + $0x68] sm:$0xff] %v5081
        %5114 = vst [vmem:[%s231 + $0x70] sm:$0xff] %v5082
        %5115 = vst [vmem:[%s231 + $0x78] sm:$0xff] %v5083
        %s5116 = sand.u32 %s122, 1
        %s5117 = scalar_lea.sflag [#allocation5], %s5116
        %s5118 = sand.u32 %s122, 1
        %s5119 = smul.addr %s5118, 128
        %s5120 = scalar_lea.vmem [#allocation4], %s5119
        %s5121 = sand.u32 %s148, 1
        %s5122 = scalar_lea.sflag [#allocation7], %s5121
        %s5123 = sand.u32 %s148, 1
        %s5124 = smul.addr %s5123, 128
        %s5125 = scalar_lea.vmem [#allocation6], %s5124
        // Predicated region
        $region37: #{tpu_custom_call.1} parent=35 // pred_check
          %p5126 = pneg %p132
        $region38: #{tpu_custom_call.1} parent=35 // pred_check_branch
          %5128 = sbr.rel (%p5126) target = $region40
        $region39: #{tpu_custom_call.1} parent=35 // pred_region
          %s5129 = smul.u32 16, %s25
          %5131 = vsyncadd %s5117, 0
          %s5132 = smul.addr %s5129, 8
          %s5133 = scalar_lea.hbm %s4, %s5132
          %s5134 = sshll.u32 %s5120, 4
          %s5135 = int_to_ptr.vmem [resolvable:$true] %s5134
          %s5136 = sshll.u32 %s5133, 4
          %s5137 = int_to_ptr.hbm [resolvable:$true] %s5136
          %5142 = dma.vmem_to_hbm [thread:$0]  %s5135, 2048, %s5137, %s5117, 128, 128, 8
        $region40: #{tpu_custom_call.1} parent=35 // pred_fallthru
          _
        // Predicated region
        $region41: #{tpu_custom_call.1} parent=35 // pred_check
          %p5143 = pneg %p158
        $region42: #{tpu_custom_call.1} parent=35 // pred_check_branch
          %5145 = sbr.rel (%p5143) target = $region44
        $region43: #{tpu_custom_call.1} parent=35 // pred_region
          %s5146 = smul.u32 16, %s25
          %5148 = vsyncadd %s5122, 0
          %s5149 = smul.addr %s5146, 8
          %s5150 = scalar_lea.hbm %s5, %s5149
          %s5151 = sshll.u32 %s5125, 4
          %s5152 = int_to_ptr.vmem [resolvable:$true] %s5151
          %s5153 = sshll.u32 %s5150, 4
          %s5154 = int_to_ptr.hbm [resolvable:$true] %s5153
          %5159 = dma.vmem_to_hbm [thread:$0]  %s5152, 2048, %s5154, %s5122, 128, 128, 8
        $region44: #{tpu_custom_call.1} parent=35 // pred_fallthru
          _
      $region36: #{tpu_custom_call.1} parent=5 // pred_fallthru
        _
      %p5160 = scmp.le.s32.totalorder 2, %s20
      // Predicated region
      $region45: #{tpu_custom_call.1} parent=5 // pred_check
        %p5161 = pneg %p5160
      $region46: #{tpu_custom_call.1} parent=5 // pred_check_branch
        %5163 = sbr.rel (%p5161) target = $region48
      $region47: #{tpu_custom_call.1} parent=5 // pred_region
        %s5164 = ssub.s32 %s20, 2
        // Predicated region
        $region49: #{tpu_custom_call.1} parent=47 // pred_check
          %p5165 = pneg %p138
        $region50: #{tpu_custom_call.1} parent=47 // pred_check_branch
          %5167 = sbr.rel (%p5165) target = $region52
        $region51: #{tpu_custom_call.1} parent=47 // pred_region
          %s5168 = sand.u32 %s123, 1
          %s5169 = scalar_lea.sflag [#allocation5], %s5168
          %s5170 = sand.u32 %s123, 1
          %s5171 = smul.addr %s5170, 128
          %s5172 = scalar_lea.vmem [#allocation4], %s5171
          %5174 = dma.done %s5169, 2048
        $region52: #{tpu_custom_call.1} parent=47 // pred_fallthru
          _
        // Predicated region
        $region53: #{tpu_custom_call.1} parent=47 // pred_check
          %p5175 = pneg %p164
        $region54: #{tpu_custom_call.1} parent=47 // pred_check_branch
          %5177 = sbr.rel (%p5175) target = $region56
        $region55: #{tpu_custom_call.1} parent=47 // pred_region
          %s5178 = sand.u32 %s149, 1
          %s5179 = scalar_lea.sflag [#allocation7], %s5178
          %s5180 = sand.u32 %s149, 1
          %s5181 = smul.addr %s5180, 128
          %s5182 = scalar_lea.vmem [#allocation6], %s5181
          %5184 = dma.done %s5179, 2048
        $region56: #{tpu_custom_call.1} parent=47 // pred_fallthru
          _
      $region48: #{tpu_custom_call.1} parent=5 // pred_fallthru
        _
    $region6: #{tpu_custom_call.1} parent=1 // loop_footer
      %s24 = sadd.s32 1, %s20
    $region7: #{tpu_custom_call.1} parent=1 // loop_footer_branch
      %19 = sbr.rel target = $region3
    $region8: #{tpu_custom_call.1} parent=1 // loop_exit
      _
    %5185 = vsyncpa [#allocation5], 1
    %s5186 = scalar_lea.sflag [#allocation5], 1
    %5187 = vsyncpa %s5186, 1
    %5188 = vsyncpa [#allocation7], 1
    %s5189 = scalar_lea.sflag [#allocation7], 1
    %5190 = vsyncpa %s5189, 1

</llo_original>
